<compile_context>
chip_gen: v7x
topology: tpu7x:2x2x1
jax: 0.10.0
libtpu: 0.0.40
codegen_flags: <defaults>
</compile_context>

<pallas_src>
import functools

import jax
import jax.numpy as jnp
from jax.experimental import pallas as pl
from jax.experimental.pallas import tpu as pltpu


# ---------------------------------------------------------------------------
# Kernel 1 (prologue): per-node projection  z = x @ W,  [el | er] = z @ a_cat
# ---------------------------------------------------------------------------
def proj_kernel(x_ref, w_ref, a_ref, z_ref, el_ref, er_ref, *, heads):
    x = x_ref[...].astype(jnp.bfloat16)
    z = jnp.dot(x, w_ref[...], preferred_element_type=jnp.float32)          # [T, hd]
    ea = jnp.dot(z.astype(jnp.bfloat16), a_ref[...],
                 preferred_element_type=jnp.float32)                        # [T, 2H]
    z_ref[...] = z.astype(jnp.bfloat16)
    el_ref[...] = ea[:, :heads]
    er_ref[...] = ea[:, heads:]


def gat_project(x, w, a_cat, *, heads, dout, max_tile_rows=256):
    n, din = x.shape
    hd = heads * dout
    tile = n if n <= max_tile_rows else max_tile_rows
    assert n % tile == 0, (n, tile)

    kernel = functools.partial(proj_kernel, heads=heads)
    z, el, er = pl.pallas_call(
        kernel,
        out_shape=(jax.ShapeDtypeStruct((n, hd), jnp.bfloat16),
                   jax.ShapeDtypeStruct((n, heads), jnp.float32),
                   jax.ShapeDtypeStruct((n, heads), jnp.float32)),
        grid=(n // tile,),
        in_specs=[
            pl.BlockSpec((tile, din), lambda i: (i, 0)),
            pl.BlockSpec((din, hd), lambda i: (0, 0)),
            pl.BlockSpec((hd, 2 * heads), lambda i: (0, 0)),
        ],
        out_specs=(pl.BlockSpec((tile, hd), lambda i: (i, 0)),
                   pl.BlockSpec((tile, heads), lambda i: (i, 0)),
                   pl.BlockSpec((tile, heads), lambda i: (i, 0))),
        compiler_params=pltpu.CompilerParams(dimension_semantics=("parallel",)),
    )(x, w.astype(jnp.bfloat16), a_cat.astype(jnp.bfloat16))
    return z, el, er


# ---------------------------------------------------------------------------
# Kernel 2: masked edge-softmax + neighborhood aggregation (online softmax over src tiles)
# ---------------------------------------------------------------------------
def agg_kernel(z_ref, el_ref, er_ref, adj_ref, ex_ref, out_ref,
               m_scr, s_scr, acc_scr,
               *, heads, dout, neg_slope, apply_elu, out_pad):
    hd = heads * dout
    s_idx = pl.program_id(1)

    @pl.when(s_idx == 0)
    def _():
        m_scr[...] = jnp.full(m_scr.shape, -1e20, jnp.float32)   # finite floor (see header)
        s_scr[...] = jnp.zeros(s_scr.shape, jnp.float32)
        acc_scr[...] = jnp.zeros(acc_scr.shape, jnp.float32)

    edge = adj_ref[...].astype(jnp.float32) > 0.0     # [Td, Ts]  predicate, shared by all heads
    er = er_ref[...]                                   # [Td, H]
    el_t = el_ref[...].T                               # [H, Ts]
    z_s = z_ref[...]                                   # [Ts, hd] bf16
    m_old = m_scr[...]                                 # [Td, H]
    neg_inf = jnp.float32(-1e30)

    m_news, p_sums, outs = [], [], []
    for h in range(heads):                             # static unroll over heads
        e = er[:, h:h + 1] + el_t[h:h + 1, :]          # [Td, Ts]
        e = jnp.maximum(e, neg_slope * e)              # LeakyReLU (max + mul)
        e = jnp.where(edge, e, neg_inf)
        m_new_h = jnp.maximum(m_old[:, h:h + 1], jnp.max(e, axis=-1, keepdims=True))
        p = jnp.exp(e - m_new_h)                       # masked entries underflow to exactly 0
        m_news.append(m_new_h)
        p_sums.append(jnp.sum(p, axis=-1, keepdims=True))
        # ---- hot path: aggregation on the MXU (bf16 in, f32 acc) ----
        outs.append(jnp.dot(p.astype(jnp.bfloat16), z_s[:, h * dout:(h + 1) * dout],
                            preferred_element_type=jnp.float32))            # [Td, dout]
    m_new = jnp.concatenate(m_news, axis=-1)           # [Td, H]
    p_sum = jnp.concatenate(p_sums, axis=-1)           # [Td, H]
    o_blk = jnp.concatenate(outs, axis=-1)             # [Td, hd]

    scale = jnp.exp(m_old - m_new)                     # [Td, H]
    if heads > 1:
        # head-expansion matmul broadcasts per-head scale to the lane-dense [Td, hd] slab
        scale_slab = jnp.dot(scale, ex_ref[...], preferred_element_type=jnp.float32)
    else:
        scale_slab = scale                             # [Td, 1] broadcasts over hd columns
    s_scr[...] = scale * s_scr[...] + p_sum
    acc_scr[...] = scale_slab * acc_scr[...] + o_blk
    m_scr[...] = m_new

    @pl.when(s_idx == pl.num_programs(1) - 1)
    def _():
        s_inv = pl.reciprocal(s_scr[...], approx=True)             # deferred normalization (EUP)
        if heads > 1:
            r_slab = jnp.dot(s_inv, ex_ref[...], preferred_element_type=jnp.float32)
        else:
            r_slab = s_inv
        res = acc_scr[...] * r_slab                                # one wide normalize
        if apply_elu:
            res = jnp.where(res > 0, res, jnp.exp(jnp.minimum(res, 0.0)) - 1.0)
        pad = out_pad - hd
        if pad > 0:
            res = jnp.concatenate(
                [res, jnp.zeros((res.shape[0], pad), jnp.float32)], axis=-1)
        out_ref[...] = res.astype(out_ref.dtype)                   # single lane-dense store


def gat_aggregate(z_bf, el, er, adj_i8, *, heads, dout, neg_slope, apply_elu,
                  out_dtype, max_tile_dst=128, max_tile_src=512):
    n = z_bf.shape[0]
    hd = heads * dout
    out_pad = ((hd + 127) // 128) * 128
    tile_dst = n if n <= max_tile_dst else max_tile_dst     # mult of 32 (int8 adj tiling)
    tile_src = n if n <= max_tile_src else max_tile_src     # mult of 256 (MXU width) when tiled
    assert n % tile_dst == 0 and n % tile_src == 0, (n, tile_dst, tile_src)

    # Head-expansion matrix: ex[h, h*dout:(h+1)*dout] = 1  ->  [Td,H] @ ex = per-head broadcast.
    ex = jnp.kron(jnp.eye(heads, dtype=jnp.float32), jnp.ones((1, dout), jnp.float32))

    grid = (n // tile_dst, n // tile_src)
    out_bytes = 2 if out_dtype == jnp.bfloat16 else 4
    cost = pl.CostEstimate(
        flops=int(2 * n * n * hd + 12 * n * n * heads),
        transcendentals=int(n * n * heads),
        bytes_accessed=int(n * n + grid[0] * n * (hd * 2 + heads * 4) + n * out_pad * out_bytes),
    )

    kernel = functools.partial(agg_kernel, heads=heads, dout=dout,
                               neg_slope=neg_slope, apply_elu=apply_elu,
                               out_pad=out_pad)
    out = pl.pallas_call(
        kernel,
        out_shape=jax.ShapeDtypeStruct((n, out_pad), out_dtype),
        grid=grid,
        in_specs=[
            pl.BlockSpec((tile_src, hd), lambda d, s: (s, 0)),         # z[src]  (bf16)
            pl.BlockSpec((tile_src, heads), lambda d, s: (s, 0)),      # el[src]
            pl.BlockSpec((tile_dst, heads), lambda d, s: (d, 0)),      # er[dst]
            pl.BlockSpec((tile_dst, tile_src), lambda d, s: (d, s)),   # adj tile (int8)
            pl.BlockSpec((heads, hd), lambda d, s: (0, 0)),            # head-expansion matrix
        ],
        out_specs=pl.BlockSpec((tile_dst, out_pad), lambda d, s: (d, 0)),
        scratch_shapes=[
            pltpu.VMEM((tile_dst, heads), jnp.float32),   # running max
            pltpu.VMEM((tile_dst, heads), jnp.float32),   # running denom
            pltpu.VMEM((tile_dst, hd), jnp.float32),      # running weighted sum
        ],
        compiler_params=pltpu.CompilerParams(
            # dst tiles independent -> megacore sharding; src axis is the reduction.
            dimension_semantics=("parallel", "arbitrary"),
            # Budget at (128, 512) tiles is ~5 MiB/step; explicit limit is safe on
            # v7x (64 MiB physical) as well as v5e/v6e.
            vmem_limit_bytes=32 * 1024 * 1024,
        ),
        cost_estimate=cost,
    )(z_bf, el, er, adj_i8, ex)
    return out


# ---------------------------------------------------------------------------
# Layer / model wrappers
# ---------------------------------------------------------------------------
def _pack_attn(a, heads, dout):
    """[heads, dout] -> block-diagonal [heads*dout, heads] so el/er are one matmul."""
    hd = heads * dout
    m = jnp.zeros((hd, heads), jnp.float32)
    for h in range(heads):
        m = m.at[h * dout:(h + 1) * dout, h].set(a[h])
    return m


def gat_conv(x, w, attn_l, attn_r, adj_i8, *, heads, dout, neg_slope=0.2,
             apply_elu=False, out_dtype=jnp.float32):
    a_cat = jnp.concatenate([_pack_attn(attn_l, heads, dout),
                             _pack_attn(attn_r, heads, dout)], axis=1)      # [hd, 2H]
    z_bf, el, er = gat_project(x, w, a_cat, heads=heads, dout=dout)
    return gat_aggregate(z_bf, el, er, adj_i8, heads=heads, dout=dout,
                         neg_slope=neg_slope, apply_elu=apply_elu,
                         out_dtype=out_dtype)                               # [N, out_pad] slab


def gat_dgl_forward(h, adj, params, *, heads=8, num_hidden=8, num_classes=4):
    # Binary int8 adjacency, built once and shared by both layers.
    adj_i8 = (adj > 0).astype(jnp.int8)

    # Layer 0: GATConv(in_dim, num_hidden, heads, activation=ELU) -> flatten(1).
    # Emitted as a lane-dense [N, 128] bf16 slab whose pad columns are exactly zero.
    h_slab = gat_conv(h, params["w0"], params["al0"], params["ar0"], adj_i8,
                      heads=heads, dout=num_hidden, apply_elu=True,
                      out_dtype=jnp.bfloat16)

    # Output layer: GATConv(heads*num_hidden, num_classes, 1 head, no activation).
    # Zero-pad W1 rows to the slab width so the pad columns contribute nothing
    # (no slice/copy of the hidden activations between the two layers).
    w1 = params["w1"]
    pad_rows = h_slab.shape[1] - w1.shape[0]
    w1p = jnp.concatenate([w1, jnp.zeros((pad_rows, w1.shape[1]), w1.dtype)], axis=0)
    logits_slab = gat_conv(h_slab, w1p, params["al1"], params["ar1"], adj_i8,
                           heads=1, dout=num_classes, apply_elu=False,
                           out_dtype=jnp.float32)
    # mean over a single head == identity
    return logits_slab[:, :num_classes]


if __name__ == "__main__":
    N = 64            # number of graph nodes
    IN_DIM = 16       # num_features
    NUM_HIDDEN = 8
    HEADS = 8
    NUM_CLASSES = 4

    key = jax.random.PRNGKey(0)
    k_x, k_adj, k_w0, k_a0, k_w1, k_a1 = jax.random.split(key, 6)

    x = jax.random.normal(k_x, (N, IN_DIM), dtype=jnp.float32)

    # Random sparse graph with self-loops; adj[dst, src].
    adj = jax.random.bernoulli(k_adj, p=0.1, shape=(N, N)).astype(jnp.float32)
    adj = jnp.maximum(adj, jnp.eye(N, dtype=jnp.float32))
    assert bool(jnp.all(jnp.diag(adj) > 0))   # edge softmax assumes >= 1 in-edge per node

    def xavier(k, shape):
        fan_in, fan_out = shape[0], shape[-1]
        scale = (2.0 / (fan_in + fan_out)) ** 0.5
        return scale * jax.random.normal(k, shape, dtype=jnp.float32)

    k_al0, k_ar0 = jax.random.split(k_a0)
    k_al1, k_ar1 = jax.random.split(k_a1)
    params = {
        "w0": xavier(k_w0, (IN_DIM, HEADS * NUM_HIDDEN)),
        "al0": xavier(k_al0, (HEADS, NUM_HIDDEN)),
        "ar0": xavier(k_ar0, (HEADS, NUM_HIDDEN)),
        "w1": xavier(k_w1, (HEADS * NUM_HIDDEN, NUM_CLASSES)),
        "al1": xavier(k_al1, (1, NUM_CLASSES)),
        "ar1": xavier(k_ar1, (1, NUM_CLASSES)),
    }

    fwd = jax.jit(lambda h: gat_dgl_forward(h, adj, params, heads=HEADS,
                                            num_hidden=NUM_HIDDEN,
                                            num_classes=NUM_CLASSES))
    logits = fwd(x)
    jax.block_until_ready(logits)
    assert logits.shape == (N, NUM_CLASSES), logits.shape
    assert bool(jnp.all(jnp.isfinite(logits)))

    # Loose-tolerance check vs a pure-JAX f32 reference (kernel uses bf16 matmuls and an
    # approximate reciprocal, so exact equality is not expected).
    def ref_conv(hh, w, al, ar, nheads, dd, elu):
        z = hh @ w
        zh = z.reshape(-1, nheads, dd)
        el_r = jnp.einsum("nhd,hd->nh", zh, al)
        er_r = jnp.einsum("nhd,hd->nh", zh, ar)
        e = el_r[None, :, :] + er_r[:, None, :]            # [dst, src, H]
        e = jnp.where(e > 0, e, 0.2 * e)
        e = jnp.where((adj > 0)[:, :, None], e, -jnp.inf)
        a = jax.nn.softmax(e, axis=1)                      # edge softmax over src
        o = jnp.einsum("dsh,shf->dhf", a, zh).reshape(-1, nheads * dd)
        return jnp.where(o > 0, o, jnp.exp(jnp.minimum(o, 0.0)) - 1.0) if elu else o

    h_ref = ref_conv(x, params["w0"], params["al0"], params["ar0"], HEADS, NUM_HIDDEN, True)
    ref = ref_conv(h_ref, params["w1"], params["al1"], params["ar1"], 1, NUM_CLASSES, False)
    max_err = float(jnp.max(jnp.abs(logits - ref)))
    assert max_err < 0.1, f"max abs error vs reference: {max_err}"

    print("KERNEL_OK")
</pallas_src>

<mosaic_0001>
module attributes {stable_mosaic.version = 11 : i64} {
  func.func @proj_kernel(%arg0: i32, %arg1: memref<64x16xf32, #tpu.memory_space<vmem>>, %arg2: memref<16x64xbf16, #tpu.memory_space<vmem>>, %arg3: memref<64x16xbf16, #tpu.memory_space<vmem>>, %arg4: memref<64x64xbf16, #tpu.memory_space<vmem>>, %arg5: memref<64x8xf32, #tpu.memory_space<vmem>>, %arg6: memref<64x8xf32, #tpu.memory_space<vmem>>) attributes {dimension_semantics = [#tpu.dimension_semantics<parallel>], iteration_bounds = array<i64: 1>, scalar_prefetch = 0 : i64, scratch_operands = 0 : i64, tpu.core_type = #tpu.core_type<tc>, window_params = [{transform_indices = @transform_0, window_bounds = array<i64: 64, 16>}, {pipeline_mode = #tpu.pipeline_mode<synchronous>, transform_indices = @transform_1, window_bounds = array<i64: 16, 64>}, {pipeline_mode = #tpu.pipeline_mode<synchronous>, transform_indices = @transform_2, window_bounds = array<i64: 64, 16>}, {transform_indices = @transform_3, window_bounds = array<i64: 64, 64>}, {transform_indices = @transform_4, window_bounds = array<i64: 64, 8>}, {transform_indices = @transform_5, window_bounds = array<i64: 64, 8>}]} {
    %c0 = arith.constant 0 : index
    %c0_0 = arith.constant 0 : index
    %0 = vector.load %arg1[%c0, %c0_0] : memref<64x16xf32, #tpu.memory_space<vmem>>, vector<64x16xf32>
    %1 = arith.truncf %0 : vector<64x16xf32> to vector<64x16xbf16>
    %c0_1 = arith.constant 0 : index
    %c0_2 = arith.constant 0 : index
    %2 = vector.load %arg2[%c0_1, %c0_2] : memref<16x64xbf16, #tpu.memory_space<vmem>>, vector<16x64xbf16>
    %cst = arith.constant dense<0.000000e+00> : vector<64x64xf32>
    %3 = tpu.matmul %1, %2, %cst {dimension_numbers = #tpu.dot_dimension_numbers<[1], [0], [0], [1], [0, 0, 1, 1], [], []>} : vector<64x16xbf16>, vector<16x64xbf16>, vector<64x64xf32> -> vector<64x64xf32>
    %4 = arith.truncf %3 : vector<64x64xf32> to vector<64x64xbf16>
    %c0_3 = arith.constant 0 : index
    %c0_4 = arith.constant 0 : index
    %5 = vector.load %arg3[%c0_3, %c0_4] : memref<64x16xbf16, #tpu.memory_space<vmem>>, vector<64x16xbf16>
    %cst_5 = arith.constant dense<0.000000e+00> : vector<64x16xf32>
    %6 = tpu.matmul %4, %5, %cst_5 {dimension_numbers = #tpu.dot_dimension_numbers<[1], [0], [0], [1], [0, 0, 1, 1], [], []>} : vector<64x64xbf16>, vector<64x16xbf16>, vector<64x16xf32> -> vector<64x16xf32>
    %7 = arith.truncf %3 : vector<64x64xf32> to vector<64x64xbf16>
    %c0_6 = arith.constant 0 : index
    %c0_7 = arith.constant 0 : index
    %8 = vector.load %arg4[%c0_6, %c0_7] : memref<64x64xbf16, #tpu.memory_space<vmem>>, vector<64x64xbf16>
    tpu.vector_store %arg4[%c0_6, %c0_7], %7 {strides = array<i32>} : memref<64x64xbf16, #tpu.memory_space<vmem>>, vector<64x64xbf16>,
    %9 = vector.extract_strided_slice %6 {offsets = [0, 0], sizes = [64, 8], strides = [1, 1]} : vector<64x16xf32> to vector<64x8xf32>
    %c0_8 = arith.constant 0 : index
    %c0_9 = arith.constant 0 : index
    %10 = vector.load %arg5[%c0_8, %c0_9] : memref<64x8xf32, #tpu.memory_space<vmem>>, vector<64x8xf32>
    tpu.vector_store %arg5[%c0_8, %c0_9], %9 {strides = array<i32>} : memref<64x8xf32, #tpu.memory_space<vmem>>, vector<64x8xf32>,
    %11 = vector.extract_strided_slice %6 {offsets = [0, 8], sizes = [64, 8], strides = [1, 1]} : vector<64x16xf32> to vector<64x8xf32>
    %c0_10 = arith.constant 0 : index
    %c0_11 = arith.constant 0 : index
    %12 = vector.load %arg6[%c0_10, %c0_11] : memref<64x8xf32, #tpu.memory_space<vmem>>, vector<64x8xf32>
    tpu.vector_store %arg6[%c0_10, %c0_11], %11 {strides = array<i32>} : memref<64x8xf32, #tpu.memory_space<vmem>>, vector<64x8xf32>,
    return
  }
  func.func @transform_0(%arg0: i32) -> (i32, i32) {
    %c0_i32 = arith.constant 0 : i32
    %c0_i32_0 = arith.constant 0 : i32
    return %arg0, %c0_i32 : i32, i32
  }
  func.func @transform_1(%arg0: i32) -> (i32, i32) {
    %c0_i32 = arith.constant 0 : i32
    %c0_i32_0 = arith.constant 0 : i32
    %c0_i32_1 = arith.constant 0 : i32
    return %c0_i32, %c0_i32_0 : i32, i32
  }
  func.func @transform_2(%arg0: i32) -> (i32, i32) {
    %c0_i32 = arith.constant 0 : i32
    %c0_i32_0 = arith.constant 0 : i32
    %c0_i32_1 = arith.constant 0 : i32
    return %c0_i32, %c0_i32_0 : i32, i32
  }
  func.func @transform_3(%arg0: i32) -> (i32, i32) {
    %c0_i32 = arith.constant 0 : i32
    %c0_i32_0 = arith.constant 0 : i32
    return %arg0, %c0_i32 : i32, i32
  }
  func.func @transform_4(%arg0: i32) -> (i32, i32) {
    %c0_i32 = arith.constant 0 : i32
    %c0_i32_0 = arith.constant 0 : i32
    return %arg0, %c0_i32 : i32, i32
  }
  func.func @transform_5(%arg0: i32) -> (i32, i32) {
    %c0_i32 = arith.constant 0 : i32
    %c0_i32_0 = arith.constant 0 : i32
    return %arg0, %c0_i32 : i32, i32
  }
}

module attributes {stable_mosaic.version = 11 : i64} {
  func.func @agg_kernel(%arg0: i32, %arg1: i32, %arg2: memref<64x4xbf16, #tpu.memory_space<vmem>>, %arg3: memref<64x1xf32, #tpu.memory_space<vmem>>, %arg4: memref<64x1xf32, #tpu.memory_space<vmem>>, %arg5: memref<64x64xi8, #tpu.memory_space<vmem>>, %arg6: memref<1x4xf32, #tpu.memory_space<vmem>>, %arg7: memref<64x128xf32, #tpu.memory_space<vmem>>, %arg8: memref<64x1xf32, #tpu.memory_space<vmem>>, %arg9: memref<64x1xf32, #tpu.memory_space<vmem>>, %arg10: memref<64x4xf32, #tpu.memory_space<vmem>>) attributes {dimension_semantics = [#tpu.dimension_semantics<parallel>, #tpu.dimension_semantics<arbitrary>], iteration_bounds = array<i64: 1, 1>, scalar_prefetch = 0 : i64, scratch_operands = 3 : i64, tpu.core_type = #tpu.core_type<tc>, window_params = [{transform_indices = @transform_0, window_bounds = array<i64: 64, 4>}, {transform_indices = @transform_1, window_bounds = array<i64: 64, 1>}, {transform_indices = @transform_2, window_bounds = array<i64: 64, 1>}, {transform_indices = @transform_3, window_bounds = array<i64: 64, 64>}, {pipeline_mode = #tpu.pipeline_mode<synchronous>, transform_indices = @transform_4, window_bounds = array<i64: 1, 4>}, {transform_indices = @transform_5, window_bounds = array<i64: 64, 128>}]} {
    %c0_i32 = arith.constant 0 : i32
    %0 = arith.cmpi eq, %arg1, %c0_i32 : i32
    %1 = arith.extui %0 : i1 to i32
    %c0_i32_0 = arith.constant 0 : i32
    %2 = arith.cmpi ne, %1, %c0_i32_0 : i32
    scf.if %2 {
      %cst_27 = arith.constant -1.000000e+20 : f32
      %45 = vector.broadcast %cst_27 : f32 to vector<64x1xf32>
      %c0_28 = arith.constant 0 : index
      %c0_29 = arith.constant 0 : index
      %46 = vector.load %arg8[%c0_28, %c0_29] : memref<64x1xf32, #tpu.memory_space<vmem>>, vector<64x1xf32>
      tpu.vector_store %arg8[%c0_28, %c0_29], %45 {strides = array<i32>} : memref<64x1xf32, #tpu.memory_space<vmem>>, vector<64x1xf32>,
      %cst_30 = arith.constant 0.000000e+00 : f32
      %47 = vector.broadcast %cst_30 : f32 to vector<64x1xf32>
      %c0_31 = arith.constant 0 : index
      %c0_32 = arith.constant 0 : index
      %48 = vector.load %arg9[%c0_31, %c0_32] : memref<64x1xf32, #tpu.memory_space<vmem>>, vector<64x1xf32>
      tpu.vector_store %arg9[%c0_31, %c0_32], %47 {strides = array<i32>} : memref<64x1xf32, #tpu.memory_space<vmem>>, vector<64x1xf32>,
      %cst_33 = arith.constant 0.000000e+00 : f32
      %49 = vector.broadcast %cst_33 : f32 to vector<64x4xf32>
      %c0_34 = arith.constant 0 : index
      %c0_35 = arith.constant 0 : index
      %50 = vector.load %arg10[%c0_34, %c0_35] : memref<64x4xf32, #tpu.memory_space<vmem>>, vector<64x4xf32>
      tpu.vector_store %arg10[%c0_34, %c0_35], %49 {strides = array<i32>} : memref<64x4xf32, #tpu.memory_space<vmem>>, vector<64x4xf32>,
    } else {
    }
    %c0 = arith.constant 0 : index
    %c0_1 = arith.constant 0 : index
    %3 = vector.load %arg5[%c0, %c0_1] : memref<64x64xi8, #tpu.memory_space<vmem>>, vector<64x64xi8>
    %4 = arith.sitofp %3 : vector<64x64xi8> to vector<64x64xf32>
    %cst = arith.constant 0.000000e+00 : f32
    %5 = vector.broadcast %cst : f32 to vector<64x64xf32>
    %6 = arith.cmpf ogt, %4, %5 : vector<64x64xf32>
    %c0_2 = arith.constant 0 : index
    %c0_3 = arith.constant 0 : index
    %7 = vector.load %arg4[%c0_2, %c0_3] : memref<64x1xf32, #tpu.memory_space<vmem>>, vector<64x1xf32>
    %c0_4 = arith.constant 0 : index
    %c0_5 = arith.constant 0 : index
    %8 = vector.load %arg3[%c0_4, %c0_5] : memref<64x1xf32, #tpu.memory_space<vmem>>, vector<64x1xf32>
    %9 = tpu.transpose %8, [1, 0] : vector<64x1xf32> -> vector<1x64xf32>
    %c0_6 = arith.constant 0 : index
    %c0_7 = arith.constant 0 : index
    %10 = vector.load %arg2[%c0_6, %c0_7] : memref<64x4xbf16, #tpu.memory_space<vmem>>, vector<64x4xbf16>
    %c0_8 = arith.constant 0 : index
    %c0_9 = arith.constant 0 : index
    %11 = vector.load %arg8[%c0_8, %c0_9] : memref<64x1xf32, #tpu.memory_space<vmem>>, vector<64x1xf32>
    %12 = vector.broadcast %7 : vector<64x1xf32> to vector<64x64xf32>
    %13 = vector.broadcast %9 : vector<1x64xf32> to vector<64x64xf32>
    %14 = arith.addf %12, %13 : vector<64x64xf32>
    %cst_10 = arith.constant 2.000000e-01 : f32
    %15 = vector.broadcast %cst_10 : f32 to vector<64x64xf32>
    %16 = arith.mulf %15, %14 : vector<64x64xf32>
    %17 = arith.maximumf %14, %16 : vector<64x64xf32>
    %cst_11 = arith.constant -1.000000e+30 : f32
    %18 = vector.broadcast %cst_11 : f32 to vector<64x64xf32>
    %19 = arith.select %6, %17, %18 : vector<64x64xi1>, vector<64x64xf32>
    %cst_12 = arith.constant dense<0xFF800000> : vector<64xf32>
    %20 = vector.multi_reduction <maximumf>, %19, %cst_12 [1] : vector<64x64xf32> to vector<64xf32>
    %21 = vector.shape_cast %20 : vector<64xf32> to vector<64x1xf32>
    %22 = arith.maximumf %11, %21 : vector<64x1xf32>
    %23 = vector.broadcast %22 : vector<64x1xf32> to vector<64x64xf32>
    %24 = arith.subf %19, %23 : vector<64x64xf32>
    %25 = math.exp %24 : vector<64x64xf32>
    %cst_13 = arith.constant dense<0.000000e+00> : vector<64xf32>
    %26 = vector.multi_reduction <add>, %25, %cst_13 [1] : vector<64x64xf32> to vector<64xf32>
    %27 = vector.shape_cast %26 : vector<64xf32> to vector<64x1xf32>
    %28 = arith.truncf %25 : vector<64x64xf32> to vector<64x64xbf16>
    %cst_14 = arith.constant dense<0.000000e+00> : vector<64x4xf32>
    %29 = tpu.matmul %28, %10, %cst_14 {dimension_numbers = #tpu.dot_dimension_numbers<[1], [0], [0], [1], [0, 0, 1, 1], [], []>} : vector<64x64xbf16>, vector<64x4xbf16>, vector<64x4xf32> -> vector<64x4xf32>
    %30 = arith.subf %11, %22 : vector<64x1xf32>
    %31 = math.exp %30 : vector<64x1xf32>
    %c0_15 = arith.constant 0 : index
    %c0_16 = arith.constant 0 : index
    %32 = vector.load %arg9[%c0_15, %c0_16] : memref<64x1xf32, #tpu.memory_space<vmem>>, vector<64x1xf32>
    %33 = arith.mulf %31, %32 : vector<64x1xf32>
    %34 = arith.addf %33, %27 : vector<64x1xf32>
    %c0_17 = arith.constant 0 : index
    %c0_18 = arith.constant 0 : index
    %35 = vector.load %arg9[%c0_17, %c0_18] : memref<64x1xf32, #tpu.memory_space<vmem>>, vector<64x1xf32>
    tpu.vector_store %arg9[%c0_17, %c0_18], %34 {strides = array<i32>} : memref<64x1xf32, #tpu.memory_space<vmem>>, vector<64x1xf32>,
    %c0_19 = arith.constant 0 : index
    %c0_20 = arith.constant 0 : index
    %36 = vector.load %arg10[%c0_19, %c0_20] : memref<64x4xf32, #tpu.memory_space<vmem>>, vector<64x4xf32>
    %37 = vector.broadcast %31 : vector<64x1xf32> to vector<64x4xf32>
    %38 = arith.mulf %37, %36 : vector<64x4xf32>
    %39 = arith.addf %38, %29 : vector<64x4xf32>
    %c0_21 = arith.constant 0 : index
    %c0_22 = arith.constant 0 : index
    %40 = vector.load %arg10[%c0_21, %c0_22] : memref<64x4xf32, #tpu.memory_space<vmem>>, vector<64x4xf32>
    tpu.vector_store %arg10[%c0_21, %c0_22], %39 {strides = array<i32>} : memref<64x4xf32, #tpu.memory_space<vmem>>, vector<64x4xf32>,
    %c0_23 = arith.constant 0 : index
    %c0_24 = arith.constant 0 : index
    %41 = vector.load %arg8[%c0_23, %c0_24] : memref<64x1xf32, #tpu.memory_space<vmem>>, vector<64x1xf32>
    tpu.vector_store %arg8[%c0_23, %c0_24], %22 {strides = array<i32>} : memref<64x1xf32, #tpu.memory_space<vmem>>, vector<64x1xf32>,
    %c0_i32_25 = arith.constant 0 : i32
    %42 = arith.cmpi eq, %arg1, %c0_i32_25 : i32
    %43 = arith.extui %42 : i1 to i32
    %c0_i32_26 = arith.constant 0 : i32
    %44 = arith.cmpi ne, %43, %c0_i32_26 : i32
    scf.if %44 {
      %c0_27 = arith.constant 0 : index
      %c0_28 = arith.constant 0 : index
      %45 = vector.load %arg9[%c0_27, %c0_28] : memref<64x1xf32, #tpu.memory_space<vmem>>, vector<64x1xf32>
      %46 = tpu.reciprocal %45 {approx = true} : vector<64x1xf32> -> vector<64x1xf32>
      %c0_29 = arith.constant 0 : index
      %c0_30 = arith.constant 0 : index
      %47 = vector.load %arg10[%c0_29, %c0_30] : memref<64x4xf32, #tpu.memory_space<vmem>>, vector<64x4xf32>
      %48 = vector.broadcast %46 : vector<64x1xf32> to vector<64x4xf32>
      %49 = arith.mulf %47, %48 : vector<64x4xf32>
      %cst_31 = arith.constant 0.000000e+00 : f32
      %50 = vector.broadcast %cst_31 : f32 to vector<64x124xf32>
      %51 = tpu.concatenate %49, %50 in 1 : vector<64x4xf32>, vector<64x124xf32> -> vector<64x128xf32>
      %c0_32 = arith.constant 0 : index
      %c0_33 = arith.constant 0 : index
      %52 = vector.load %arg7[%c0_32, %c0_33] : memref<64x128xf32, #tpu.memory_space<vmem>>, vector<64x128xf32>
      tpu.vector_store %arg7[%c0_32, %c0_33], %51 {strides = array<i32>} : memref<64x128xf32, #tpu.memory_space<vmem>>, vector<64x128xf32>,
    } else {
    }
    return
  }
  func.func @transform_0(%arg0: i32, %arg1: i32) -> (i32, i32) {
    %c0_i32 = arith.constant 0 : i32
    %c0_i32_0 = arith.constant 0 : i32
    return %arg1, %c0_i32 : i32, i32
  }
  func.func @transform_1(%arg0: i32, %arg1: i32) -> (i32, i32) {
    %c0_i32 = arith.constant 0 : i32
    %c0_i32_0 = arith.constant 0 : i32
    return %arg1, %c0_i32 : i32, i32
  }
  func.func @transform_2(%arg0: i32, %arg1: i32) -> (i32, i32) {
    %c0_i32 = arith.constant 0 : i32
    %c0_i32_0 = arith.constant 0 : i32
    return %arg0, %c0_i32 : i32, i32
  }
  func.func @transform_3(%arg0: i32, %arg1: i32) -> (i32, i32) {
    %c0_i32 = arith.constant 0 : i32
    return %arg0, %arg1 : i32, i32
  }
  func.func @transform_4(%arg0: i32, %arg1: i32) -> (i32, i32) {
    %c0_i32 = arith.constant 0 : i32
    %c0_i32_0 = arith.constant 0 : i32
    %c0_i32_1 = arith.constant 0 : i32
    return %c0_i32, %c0_i32_0 : i32, i32
  }
  func.func @transform_5(%arg0: i32, %arg1: i32) -> (i32, i32) {
    %c0_i32 = arith.constant 0 : i32
    %c0_i32_0 = arith.constant 0 : i32
    return %arg0, %c0_i32 : i32, i32
  }
}

module attributes {stable_mosaic.version = 11 : i64} {
  func.func @proj_kernel(%arg0: i32, %arg1: memref<64x128xbf16, #tpu.memory_space<vmem>>, %arg2: memref<128x4xbf16, #tpu.memory_space<vmem>>, %arg3: memref<4x2xbf16, #tpu.memory_space<vmem>>, %arg4: memref<64x4xbf16, #tpu.memory_space<vmem>>, %arg5: memref<64x1xf32, #tpu.memory_space<vmem>>, %arg6: memref<64x1xf32, #tpu.memory_space<vmem>>) attributes {dimension_semantics = [#tpu.dimension_semantics<parallel>], iteration_bounds = array<i64: 1>, scalar_prefetch = 0 : i64, scratch_operands = 0 : i64, tpu.core_type = #tpu.core_type<tc>, window_params = [{transform_indices = @transform_0, window_bounds = array<i64: 64, 128>}, {pipeline_mode = #tpu.pipeline_mode<synchronous>, transform_indices = @transform_1, window_bounds = array<i64: 128, 4>}, {pipeline_mode = #tpu.pipeline_mode<synchronous>, transform_indices = @transform_2, window_bounds = array<i64: 4, 2>}, {transform_indices = @transform_3, window_bounds = array<i64: 64, 4>}, {transform_indices = @transform_4, window_bounds = array<i64: 64, 1>}, {transform_indices = @transform_5, window_bounds = array<i64: 64, 1>}]} {
    %c0 = arith.constant 0 : index
    %c0_0 = arith.constant 0 : index
    %0 = vector.load %arg1[%c0, %c0_0] : memref<64x128xbf16, #tpu.memory_space<vmem>>, vector<64x128xbf16>
    %c0_1 = arith.constant 0 : index
    %c0_2 = arith.constant 0 : index
    %1 = vector.load %arg2[%c0_1, %c0_2] : memref<128x4xbf16, #tpu.memory_space<vmem>>, vector<128x4xbf16>
    %cst = arith.constant dense<0.000000e+00> : vector<64x4xf32>
    %2 = tpu.matmul %0, %1, %cst {dimension_numbers = #tpu.dot_dimension_numbers<[1], [0], [0], [1], [0, 0, 1, 1], [], []>} : vector<64x128xbf16>, vector<128x4xbf16>, vector<64x4xf32> -> vector<64x4xf32>
    %3 = arith.truncf %2 : vector<64x4xf32> to vector<64x4xbf16>
    %c0_3 = arith.constant 0 : index
    %c0_4 = arith.constant 0 : index
    %4 = vector.load %arg3[%c0_3, %c0_4] : memref<4x2xbf16, #tpu.memory_space<vmem>>, vector<4x2xbf16>
    %cst_5 = arith.constant dense<0.000000e+00> : vector<64x2xf32>
    %5 = tpu.matmul %3, %4, %cst_5 {dimension_numbers = #tpu.dot_dimension_numbers<[1], [0], [0], [1], [0, 0, 1, 1], [], []>} : vector<64x4xbf16>, vector<4x2xbf16>, vector<64x2xf32> -> vector<64x2xf32>
    %6 = arith.truncf %2 : vector<64x4xf32> to vector<64x4xbf16>
    %c0_6 = arith.constant 0 : index
    %c0_7 = arith.constant 0 : index
    %7 = vector.load %arg4[%c0_6, %c0_7] : memref<64x4xbf16, #tpu.memory_space<vmem>>, vector<64x4xbf16>
    tpu.vector_store %arg4[%c0_6, %c0_7], %6 {strides = array<i32>} : memref<64x4xbf16, #tpu.memory_space<vmem>>, vector<64x4xbf16>,
    %8 = vector.extract_strided_slice %5 {offsets = [0, 0], sizes = [64, 1], strides = [1, 1]} : vector<64x2xf32> to vector<64x1xf32>
    %c0_8 = arith.constant 0 : index
    %c0_9 = arith.constant 0 : index
    %9 = vector.load %arg5[%c0_8, %c0_9] : memref<64x1xf32, #tpu.memory_space<vmem>>, vector<64x1xf32>
    tpu.vector_store %arg5[%c0_8, %c0_9], %8 {strides = array<i32>} : memref<64x1xf32, #tpu.memory_space<vmem>>, vector<64x1xf32>,
    %10 = vector.extract_strided_slice %5 {offsets = [0, 1], sizes = [64, 1], strides = [1, 1]} : vector<64x2xf32> to vector<64x1xf32>
    %c0_10 = arith.constant 0 : index
    %c0_11 = arith.constant 0 : index
    %11 = vector.load %arg6[%c0_10, %c0_11] : memref<64x1xf32, #tpu.memory_space<vmem>>, vector<64x1xf32>
    tpu.vector_store %arg6[%c0_10, %c0_11], %10 {strides = array<i32>} : memref<64x1xf32, #tpu.memory_space<vmem>>, vector<64x1xf32>,
    return
  }
  func.func @transform_0(%arg0: i32) -> (i32, i32) {
    %c0_i32 = arith.constant 0 : i32
    %c0_i32_0 = arith.constant 0 : i32
    return %arg0, %c0_i32 : i32, i32
  }
  func.func @transform_1(%arg0: i32) -> (i32, i32) {
    %c0_i32 = arith.constant 0 : i32
    %c0_i32_0 = arith.constant 0 : i32
    %c0_i32_1 = arith.constant 0 : i32
    return %c0_i32, %c0_i32_0 : i32, i32
  }
  func.func @transform_2(%arg0: i32) -> (i32, i32) {
    %c0_i32 = arith.constant 0 : i32
    %c0_i32_0 = arith.constant 0 : i32
    %c0_i32_1 = arith.constant 0 : i32
    return %c0_i32, %c0_i32_0 : i32, i32
  }
  func.func @transform_3(%arg0: i32) -> (i32, i32) {
    %c0_i32 = arith.constant 0 : i32
    %c0_i32_0 = arith.constant 0 : i32
    return %arg0, %c0_i32 : i32, i32
  }
  func.func @transform_4(%arg0: i32) -> (i32, i32) {
    %c0_i32 = arith.constant 0 : i32
    %c0_i32_0 = arith.constant 0 : i32
    return %arg0, %c0_i32 : i32, i32
  }
  func.func @transform_5(%arg0: i32) -> (i32, i32) {
    %c0_i32 = arith.constant 0 : i32
    %c0_i32_0 = arith.constant 0 : i32
    return %arg0, %c0_i32 : i32, i32
  }
}

module attributes {stable_mosaic.version = 11 : i64} {
  func.func @agg_kernel(%arg0: i32, %arg1: i32, %arg2: memref<64x64xbf16, #tpu.memory_space<vmem>>, %arg3: memref<64x8xf32, #tpu.memory_space<vmem>>, %arg4: memref<64x8xf32, #tpu.memory_space<vmem>>, %arg5: memref<64x64xi8, #tpu.memory_space<vmem>>, %arg6: memref<8x64xf32, #tpu.memory_space<vmem>>, %arg7: memref<64x128xbf16, #tpu.memory_space<vmem>>, %arg8: memref<64x8xf32, #tpu.memory_space<vmem>>, %arg9: memref<64x8xf32, #tpu.memory_space<vmem>>, %arg10: memref<64x64xf32, #tpu.memory_space<vmem>>) attributes {dimension_semantics = [#tpu.dimension_semantics<parallel>, #tpu.dimension_semantics<arbitrary>], iteration_bounds = array<i64: 1, 1>, scalar_prefetch = 0 : i64, scratch_operands = 3 : i64, tpu.core_type = #tpu.core_type<tc>, window_params = [{transform_indices = @transform_0, window_bounds = array<i64: 64, 64>}, {transform_indices = @transform_1, window_bounds = array<i64: 64, 8>}, {transform_indices = @transform_2, window_bounds = array<i64: 64, 8>}, {transform_indices = @transform_3, window_bounds = array<i64: 64, 64>}, {pipeline_mode = #tpu.pipeline_mode<synchronous>, transform_indices = @transform_4, window_bounds = array<i64: 8, 64>}, {transform_indices = @transform_5, window_bounds = array<i64: 64, 128>}]} {
    %c0_i32 = arith.constant 0 : i32
    %0 = arith.cmpi eq, %arg1, %c0_i32 : i32
    %1 = arith.extui %0 : i1 to i32
    %c0_i32_0 = arith.constant 0 : i32
    %2 = arith.cmpi ne, %1, %c0_i32_0 : i32
    scf.if %2 {
      %cst_65 = arith.constant -1.000000e+20 : f32
      %207 = vector.broadcast %cst_65 : f32 to vector<64x8xf32>
      %c0_66 = arith.constant 0 : index
      %c0_67 = arith.constant 0 : index
      %208 = vector.load %arg8[%c0_66, %c0_67] : memref<64x8xf32, #tpu.memory_space<vmem>>, vector<64x8xf32>
      tpu.vector_store %arg8[%c0_66, %c0_67], %207 {strides = array<i32>} : memref<64x8xf32, #tpu.memory_space<vmem>>, vector<64x8xf32>,
      %cst_68 = arith.constant 0.000000e+00 : f32
      %209 = vector.broadcast %cst_68 : f32 to vector<64x8xf32>
      %c0_69 = arith.constant 0 : index
      %c0_70 = arith.constant 0 : index
      %210 = vector.load %arg9[%c0_69, %c0_70] : memref<64x8xf32, #tpu.memory_space<vmem>>, vector<64x8xf32>
      tpu.vector_store %arg9[%c0_69, %c0_70], %209 {strides = array<i32>} : memref<64x8xf32, #tpu.memory_space<vmem>>, vector<64x8xf32>,
      %cst_71 = arith.constant 0.000000e+00 : f32
      %211 = vector.broadcast %cst_71 : f32 to vector<64x64xf32>
      %c0_72 = arith.constant 0 : index
      %c0_73 = arith.constant 0 : index
      %212 = vector.load %arg10[%c0_72, %c0_73] : memref<64x64xf32, #tpu.memory_space<vmem>>, vector<64x64xf32>
      tpu.vector_store %arg10[%c0_72, %c0_73], %211 {strides = array<i32>} : memref<64x64xf32, #tpu.memory_space<vmem>>, vector<64x64xf32>,
    } else {
    }
    %c0 = arith.constant 0 : index
    %c0_1 = arith.constant 0 : index
    %3 = vector.load %arg5[%c0, %c0_1] : memref<64x64xi8, #tpu.memory_space<vmem>>, vector<64x64xi8>
    %4 = arith.sitofp %3 : vector<64x64xi8> to vector<64x64xf32>
    %cst = arith.constant 0.000000e+00 : f32
    %5 = vector.broadcast %cst : f32 to vector<64x64xf32>
    %6 = arith.cmpf ogt, %4, %5 : vector<64x64xf32>
    %c0_2 = arith.constant 0 : index
    %c0_3 = arith.constant 0 : index
    %7 = vector.load %arg4[%c0_2, %c0_3] : memref<64x8xf32, #tpu.memory_space<vmem>>, vector<64x8xf32>
    %c0_4 = arith.constant 0 : index
    %c0_5 = arith.constant 0 : index
    %8 = vector.load %arg3[%c0_4, %c0_5] : memref<64x8xf32, #tpu.memory_space<vmem>>, vector<64x8xf32>
    %9 = tpu.transpose %8, [1, 0] : vector<64x8xf32> -> vector<8x64xf32>
    %c0_6 = arith.constant 0 : index
    %c0_7 = arith.constant 0 : index
    %10 = vector.load %arg2[%c0_6, %c0_7] : memref<64x64xbf16, #tpu.memory_space<vmem>>, vector<64x64xbf16>
    %c0_8 = arith.constant 0 : index
    %c0_9 = arith.constant 0 : index
    %11 = vector.load %arg8[%c0_8, %c0_9] : memref<64x8xf32, #tpu.memory_space<vmem>>, vector<64x8xf32>
    %12 = vector.extract_strided_slice %7 {offsets = [0, 0], sizes = [64, 1], strides = [1, 1]} : vector<64x8xf32> to vector<64x1xf32>
    %13 = vector.extract_strided_slice %9 {offsets = [0, 0], sizes = [1, 64], strides = [1, 1]} : vector<8x64xf32> to vector<1x64xf32>
    %14 = vector.broadcast %12 : vector<64x1xf32> to vector<64x64xf32>
    %15 = vector.broadcast %13 : vector<1x64xf32> to vector<64x64xf32>
    %16 = arith.addf %14, %15 : vector<64x64xf32>
    %cst_10 = arith.constant 2.000000e-01 : f32
    %17 = vector.broadcast %cst_10 : f32 to vector<64x64xf32>
    %18 = arith.mulf %17, %16 : vector<64x64xf32>
    %19 = arith.maximumf %16, %18 : vector<64x64xf32>
    %cst_11 = arith.constant -1.000000e+30 : f32
    %20 = vector.broadcast %cst_11 : f32 to vector<64x64xf32>
    %21 = arith.select %6, %19, %20 : vector<64x64xi1>, vector<64x64xf32>
    %22 = vector.extract_strided_slice %11 {offsets = [0, 0], sizes = [64, 1], strides = [1, 1]} : vector<64x8xf32> to vector<64x1xf32>
    %cst_12 = arith.constant dense<0xFF800000> : vector<64xf32>
    %23 = vector.multi_reduction <maximumf>, %21, %cst_12 [1] : vector<64x64xf32> to vector<64xf32>
    %24 = vector.shape_cast %23 : vector<64xf32> to vector<64x1xf32>
    %25 = arith.maximumf %22, %24 : vector<64x1xf32>
    %26 = vector.broadcast %25 : vector<64x1xf32> to vector<64x64xf32>
    %27 = arith.subf %21, %26 : vector<64x64xf32>
    %28 = math.exp %27 : vector<64x64xf32>
    %cst_13 = arith.constant dense<0.000000e+00> : vector<64xf32>
    %29 = vector.multi_reduction <add>, %28, %cst_13 [1] : vector<64x64xf32> to vector<64xf32>
    %30 = vector.shape_cast %29 : vector<64xf32> to vector<64x1xf32>
    %31 = arith.truncf %28 : vector<64x64xf32> to vector<64x64xbf16>
    %32 = vector.extract_strided_slice %10 {offsets = [0, 0], sizes = [64, 8], strides = [1, 1]} : vector<64x64xbf16> to vector<64x8xbf16>
    %cst_14 = arith.constant dense<0.000000e+00> : vector<64x8xf32>
    %33 = tpu.matmul %31, %32, %cst_14 {dimension_numbers = #tpu.dot_dimension_numbers<[1], [0], [0], [1], [0, 0, 1, 1], [], []>} : vector<64x64xbf16>, vector<64x8xbf16>, vector<64x8xf32> -> vector<64x8xf32>
    %34 = vector.extract_strided_slice %7 {offsets = [0, 1], sizes = [64, 1], strides = [1, 1]} : vector<64x8xf32> to vector<64x1xf32>
    %35 = vector.extract_strided_slice %9 {offsets = [1, 0], sizes = [1, 64], strides = [1, 1]} : vector<8x64xf32> to vector<1x64xf32>
    %36 = vector.broadcast %34 : vector<64x1xf32> to vector<64x64xf32>
    %37 = vector.broadcast %35 : vector<1x64xf32> to vector<64x64xf32>
    %38 = arith.addf %36, %37 : vector<64x64xf32>
    %cst_15 = arith.constant 2.000000e-01 : f32
    %39 = vector.broadcast %cst_15 : f32 to vector<64x64xf32>
    %40 = arith.mulf %39, %38 : vector<64x64xf32>
    %41 = arith.maximumf %38, %40 : vector<64x64xf32>
    %cst_16 = arith.constant -1.000000e+30 : f32
    %42 = vector.broadcast %cst_16 : f32 to vector<64x64xf32>
    %43 = arith.select %6, %41, %42 : vector<64x64xi1>, vector<64x64xf32>
    %44 = vector.extract_strided_slice %11 {offsets = [0, 1], sizes = [64, 1], strides = [1, 1]} : vector<64x8xf32> to vector<64x1xf32>
    %cst_17 = arith.constant dense<0xFF800000> : vector<64xf32>
    %45 = vector.multi_reduction <maximumf>, %43, %cst_17 [1] : vector<64x64xf32> to vector<64xf32>
    %46 = vector.shape_cast %45 : vector<64xf32> to vector<64x1xf32>
    %47 = arith.maximumf %44, %46 : vector<64x1xf32>
    %48 = vector.broadcast %47 : vector<64x1xf32> to vector<64x64xf32>
    %49 = arith.subf %43, %48 : vector<64x64xf32>
    %50 = math.exp %49 : vector<64x64xf32>
    %cst_18 = arith.constant dense<0.000000e+00> : vector<64xf32>
    %51 = vector.multi_reduction <add>, %50, %cst_18 [1] : vector<64x64xf32> to vector<64xf32>
    %52 = vector.shape_cast %51 : vector<64xf32> to vector<64x1xf32>
    %53 = arith.truncf %50 : vector<64x64xf32> to vector<64x64xbf16>
    %54 = vector.extract_strided_slice %10 {offsets = [0, 8], sizes = [64, 8], strides = [1, 1]} : vector<64x64xbf16> to vector<64x8xbf16>
    %cst_19 = arith.constant dense<0.000000e+00> : vector<64x8xf32>
    %55 = tpu.matmul %53, %54, %cst_19 {dimension_numbers = #tpu.dot_dimension_numbers<[1], [0], [0], [1], [0, 0, 1, 1], [], []>} : vector<64x64xbf16>, vector<64x8xbf16>, vector<64x8xf32> -> vector<64x8xf32>
    %56 = vector.extract_strided_slice %7 {offsets = [0, 2], sizes = [64, 1], strides = [1, 1]} : vector<64x8xf32> to vector<64x1xf32>
    %57 = vector.extract_strided_slice %9 {offsets = [2, 0], sizes = [1, 64], strides = [1, 1]} : vector<8x64xf32> to vector<1x64xf32>
    %58 = vector.broadcast %56 : vector<64x1xf32> to vector<64x64xf32>
    %59 = vector.broadcast %57 : vector<1x64xf32> to vector<64x64xf32>
    %60 = arith.addf %58, %59 : vector<64x64xf32>
    %cst_20 = arith.constant 2.000000e-01 : f32
    %61 = vector.broadcast %cst_20 : f32 to vector<64x64xf32>
    %62 = arith.mulf %61, %60 : vector<64x64xf32>
    %63 = arith.maximumf %60, %62 : vector<64x64xf32>
    %cst_21 = arith.constant -1.000000e+30 : f32
    %64 = vector.broadcast %cst_21 : f32 to vector<64x64xf32>
    %65 = arith.select %6, %63, %64 : vector<64x64xi1>, vector<64x64xf32>
    %66 = vector.extract_strided_slice %11 {offsets = [0, 2], sizes = [64, 1], strides = [1, 1]} : vector<64x8xf32> to vector<64x1xf32>
    %cst_22 = arith.constant dense<0xFF800000> : vector<64xf32>
    %67 = vector.multi_reduction <maximumf>, %65, %cst_22 [1] : vector<64x64xf32> to vector<64xf32>
    %68 = vector.shape_cast %67 : vector<64xf32> to vector<64x1xf32>
    %69 = arith.maximumf %66, %68 : vector<64x1xf32>
    %70 = vector.broadcast %69 : vector<64x1xf32> to vector<64x64xf32>
    %71 = arith.subf %65, %70 : vector<64x64xf32>
    %72 = math.exp %71 : vector<64x64xf32>
    %cst_23 = arith.constant dense<0.000000e+00> : vector<64xf32>
    %73 = vector.multi_reduction <add>, %72, %cst_23 [1] : vector<64x64xf32> to vector<64xf32>
    %74 = vector.shape_cast %73 : vector<64xf32> to vector<64x1xf32>
    %75 = arith.truncf %72 : vector<64x64xf32> to vector<64x64xbf16>
    %76 = vector.extract_strided_slice %10 {offsets = [0, 16], sizes = [64, 8], strides = [1, 1]} : vector<64x64xbf16> to vector<64x8xbf16>
    %cst_24 = arith.constant dense<0.000000e+00> : vector<64x8xf32>
    %77 = tpu.matmul %75, %76, %cst_24 {dimension_numbers = #tpu.dot_dimension_numbers<[1], [0], [0], [1], [0, 0, 1, 1], [], []>} : vector<64x64xbf16>, vector<64x8xbf16>, vector<64x8xf32> -> vector<64x8xf32>
    %78 = vector.extract_strided_slice %7 {offsets = [0, 3], sizes = [64, 1], strides = [1, 1]} : vector<64x8xf32> to vector<64x1xf32>
    %79 = vector.extract_strided_slice %9 {offsets = [3, 0], sizes = [1, 64], strides = [1, 1]} : vector<8x64xf32> to vector<1x64xf32>
    %80 = vector.broadcast %78 : vector<64x1xf32> to vector<64x64xf32>
    %81 = vector.broadcast %79 : vector<1x64xf32> to vector<64x64xf32>
    %82 = arith.addf %80, %81 : vector<64x64xf32>
    %cst_25 = arith.constant 2.000000e-01 : f32
    %83 = vector.broadcast %cst_25 : f32 to vector<64x64xf32>
    %84 = arith.mulf %83, %82 : vector<64x64xf32>
    %85 = arith.maximumf %82, %84 : vector<64x64xf32>
    %cst_26 = arith.constant -1.000000e+30 : f32
    %86 = vector.broadcast %cst_26 : f32 to vector<64x64xf32>
    %87 = arith.select %6, %85, %86 : vector<64x64xi1>, vector<64x64xf32>
    %88 = vector.extract_strided_slice %11 {offsets = [0, 3], sizes = [64, 1], strides = [1, 1]} : vector<64x8xf32> to vector<64x1xf32>
    %cst_27 = arith.constant dense<0xFF800000> : vector<64xf32>
    %89 = vector.multi_reduction <maximumf>, %87, %cst_27 [1] : vector<64x64xf32> to vector<64xf32>
    %90 = vector.shape_cast %89 : vector<64xf32> to vector<64x1xf32>
    %91 = arith.maximumf %88, %90 : vector<64x1xf32>
    %92 = vector.broadcast %91 : vector<64x1xf32> to vector<64x64xf32>
    %93 = arith.subf %87, %92 : vector<64x64xf32>
    %94 = math.exp %93 : vector<64x64xf32>
    %cst_28 = arith.constant dense<0.000000e+00> : vector<64xf32>
    %95 = vector.multi_reduction <add>, %94, %cst_28 [1] : vector<64x64xf32> to vector<64xf32>
    %96 = vector.shape_cast %95 : vector<64xf32> to vector<64x1xf32>
    %97 = arith.truncf %94 : vector<64x64xf32> to vector<64x64xbf16>
    %98 = vector.extract_strided_slice %10 {offsets = [0, 24], sizes = [64, 8], strides = [1, 1]} : vector<64x64xbf16> to vector<64x8xbf16>
    %cst_29 = arith.constant dense<0.000000e+00> : vector<64x8xf32>
    %99 = tpu.matmul %97, %98, %cst_29 {dimension_numbers = #tpu.dot_dimension_numbers<[1], [0], [0], [1], [0, 0, 1, 1], [], []>} : vector<64x64xbf16>, vector<64x8xbf16>, vector<64x8xf32> -> vector<64x8xf32>
    %100 = vector.extract_strided_slice %7 {offsets = [0, 4], sizes = [64, 1], strides = [1, 1]} : vector<64x8xf32> to vector<64x1xf32>
    %101 = vector.extract_strided_slice %9 {offsets = [4, 0], sizes = [1, 64], strides = [1, 1]} : vector<8x64xf32> to vector<1x64xf32>
    %102 = vector.broadcast %100 : vector<64x1xf32> to vector<64x64xf32>
    %103 = vector.broadcast %101 : vector<1x64xf32> to vector<64x64xf32>
    %104 = arith.addf %102, %103 : vector<64x64xf32>
    %cst_30 = arith.constant 2.000000e-01 : f32
    %105 = vector.broadcast %cst_30 : f32 to vector<64x64xf32>
    %106 = arith.mulf %105, %104 : vector<64x64xf32>
    %107 = arith.maximumf %104, %106 : vector<64x64xf32>
    %cst_31 = arith.constant -1.000000e+30 : f32
    %108 = vector.broadcast %cst_31 : f32 to vector<64x64xf32>
    %109 = arith.select %6, %107, %108 : vector<64x64xi1>, vector<64x64xf32>
    %110 = vector.extract_strided_slice %11 {offsets = [0, 4], sizes = [64, 1], strides = [1, 1]} : vector<64x8xf32> to vector<64x1xf32>
    %cst_32 = arith.constant dense<0xFF800000> : vector<64xf32>
    %111 = vector.multi_reduction <maximumf>, %109, %cst_32 [1] : vector<64x64xf32> to vector<64xf32>
    %112 = vector.shape_cast %111 : vector<64xf32> to vector<64x1xf32>
    %113 = arith.maximumf %110, %112 : vector<64x1xf32>
    %114 = vector.broadcast %113 : vector<64x1xf32> to vector<64x64xf32>
    %115 = arith.subf %109, %114 : vector<64x64xf32>
    %116 = math.exp %115 : vector<64x64xf32>
    %cst_33 = arith.constant dense<0.000000e+00> : vector<64xf32>
    %117 = vector.multi_reduction <add>, %116, %cst_33 [1] : vector<64x64xf32> to vector<64xf32>
    %118 = vector.shape_cast %117 : vector<64xf32> to vector<64x1xf32>
    %119 = arith.truncf %116 : vector<64x64xf32> to vector<64x64xbf16>
    %120 = vector.extract_strided_slice %10 {offsets = [0, 32], sizes = [64, 8], strides = [1, 1]} : vector<64x64xbf16> to vector<64x8xbf16>
    %cst_34 = arith.constant dense<0.000000e+00> : vector<64x8xf32>
    %121 = tpu.matmul %119, %120, %cst_34 {dimension_numbers = #tpu.dot_dimension_numbers<[1], [0], [0], [1], [0, 0, 1, 1], [], []>} : vector<64x64xbf16>, vector<64x8xbf16>, vector<64x8xf32> -> vector<64x8xf32>
    %122 = vector.extract_strided_slice %7 {offsets = [0, 5], sizes = [64, 1], strides = [1, 1]} : vector<64x8xf32> to vector<64x1xf32>
    %123 = vector.extract_strided_slice %9 {offsets = [5, 0], sizes = [1, 64], strides = [1, 1]} : vector<8x64xf32> to vector<1x64xf32>
    %124 = vector.broadcast %122 : vector<64x1xf32> to vector<64x64xf32>
    %125 = vector.broadcast %123 : vector<1x64xf32> to vector<64x64xf32>
    %126 = arith.addf %124, %125 : vector<64x64xf32>
    %cst_35 = arith.constant 2.000000e-01 : f32
    %127 = vector.broadcast %cst_35 : f32 to vector<64x64xf32>
    %128 = arith.mulf %127, %126 : vector<64x64xf32>
    %129 = arith.maximumf %126, %128 : vector<64x64xf32>
    %cst_36 = arith.constant -1.000000e+30 : f32
    %130 = vector.broadcast %cst_36 : f32 to vector<64x64xf32>
    %131 = arith.select %6, %129, %130 : vector<64x64xi1>, vector<64x64xf32>
    %132 = vector.extract_strided_slice %11 {offsets = [0, 5], sizes = [64, 1], strides = [1, 1]} : vector<64x8xf32> to vector<64x1xf32>
    %cst_37 = arith.constant dense<0xFF800000> : vector<64xf32>
    %133 = vector.multi_reduction <maximumf>, %131, %cst_37 [1] : vector<64x64xf32> to vector<64xf32>
    %134 = vector.shape_cast %133 : vector<64xf32> to vector<64x1xf32>
    %135 = arith.maximumf %132, %134 : vector<64x1xf32>
    %136 = vector.broadcast %135 : vector<64x1xf32> to vector<64x64xf32>
    %137 = arith.subf %131, %136 : vector<64x64xf32>
    %138 = math.exp %137 : vector<64x64xf32>
    %cst_38 = arith.constant dense<0.000000e+00> : vector<64xf32>
    %139 = vector.multi_reduction <add>, %138, %cst_38 [1] : vector<64x64xf32> to vector<64xf32>
    %140 = vector.shape_cast %139 : vector<64xf32> to vector<64x1xf32>
    %141 = arith.truncf %138 : vector<64x64xf32> to vector<64x64xbf16>
    %142 = vector.extract_strided_slice %10 {offsets = [0, 40], sizes = [64, 8], strides = [1, 1]} : vector<64x64xbf16> to vector<64x8xbf16>
    %cst_39 = arith.constant dense<0.000000e+00> : vector<64x8xf32>
    %143 = tpu.matmul %141, %142, %cst_39 {dimension_numbers = #tpu.dot_dimension_numbers<[1], [0], [0], [1], [0, 0, 1, 1], [], []>} : vector<64x64xbf16>, vector<64x8xbf16>, vector<64x8xf32> -> vector<64x8xf32>
    %144 = vector.extract_strided_slice %7 {offsets = [0, 6], sizes = [64, 1], strides = [1, 1]} : vector<64x8xf32> to vector<64x1xf32>
    %145 = vector.extract_strided_slice %9 {offsets = [6, 0], sizes = [1, 64], strides = [1, 1]} : vector<8x64xf32> to vector<1x64xf32>
    %146 = vector.broadcast %144 : vector<64x1xf32> to vector<64x64xf32>
    %147 = vector.broadcast %145 : vector<1x64xf32> to vector<64x64xf32>
    %148 = arith.addf %146, %147 : vector<64x64xf32>
    %cst_40 = arith.constant 2.000000e-01 : f32
    %149 = vector.broadcast %cst_40 : f32 to vector<64x64xf32>
    %150 = arith.mulf %149, %148 : vector<64x64xf32>
    %151 = arith.maximumf %148, %150 : vector<64x64xf32>
    %cst_41 = arith.constant -1.000000e+30 : f32
    %152 = vector.broadcast %cst_41 : f32 to vector<64x64xf32>
    %153 = arith.select %6, %151, %152 : vector<64x64xi1>, vector<64x64xf32>
    %154 = vector.extract_strided_slice %11 {offsets = [0, 6], sizes = [64, 1], strides = [1, 1]} : vector<64x8xf32> to vector<64x1xf32>
    %cst_42 = arith.constant dense<0xFF800000> : vector<64xf32>
    %155 = vector.multi_reduction <maximumf>, %153, %cst_42 [1] : vector<64x64xf32> to vector<64xf32>
    %156 = vector.shape_cast %155 : vector<64xf32> to vector<64x1xf32>
    %157 = arith.maximumf %154, %156 : vector<64x1xf32>
    %158 = vector.broadcast %157 : vector<64x1xf32> to vector<64x64xf32>
    %159 = arith.subf %153, %158 : vector<64x64xf32>
    %160 = math.exp %159 : vector<64x64xf32>
    %cst_43 = arith.constant dense<0.000000e+00> : vector<64xf32>
    %161 = vector.multi_reduction <add>, %160, %cst_43 [1] : vector<64x64xf32> to vector<64xf32>
    %162 = vector.shape_cast %161 : vector<64xf32> to vector<64x1xf32>
    %163 = arith.truncf %160 : vector<64x64xf32> to vector<64x64xbf16>
    %164 = vector.extract_strided_slice %10 {offsets = [0, 48], sizes = [64, 8], strides = [1, 1]} : vector<64x64xbf16> to vector<64x8xbf16>
    %cst_44 = arith.constant dense<0.000000e+00> : vector<64x8xf32>
    %165 = tpu.matmul %163, %164, %cst_44 {dimension_numbers = #tpu.dot_dimension_numbers<[1], [0], [0], [1], [0, 0, 1, 1], [], []>} : vector<64x64xbf16>, vector<64x8xbf16>, vector<64x8xf32> -> vector<64x8xf32>
    %166 = vector.extract_strided_slice %7 {offsets = [0, 7], sizes = [64, 1], strides = [1, 1]} : vector<64x8xf32> to vector<64x1xf32>
    %167 = vector.extract_strided_slice %9 {offsets = [7, 0], sizes = [1, 64], strides = [1, 1]} : vector<8x64xf32> to vector<1x64xf32>
    %168 = vector.broadcast %166 : vector<64x1xf32> to vector<64x64xf32>
    %169 = vector.broadcast %167 : vector<1x64xf32> to vector<64x64xf32>
    %170 = arith.addf %168, %169 : vector<64x64xf32>
    %cst_45 = arith.constant 2.000000e-01 : f32
    %171 = vector.broadcast %cst_45 : f32 to vector<64x64xf32>
    %172 = arith.mulf %171, %170 : vector<64x64xf32>
    %173 = arith.maximumf %170, %172 : vector<64x64xf32>
    %cst_46 = arith.constant -1.000000e+30 : f32
    %174 = vector.broadcast %cst_46 : f32 to vector<64x64xf32>
    %175 = arith.select %6, %173, %174 : vector<64x64xi1>, vector<64x64xf32>
    %176 = vector.extract_strided_slice %11 {offsets = [0, 7], sizes = [64, 1], strides = [1, 1]} : vector<64x8xf32> to vector<64x1xf32>
    %cst_47 = arith.constant dense<0xFF800000> : vector<64xf32>
    %177 = vector.multi_reduction <maximumf>, %175, %cst_47 [1] : vector<64x64xf32> to vector<64xf32>
    %178 = vector.shape_cast %177 : vector<64xf32> to vector<64x1xf32>
    %179 = arith.maximumf %176, %178 : vector<64x1xf32>
    %180 = vector.broadcast %179 : vector<64x1xf32> to vector<64x64xf32>
    %181 = arith.subf %175, %180 : vector<64x64xf32>
    %182 = math.exp %181 : vector<64x64xf32>
    %cst_48 = arith.constant dense<0.000000e+00> : vector<64xf32>
    %183 = vector.multi_reduction <add>, %182, %cst_48 [1] : vector<64x64xf32> to vector<64xf32>
    %184 = vector.shape_cast %183 : vector<64xf32> to vector<64x1xf32>
    %185 = arith.truncf %182 : vector<64x64xf32> to vector<64x64xbf16>
    %186 = vector.extract_strided_slice %10 {offsets = [0, 56], sizes = [64, 8], strides = [1, 1]} : vector<64x64xbf16> to vector<64x8xbf16>
    %cst_49 = arith.constant dense<0.000000e+00> : vector<64x8xf32>
    %187 = tpu.matmul %185, %186, %cst_49 {dimension_numbers = #tpu.dot_dimension_numbers<[1], [0], [0], [1], [0, 0, 1, 1], [], []>} : vector<64x64xbf16>, vector<64x8xbf16>, vector<64x8xf32> -> vector<64x8xf32>
    %188 = tpu.concatenate %25, %47, %69, %91, %113, %135, %157, %179 in 1 : vector<64x1xf32>, vector<64x1xf32>, vector<64x1xf32>, vector<64x1xf32>, vector<64x1xf32>, vector<64x1xf32>, vector<64x1xf32>, vector<64x1xf32> -> vector<64x8xf32>
    %189 = tpu.concatenate %30, %52, %74, %96, %118, %140, %162, %184 in 1 : vector<64x1xf32>, vector<64x1xf32>, vector<64x1xf32>, vector<64x1xf32>, vector<64x1xf32>, vector<64x1xf32>, vector<64x1xf32>, vector<64x1xf32> -> vector<64x8xf32>
    %190 = tpu.concatenate %33, %55, %77, %99, %121, %143, %165, %187 in 1 : vector<64x8xf32>, vector<64x8xf32>, vector<64x8xf32>, vector<64x8xf32>, vector<64x8xf32>, vector<64x8xf32>, vector<64x8xf32>, vector<64x8xf32> -> vector<64x64xf32>
    %191 = arith.subf %11, %188 : vector<64x8xf32>
    %192 = math.exp %191 : vector<64x8xf32>
    %c0_50 = arith.constant 0 : index
    %c0_51 = arith.constant 0 : index
    %193 = vector.load %arg6[%c0_50, %c0_51] : memref<8x64xf32, #tpu.memory_space<vmem>>, vector<8x64xf32>
    %cst_52 = arith.constant dense<0.000000e+00> : vector<64x64xf32>
    %194 = tpu.matmul %192, %193, %cst_52 {dimension_numbers = #tpu.dot_dimension_numbers<[1], [0], [0], [1], [0, 0, 1, 1], [], []>} : vector<64x8xf32>, vector<8x64xf32>, vector<64x64xf32> -> vector<64x64xf32>
    %c0_53 = arith.constant 0 : index
    %c0_54 = arith.constant 0 : index
    %195 = vector.load %arg9[%c0_53, %c0_54] : memref<64x8xf32, #tpu.memory_space<vmem>>, vector<64x8xf32>
    %196 = arith.mulf %192, %195 : vector<64x8xf32>
    %197 = arith.addf %196, %189 : vector<64x8xf32>
    %c0_55 = arith.constant 0 : index
    %c0_56 = arith.constant 0 : index
    %198 = vector.load %arg9[%c0_55, %c0_56] : memref<64x8xf32, #tpu.memory_space<vmem>>, vector<64x8xf32>
    tpu.vector_store %arg9[%c0_55, %c0_56], %197 {strides = array<i32>} : memref<64x8xf32, #tpu.memory_space<vmem>>, vector<64x8xf32>,
    %c0_57 = arith.constant 0 : index
    %c0_58 = arith.constant 0 : index
    %199 = vector.load %arg10[%c0_57, %c0_58] : memref<64x64xf32, #tpu.memory_space<vmem>>, vector<64x64xf32>
    %200 = arith.mulf %194, %199 : vector<64x64xf32>
    %201 = arith.addf %200, %190 : vector<64x64xf32>
    %c0_59 = arith.constant 0 : index
    %c0_60 = arith.constant 0 : index
    %202 = vector.load %arg10[%c0_59, %c0_60] : memref<64x64xf32, #tpu.memory_space<vmem>>, vector<64x64xf32>
    tpu.vector_store %arg10[%c0_59, %c0_60], %201 {strides = array<i32>} : memref<64x64xf32, #tpu.memory_space<vmem>>, vector<64x64xf32>,
    %c0_61 = arith.constant 0 : index
    %c0_62 = arith.constant 0 : index
    %203 = vector.load %arg8[%c0_61, %c0_62] : memref<64x8xf32, #tpu.memory_space<vmem>>, vector<64x8xf32>
    tpu.vector_store %arg8[%c0_61, %c0_62], %188 {strides = array<i32>} : memref<64x8xf32, #tpu.memory_space<vmem>>, vector<64x8xf32>,
    %c0_i32_63 = arith.constant 0 : i32
    %204 = arith.cmpi eq, %arg1, %c0_i32_63 : i32
    %205 = arith.extui %204 : i1 to i32
    %c0_i32_64 = arith.constant 0 : i32
    %206 = arith.cmpi ne, %205, %c0_i32_64 : i32
    scf.if %206 {
      %c0_65 = arith.constant 0 : index
      %c0_66 = arith.constant 0 : index
      %207 = vector.load %arg9[%c0_65, %c0_66] : memref<64x8xf32, #tpu.memory_space<vmem>>, vector<64x8xf32>
      %208 = tpu.reciprocal %207 {approx = true} : vector<64x8xf32> -> vector<64x8xf32>
      %c0_67 = arith.constant 0 : index
      %c0_68 = arith.constant 0 : index
      %209 = vector.load %arg6[%c0_67, %c0_68] : memref<8x64xf32, #tpu.memory_space<vmem>>, vector<8x64xf32>
      %cst_69 = arith.constant dense<0.000000e+00> : vector<64x64xf32>
      %210 = tpu.matmul %208, %209, %cst_69 {dimension_numbers = #tpu.dot_dimension_numbers<[1], [0], [0], [1], [0, 0, 1, 1], [], []>} : vector<64x8xf32>, vector<8x64xf32>, vector<64x64xf32> -> vector<64x64xf32>
      %c0_70 = arith.constant 0 : index
      %c0_71 = arith.constant 0 : index
      %211 = vector.load %arg10[%c0_70, %c0_71] : memref<64x64xf32, #tpu.memory_space<vmem>>, vector<64x64xf32>
      %212 = arith.mulf %211, %210 : vector<64x64xf32>
      %cst_72 = arith.constant 0.000000e+00 : f32
      %213 = vector.broadcast %cst_72 : f32 to vector<64x64xf32>
      %214 = arith.cmpf ogt, %212, %213 : vector<64x64xf32>
      %cst_73 = arith.constant 0.000000e+00 : f32
      %215 = vector.broadcast %cst_73 : f32 to vector<64x64xf32>
      %216 = arith.minimumf %212, %215 : vector<64x64xf32>
      %217 = math.exp %216 : vector<64x64xf32>
      %cst_74 = arith.constant 1.000000e+00 : f32
      %218 = vector.broadcast %cst_74 : f32 to vector<64x64xf32>
      %219 = arith.subf %217, %218 : vector<64x64xf32>
      %220 = arith.select %214, %212, %219 : vector<64x64xi1>, vector<64x64xf32>
      %cst_75 = arith.constant 0.000000e+00 : f32
      %221 = vector.broadcast %cst_75 : f32 to vector<64x64xf32>
      %222 = tpu.concatenate %220, %221 in 1 : vector<64x64xf32>, vector<64x64xf32> -> vector<64x128xf32>
      %223 = arith.truncf %222 : vector<64x128xf32> to vector<64x128xbf16>
      %c0_76 = arith.constant 0 : index
      %c0_77 = arith.constant 0 : index
      %224 = vector.load %arg7[%c0_76, %c0_77] : memref<64x128xbf16, #tpu.memory_space<vmem>>, vector<64x128xbf16>
      tpu.vector_store %arg7[%c0_76, %c0_77], %223 {strides = array<i32>} : memref<64x128xbf16, #tpu.memory_space<vmem>>, vector<64x128xbf16>,
    } else {
    }
    return
  }
  func.func @transform_0(%arg0: i32, %arg1: i32) -> (i32, i32) {
    %c0_i32 = arith.constant 0 : i32
    %c0_i32_0 = arith.constant 0 : i32
    return %arg1, %c0_i32 : i32, i32
  }
  func.func @transform_1(%arg0: i32, %arg1: i32) -> (i32, i32) {
    %c0_i32 = arith.constant 0 : i32
    %c0_i32_0 = arith.constant 0 : i32
    return %arg1, %c0_i32 : i32, i32
  }
  func.func @transform_2(%arg0: i32, %arg1: i32) -> (i32, i32) {
    %c0_i32 = arith.constant 0 : i32
    %c0_i32_0 = arith.constant 0 : i32
    return %arg0, %c0_i32 : i32, i32
  }
  func.func @transform_3(%arg0: i32, %arg1: i32) -> (i32, i32) {
    %c0_i32 = arith.constant 0 : i32
    return %arg0, %arg1 : i32, i32
  }
  func.func @transform_4(%arg0: i32, %arg1: i32) -> (i32, i32) {
    %c0_i32 = arith.constant 0 : i32
    %c0_i32_0 = arith.constant 0 : i32
    %c0_i32_1 = arith.constant 0 : i32
    return %c0_i32, %c0_i32_0 : i32, i32
  }
  func.func @transform_5(%arg0: i32, %arg1: i32) -> (i32, i32) {
    %c0_i32 = arith.constant 0 : i32
    %c0_i32_0 = arith.constant 0 : i32
    return %arg0, %c0_i32 : i32, i32
  }
}

</mosaic_0001>

<llo_original>
// kernel: _lambda_.4
$region0: #{_lambda_.4}
  #allocation0 [shape = 'u32[]', space=smem, size = 0x4, offset = 0x4, fixed_abs, tag = 'smem constant byte address 0x4 - core index']
  #allocation1 [shape = 'u32[144,128]{1,0:T(1,128)}', space=vmem, size = 0x12000, scoped, tag = 'internal scratch']
  %s0 = inlined_call_operand.vmem [shape: f32[64,16], index: 0, kind: input, shape index: {}]
  %s1 = inlined_call_operand.vmem [shape: bf16[16,64], index: 1, kind: input, shape index: {}]
  %s2 = inlined_call_operand.vmem [shape: bf16[64,16], index: 2, kind: input, shape index: {}]
  %s3 = inlined_call_operand.vmem [shape: bf16[64,64], index: 3, kind: output, shape index: {0}]
  %s4 = inlined_call_operand.vmem [shape: f32[64,8], index: 4, kind: output, shape index: {1}]
  %s5 = inlined_call_operand.vmem [shape: f32[64,8], index: 5, kind: output, shape index: {2}]
  %6 = xla_tuple %s3, %s4, %s5
  %s7 = sld [smem:[#allocation0]]
  $region38: #{_lambda_.4} parent=0
    _
  %s9 = ssub.s32 1, %s7
  %s10 = scalar_select 0, %s9, %s7
  // Predicated region
  $region2: #{_lambda_.4} parent=0 // pred_check
    _
  $region3: #{_lambda_.4} parent=0 // pred_check_branch
    %12 = sbr.rel (0) target = $region5
  $region4: #{_lambda_.4} parent=0 // pred_region
    _
  $region5: #{_lambda_.4} parent=0 // pred_fallthru
    _
  // Predicated region
  $region6: #{_lambda_.4} parent=0 // pred_check
    _
  $region7: #{_lambda_.4} parent=0 // pred_check_branch
    %14 = sbr.rel (0) target = $region9
  $region8: #{_lambda_.4} parent=0 // pred_region
    _
  $region9: #{_lambda_.4} parent=0 // pred_fallthru
    _
  // Predicated region
  $region10: #{_lambda_.4} parent=0 // pred_check
    _
  $region11: #{_lambda_.4} parent=0 // pred_check_branch
    %16 = sbr.rel (0) target = $region13
  $region12: #{_lambda_.4} parent=0 // pred_region
    _
  $region13: #{_lambda_.4} parent=0 // pred_fallthru
    _
  %v18 = vld [vmem:[%s0] sm:$0xff]
  %v19 = vld [vmem:[%s0 + $0x8] sm:$0xff]
  %v20 = vld [vmem:[%s0 + $0x10] sm:$0xff]
  %v21 = vld [vmem:[%s0 + $0x18] sm:$0xff]
  %v22 = vld [vmem:[%s0 + $0x20] sm:$0xff]
  %v23 = vld [vmem:[%s0 + $0x28] sm:$0xff]
  %v24 = vld [vmem:[%s0 + $0x30] sm:$0xff]
  %v25 = vld [vmem:[%s0 + $0x38] sm:$0xff]
  %v26 = vpack.c.bf16 %v19, %v18
  %v27 = vpack.c.bf16 %v21, %v20
  %v28 = vpack.c.bf16 %v23, %v22
  %v29 = vpack.c.bf16 %v25, %v24
  %v30 = vld [vmem:[%s1] sm:$0xf]
  %v31 = vld [vmem:[%s1 + $0x4] sm:$0xf]
  %v34 = vunpack.c.l.b16 %v30
  %v35 = vunpack.c.l.b16 %v31
  %v36 = vpack.c.b16 %v35, %v34
  %vm38 = vcmask 130048
  %v40 = vsel %vm38, %v26, 0
  %v43 = vsel %vm38, %v27, 0
  %v46 = vsel %vm38, %v28, 0
  %v49 = vsel %vm38, %v29, 0
  %51 = vmatprep.subr.bf16.mxu0 0
  %52 = vmatpush1.bf16.msra.mxu0 %v36
  %53 = vmatprep.subr.bf16.mxu0 0
  %54 = vmatpush1.bf16.msra.mxu0 0
  %55 = vmatprep.subr.bf16.mxu0 0
  %56 = vmatpush1.bf16.msra.mxu0 0
  %57 = vmatprep.subr.bf16.mxu0 0
  %58 = vmatpush1.bf16.msra.mxu0 0
  %59 = vmatprep.subr.bf16.mxu0 0
  %60 = vmatpush1.bf16.msra.mxu0 0
  %61 = vmatprep.subr.bf16.mxu0 0
  %62 = vmatpush1.bf16.msra.mxu0 0
  %63 = vmatprep.subr.bf16.mxu0 0
  %64 = vmatpush1.bf16.msra.mxu0 0
  %65 = vmatprep.subr.bf16.mxu0 0
  %66 = vmatpush1.bf16.msra.mxu0 0
  %67 = vmatprep.subr.bf16.mxu0 0
  %68 = vmatpush1.bf16.msra.mxu0 0
  %69 = vmatprep.subr.bf16.mxu0 0
  %70 = vmatpush1.bf16.msra.mxu0 0
  %71 = vmatprep.subr.bf16.mxu0 0
  %72 = vmatpush1.bf16.msra.mxu0 0
  %73 = vmatprep.subr.bf16.mxu0 0
  %74 = vmatpush1.bf16.msra.mxu0 0
  %75 = vmatprep.subr.bf16.mxu0 0
  %76 = vmatpush1.bf16.msra.mxu0 0
  %77 = vmatprep.subr.bf16.mxu0 0
  %78 = vmatpush1.bf16.msra.mxu0 0
  %79 = vmatprep.subr.bf16.mxu0 0
  %80 = vmatpush1.bf16.msra.mxu0 0
  %81 = vmatprep.subr.bf16.mxu0 0
  %82 = vmatpush1.bf16.msra.mxu0 0
  %83 = vmatprep.mubr.bf16.mxu0 0
  %84 = vmatmul.mubr.bf16.gmra.mrb[0].mxu0 %v40
  %v85 = vpop.f32.mrb[0].mxu0
  %v86 = vadd.f32 0.0, %v85
  %v87 = vpop.f32.mrb[0].mxu0
  %v88 = vpop.f32.mrb[0].mxu0
  %v89 = vadd.f32 0.0, %v88
  %v90 = vpop.f32.mrb[0].mxu0
  %91 = vmatprep.mubr.bf16.mxu0 0
  %92 = vmatmul.mubr.bf16.gmra.mrb[0].mxu0 %v43
  %v93 = vpop.f32.mrb[0].mxu0
  %v94 = vadd.f32 0.0, %v93
  %v95 = vpop.f32.mrb[0].mxu0
  %v96 = vpop.f32.mrb[0].mxu0
  %v97 = vadd.f32 0.0, %v96
  %v98 = vpop.f32.mrb[0].mxu0
  %99 = vmatprep.mubr.bf16.mxu0 0
  %100 = vmatmul.mubr.bf16.gmra.mrb[0].mxu0 %v46
  %v101 = vpop.f32.mrb[0].mxu0
  %v102 = vadd.f32 0.0, %v101
  %v103 = vpop.f32.mrb[0].mxu0
  %v104 = vpop.f32.mrb[0].mxu0
  %v105 = vadd.f32 0.0, %v104
  %v106 = vpop.f32.mrb[0].mxu0
  %107 = vmatprep.mubr.bf16.mxu0 0
  %108 = vmatmul.mubr.bf16.gmra.mrb[0].mxu0 %v49
  %v109 = vpop.f32.mrb[0].mxu0
  %v110 = vadd.f32 0.0, %v109
  %v111 = vpop.f32.mrb[0].mxu0
  %v112 = vpop.f32.mrb[0].mxu0
  %v113 = vadd.f32 0.0, %v112
  %v114 = vpop.f32.mrb[0].mxu0
  %115 = vdwg.mxu0
  %v116 = vpack.c.bf16 %v89, %v86
  %v117 = vpack.c.bf16 %v97, %v94
  %v118 = vpack.c.bf16 %v105, %v102
  %v119 = vpack.c.bf16 %v113, %v110
  %v120 = vld [vmem:[%s2] sm:$0xf]
  %v121 = vld [vmem:[%s2 + $0x4] sm:$0xf]
  %v122 = vld [vmem:[%s2 + $0x8] sm:$0xf]
  %v123 = vld [vmem:[%s2 + $0xc] sm:$0xf]
  %v124 = vld [vmem:[%s2 + $0x10] sm:$0xf]
  %v125 = vld [vmem:[%s2 + $0x14] sm:$0xf]
  %v126 = vld [vmem:[%s2 + $0x18] sm:$0xf]
  %v127 = vld [vmem:[%s2 + $0x1c] sm:$0xf]
  %v136 = vunpack.c.l.b16 %v120
  %v137 = vunpack.c.l.b16 %v121
  %v138 = vunpack.c.l.b16 %v122
  %v139 = vunpack.c.l.b16 %v123
  %v140 = vunpack.c.l.b16 %v124
  %v141 = vunpack.c.l.b16 %v125
  %v142 = vunpack.c.l.b16 %v126
  %v143 = vunpack.c.l.b16 %v127
  %v144 = vpack.c.b16 %v137, %v136
  %v145 = vpack.c.b16 %v139, %v138
  %v146 = vpack.c.b16 %v141, %v140
  %v147 = vpack.c.b16 %v143, %v142
  %vm152 = vcmask 523264
  %v154 = vsel %vm152, %v116, 0
  %v157 = vsel %vm152, %v117, 0
  %v160 = vsel %vm152, %v118, 0
  %v163 = vsel %vm152, %v119, 0
  %165 = vmatprep.subr.bf16.mxu0 0
  %166 = vmatpush1.bf16.msra.mxu0 %v144
  %167 = vmatprep.subr.bf16.mxu0 0
  %168 = vmatpush1.bf16.msra.mxu0 %v145
  %169 = vmatprep.subr.bf16.mxu0 0
  %170 = vmatpush1.bf16.msra.mxu0 %v146
  %171 = vmatprep.subr.bf16.mxu0 0
  %172 = vmatpush1.bf16.msra.mxu0 %v147
  %173 = vmatprep.subr.bf16.mxu0 0
  %174 = vmatpush1.bf16.msra.mxu0 0
  %175 = vmatprep.subr.bf16.mxu0 0
  %176 = vmatpush1.bf16.msra.mxu0 0
  %177 = vmatprep.subr.bf16.mxu0 0
  %178 = vmatpush1.bf16.msra.mxu0 0
  %179 = vmatprep.subr.bf16.mxu0 0
  %180 = vmatpush1.bf16.msra.mxu0 0
  %181 = vmatprep.subr.bf16.mxu0 0
  %182 = vmatpush1.bf16.msra.mxu0 0
  %183 = vmatprep.subr.bf16.mxu0 0
  %184 = vmatpush1.bf16.msra.mxu0 0
  %185 = vmatprep.subr.bf16.mxu0 0
  %186 = vmatpush1.bf16.msra.mxu0 0
  %187 = vmatprep.subr.bf16.mxu0 0
  %188 = vmatpush1.bf16.msra.mxu0 0
  %189 = vmatprep.subr.bf16.mxu0 0
  %190 = vmatpush1.bf16.msra.mxu0 0
  %191 = vmatprep.subr.bf16.mxu0 0
  %192 = vmatpush1.bf16.msra.mxu0 0
  %193 = vmatprep.subr.bf16.mxu0 0
  %194 = vmatpush1.bf16.msra.mxu0 0
  %195 = vmatprep.subr.bf16.mxu0 0
  %196 = vmatpush1.bf16.msra.mxu0 0
  %197 = vmatprep.mubr.bf16.mxu0 0
  %198 = vmatmul.mubr.bf16.gmra.mrb[0].mxu0 %v154
  %v199 = vpop.f32.mrb[0].mxu0
  %v200 = vadd.f32 0.0, %v199
  %v201 = vpop.f32.mrb[0].mxu0
  %v202 = vpop.f32.mrb[0].mxu0
  %v203 = vadd.f32 0.0, %v202
  %v204 = vpop.f32.mrb[0].mxu0
  %205 = vmatprep.mubr.bf16.mxu0 0
  %206 = vmatmul.mubr.bf16.gmra.mrb[0].mxu0 %v157
  %v207 = vpop.f32.mrb[0].mxu0
  %v208 = vadd.f32 0.0, %v207
  %v209 = vpop.f32.mrb[0].mxu0
  %v210 = vpop.f32.mrb[0].mxu0
  %v211 = vadd.f32 0.0, %v210
  %v212 = vpop.f32.mrb[0].mxu0
  %213 = vmatprep.mubr.bf16.mxu0 0
  %214 = vmatmul.mubr.bf16.gmra.mrb[0].mxu0 %v160
  %v215 = vpop.f32.mrb[0].mxu0
  %v216 = vadd.f32 0.0, %v215
  %v217 = vpop.f32.mrb[0].mxu0
  %v218 = vpop.f32.mrb[0].mxu0
  %v219 = vadd.f32 0.0, %v218
  %v220 = vpop.f32.mrb[0].mxu0
  %221 = vmatprep.mubr.bf16.mxu0 0
  %222 = vmatmul.mubr.bf16.gmra.mrb[0].mxu0 %v163
  %v223 = vpop.f32.mrb[0].mxu0
  %v224 = vadd.f32 0.0, %v223
  %v225 = vpop.f32.mrb[0].mxu0
  %v226 = vpop.f32.mrb[0].mxu0
  %v227 = vadd.f32 0.0, %v226
  %v228 = vpop.f32.mrb[0].mxu0
  %229 = vdwg.mxu0
  %v234 = vunpack.c.l.b16 %v116
  %v235 = vunpack.c.h.b16 %v116
  %v236 = vunpack.c.l.b16 %v117
  %v237 = vunpack.c.h.b16 %v117
  %v238 = vunpack.c.l.b16 %v118
  %v239 = vunpack.c.h.b16 %v118
  %v240 = vunpack.c.l.b16 %v119
  %v241 = vunpack.c.h.b16 %v119
  %v242 = vpack.c.b16 %v234, %v234
  %v243 = vpack.c.b16 %v235, %v235
  %v244 = vpack.c.b16 %v236, %v236
  %v245 = vpack.c.b16 %v237, %v237
  %v246 = vpack.c.b16 %v238, %v238
  %v247 = vpack.c.b16 %v239, %v239
  %v248 = vpack.c.b16 %v240, %v240
  %v249 = vpack.c.b16 %v241, %v241
  %vm258 = vcmask 519168
  %259 = vst.msk [vmem:[%s3] sm:$0xf] %vm258, %v242
  %260 = vst.msk [vmem:[%s3 + $0x4] sm:$0xf] %vm258, %v243
  %261 = vst.msk [vmem:[%s3 + $0x8] sm:$0xf] %vm258, %v244
  %262 = vst.msk [vmem:[%s3 + $0xc] sm:$0xf] %vm258, %v245
  %263 = vst.msk [vmem:[%s3 + $0x10] sm:$0xf] %vm258, %v246
  %264 = vst.msk [vmem:[%s3 + $0x14] sm:$0xf] %vm258, %v247
  %265 = vst.msk [vmem:[%s3 + $0x18] sm:$0xf] %vm258, %v248
  %266 = vst.msk [vmem:[%s3 + $0x1c] sm:$0xf] %vm258, %v249
  %vm267 = vcmask 64512
  %268 = vst.msk [vmem:[%s4] sm:$0xff] %vm267, %v200
  %269 = vst.msk [vmem:[%s4 + $0x8] sm:$0xff] %vm267, %v203
  %270 = vst.msk [vmem:[%s4 + $0x10] sm:$0xff] %vm267, %v208
  %271 = vst.msk [vmem:[%s4 + $0x18] sm:$0xff] %vm267, %v211
  %272 = vst.msk [vmem:[%s4 + $0x20] sm:$0xff] %vm267, %v216
  %273 = vst.msk [vmem:[%s4 + $0x28] sm:$0xff] %vm267, %v219
  %274 = vst.msk [vmem:[%s4 + $0x30] sm:$0xff] %vm267, %v224
  %275 = vst.msk [vmem:[%s4 + $0x38] sm:$0xff] %vm267, %v227
  %284 = vrot.lane.b32.xlu0 %v200, 120
  %v285 = vpop.permute.xlu0 %284
  %286 = vrot.lane.b32.xlu0 %v203, 120
  %v287 = vpop.permute.xlu0 %286
  %288 = vrot.lane.b32.xlu0 %v208, 120
  %v289 = vpop.permute.xlu0 %288
  %290 = vrot.lane.b32.xlu0 %v211, 120
  %v291 = vpop.permute.xlu0 %290
  %292 = vrot.lane.b32.xlu0 %v216, 120
  %v293 = vpop.permute.xlu0 %292
  %294 = vrot.lane.b32.xlu0 %v219, 120
  %v295 = vpop.permute.xlu0 %294
  %296 = vrot.lane.b32.xlu0 %v224, 120
  %v297 = vpop.permute.xlu0 %296
  %298 = vrot.lane.b32.xlu0 %v227, 120
  %v299 = vpop.permute.xlu0 %298
  %308 = vst.msk [vmem:[%s5] sm:$0xff] %vm267, %v285
  %309 = vst.msk [vmem:[%s5 + $0x8] sm:$0xff] %vm267, %v287
  %310 = vst.msk [vmem:[%s5 + $0x10] sm:$0xff] %vm267, %v289
  %311 = vst.msk [vmem:[%s5 + $0x18] sm:$0xff] %vm267, %v291
  %312 = vst.msk [vmem:[%s5 + $0x20] sm:$0xff] %vm267, %v293
  %313 = vst.msk [vmem:[%s5 + $0x28] sm:$0xff] %vm267, %v295
  %314 = vst.msk [vmem:[%s5 + $0x30] sm:$0xff] %vm267, %v297
  %315 = vst.msk [vmem:[%s5 + $0x38] sm:$0xff] %vm267, %v299
  // Predicated region
  $region14: #{_lambda_.4} parent=0 // pred_check
    _
  $region15: #{_lambda_.4} parent=0 // pred_check_branch
    %317 = sbr.rel (0) target = $region17
  $region16: #{_lambda_.4} parent=0 // pred_region
    _
  $region17: #{_lambda_.4} parent=0 // pred_fallthru
    _
  // Predicated region
  $region18: #{_lambda_.4} parent=0 // pred_check
    _
  $region19: #{_lambda_.4} parent=0 // pred_check_branch
    %319 = sbr.rel (0) target = $region21
  $region20: #{_lambda_.4} parent=0 // pred_region
    _
  $region21: #{_lambda_.4} parent=0 // pred_fallthru
    _
  // Predicated region
  $region22: #{_lambda_.4} parent=0 // pred_check
    _
  $region23: #{_lambda_.4} parent=0 // pred_check_branch
    %321 = sbr.rel (0) target = $region25
  $region24: #{_lambda_.4} parent=0 // pred_region
    _
  $region25: #{_lambda_.4} parent=0 // pred_fallthru
    _
  // Predicated region
  $region26: #{_lambda_.4} parent=0 // pred_check
    _
  $region27: #{_lambda_.4} parent=0 // pred_check_branch
    %323 = sbr.rel (0) target = $region29
  $region28: #{_lambda_.4} parent=0 // pred_region
    _
  $region29: #{_lambda_.4} parent=0 // pred_fallthru
    _
  // Predicated region
  $region30: #{_lambda_.4} parent=0 // pred_check
    _
  $region31: #{_lambda_.4} parent=0 // pred_check_branch
    %325 = sbr.rel (0) target = $region33
  $region32: #{_lambda_.4} parent=0 // pred_region
    _
  $region33: #{_lambda_.4} parent=0 // pred_fallthru
    _
  // Predicated region
  $region34: #{_lambda_.4} parent=0 // pred_check
    _
  $region35: #{_lambda_.4} parent=0 // pred_check_branch
    %327 = sbr.rel (0) target = $region37
  $region36: #{_lambda_.4} parent=0 // pred_region
    _
  $region37: #{_lambda_.4} parent=0 // pred_fallthru
    _

// kernel: _lambda_.6
$region0: #{_lambda_.6}
  #allocation0 [shape = 'u32[]', space=smem, size = 0x4, offset = 0x4, fixed_abs, tag = 'smem constant byte address 0x4 - core index']
  #allocation1 [shape = 'u32[144,128]{1,0:T(1,128)}', space=vmem, size = 0x12000, scoped, tag = 'internal scratch']
  %s0 = inlined_call_operand.vmem [shape: bf16[64,128], index: 0, kind: input, shape index: {}]
  %s1 = inlined_call_operand.vmem [shape: bf16[128,4], index: 1, kind: input, shape index: {}]
  %s2 = inlined_call_operand.vmem [shape: bf16[4,2], index: 2, kind: input, shape index: {}]
  %s3 = inlined_call_operand.vmem [shape: bf16[64,4], index: 3, kind: output, shape index: {0}]
  %s4 = inlined_call_operand.vmem [shape: f32[64,1], index: 4, kind: output, shape index: {1}]
  %s5 = inlined_call_operand.vmem [shape: f32[64,1], index: 5, kind: output, shape index: {2}]
  %6 = xla_tuple %s3, %s4, %s5
  %s7 = sld [smem:[#allocation0]]
  $region38: #{_lambda_.6} parent=0
    _
  %s9 = ssub.s32 1, %s7
  %s10 = scalar_select 0, %s9, %s7
  // Predicated region
  $region2: #{_lambda_.6} parent=0 // pred_check
    _
  $region3: #{_lambda_.6} parent=0 // pred_check_branch
    %12 = sbr.rel (0) target = $region5
  $region4: #{_lambda_.6} parent=0 // pred_region
    _
  $region5: #{_lambda_.6} parent=0 // pred_fallthru
    _
  // Predicated region
  $region6: #{_lambda_.6} parent=0 // pred_check
    _
  $region7: #{_lambda_.6} parent=0 // pred_check_branch
    %14 = sbr.rel (0) target = $region9
  $region8: #{_lambda_.6} parent=0 // pred_region
    _
  $region9: #{_lambda_.6} parent=0 // pred_fallthru
    _
  // Predicated region
  $region10: #{_lambda_.6} parent=0 // pred_check
    _
  $region11: #{_lambda_.6} parent=0 // pred_check_branch
    %16 = sbr.rel (0) target = $region13
  $region12: #{_lambda_.6} parent=0 // pred_region
    _
  $region13: #{_lambda_.6} parent=0 // pred_fallthru
    _
  %v18 = vld [vmem:[%s0] sm:$0xf]
  %v19 = vld [vmem:[%s0 + $0x4] sm:$0xf]
  %v20 = vld [vmem:[%s0 + $0x8] sm:$0xf]
  %v21 = vld [vmem:[%s0 + $0xc] sm:$0xf]
  %v22 = vld [vmem:[%s0 + $0x10] sm:$0xf]
  %v23 = vld [vmem:[%s0 + $0x14] sm:$0xf]
  %v24 = vld [vmem:[%s0 + $0x18] sm:$0xf]
  %v25 = vld [vmem:[%s0 + $0x1c] sm:$0xf]
  %v26 = vld [vmem:[%s1] sm:$0xf]
  %v27 = vld [vmem:[%s1 + $0x4] sm:$0xf]
  %v28 = vld [vmem:[%s1 + $0x8] sm:$0xf]
  %v29 = vld [vmem:[%s1 + $0xc] sm:$0xf]
  %v30 = vld [vmem:[%s1 + $0x10] sm:$0xf]
  %v31 = vld [vmem:[%s1 + $0x14] sm:$0xf]
  %v32 = vld [vmem:[%s1 + $0x18] sm:$0xf]
  %v33 = vld [vmem:[%s1 + $0x1c] sm:$0xf]
  %v34 = vld [vmem:[%s1 + $0x20] sm:$0xf]
  %v35 = vld [vmem:[%s1 + $0x24] sm:$0xf]
  %v36 = vld [vmem:[%s1 + $0x28] sm:$0xf]
  %v37 = vld [vmem:[%s1 + $0x2c] sm:$0xf]
  %v38 = vld [vmem:[%s1 + $0x30] sm:$0xf]
  %v39 = vld [vmem:[%s1 + $0x34] sm:$0xf]
  %v40 = vld [vmem:[%s1 + $0x38] sm:$0xf]
  %v41 = vld [vmem:[%s1 + $0x3c] sm:$0xf]
  %v50 = vunpack.c.l.b16 %v18
  %v51 = vunpack.c.l.b16 %v19
  %v52 = vunpack.c.l.b16 %v20
  %v53 = vunpack.c.l.b16 %v21
  %v54 = vunpack.c.l.b16 %v22
  %v55 = vunpack.c.l.b16 %v23
  %v56 = vunpack.c.l.b16 %v24
  %v57 = vunpack.c.l.b16 %v25
  %v58 = vpack.c.b16 %v51, %v50
  %v59 = vpack.c.b16 %v53, %v52
  %v60 = vpack.c.b16 %v55, %v54
  %v61 = vpack.c.b16 %v57, %v56
  %v82 = vunpack.c.l.b16 %v26
  %v83 = vunpack.c.l.b16 %v27
  %v84 = vunpack.c.l.b16 %v28
  %v85 = vunpack.c.l.b16 %v29
  %v86 = vunpack.c.l.b16 %v30
  %v87 = vunpack.c.l.b16 %v31
  %v88 = vunpack.c.l.b16 %v32
  %v89 = vunpack.c.l.b16 %v33
  %v90 = vunpack.c.l.b16 %v34
  %v91 = vunpack.c.l.b16 %v35
  %v92 = vunpack.c.l.b16 %v36
  %v93 = vunpack.c.l.b16 %v37
  %v94 = vunpack.c.l.b16 %v38
  %v95 = vunpack.c.l.b16 %v39
  %v96 = vunpack.c.l.b16 %v40
  %v97 = vunpack.c.l.b16 %v41
  %v98 = vpack.c.b16 %v83, %v82
  %v99 = vpack.c.b16 %v85, %v84
  %v100 = vpack.c.b16 %v87, %v86
  %v101 = vpack.c.b16 %v89, %v88
  %v102 = vpack.c.b16 %v91, %v90
  %v103 = vpack.c.b16 %v93, %v92
  %v104 = vpack.c.b16 %v95, %v94
  %v105 = vpack.c.b16 %v97, %v96
  %114 = vmatprep.subr.bf16.mxu0 0
  %115 = vmatpush1.bf16.msra.mxu0 %v98
  %116 = vmatprep.subr.bf16.mxu0 0
  %117 = vmatpush1.bf16.msra.mxu0 %v99
  %118 = vmatprep.subr.bf16.mxu0 0
  %119 = vmatpush1.bf16.msra.mxu0 %v100
  %120 = vmatprep.subr.bf16.mxu0 0
  %121 = vmatpush1.bf16.msra.mxu0 %v101
  %122 = vmatprep.subr.bf16.mxu0 0
  %123 = vmatpush1.bf16.msra.mxu0 %v102
  %124 = vmatprep.subr.bf16.mxu0 0
  %125 = vmatpush1.bf16.msra.mxu0 %v103
  %126 = vmatprep.subr.bf16.mxu0 0
  %127 = vmatpush1.bf16.msra.mxu0 %v104
  %128 = vmatprep.subr.bf16.mxu0 0
  %129 = vmatpush1.bf16.msra.mxu0 %v105
  %130 = vmatprep.subr.bf16.mxu0 0
  %131 = vmatpush1.bf16.msra.mxu0 0
  %132 = vmatprep.subr.bf16.mxu0 0
  %133 = vmatpush1.bf16.msra.mxu0 0
  %134 = vmatprep.subr.bf16.mxu0 0
  %135 = vmatpush1.bf16.msra.mxu0 0
  %136 = vmatprep.subr.bf16.mxu0 0
  %137 = vmatpush1.bf16.msra.mxu0 0
  %138 = vmatprep.subr.bf16.mxu0 0
  %139 = vmatpush1.bf16.msra.mxu0 0
  %140 = vmatprep.subr.bf16.mxu0 0
  %141 = vmatpush1.bf16.msra.mxu0 0
  %142 = vmatprep.subr.bf16.mxu0 0
  %143 = vmatpush1.bf16.msra.mxu0 0
  %144 = vmatprep.subr.bf16.mxu0 0
  %145 = vmatpush1.bf16.msra.mxu0 0
  %146 = vmatprep.mubr.bf16.mxu0 0
  %147 = vmatmul.mubr.bf16.gmra.mrb[0].mxu0 %v58
  %v148 = vpop.f32.mrb[0].mxu0
  %v149 = vadd.f32 0.0, %v148
  %v150 = vpop.f32.mrb[0].mxu0
  %v151 = vpop.f32.mrb[0].mxu0
  %v152 = vadd.f32 0.0, %v151
  %v153 = vpop.f32.mrb[0].mxu0
  %154 = vmatprep.mubr.bf16.mxu0 0
  %155 = vmatmul.mubr.bf16.gmra.mrb[0].mxu0 %v59
  %v156 = vpop.f32.mrb[0].mxu0
  %v157 = vadd.f32 0.0, %v156
  %v158 = vpop.f32.mrb[0].mxu0
  %v159 = vpop.f32.mrb[0].mxu0
  %v160 = vadd.f32 0.0, %v159
  %v161 = vpop.f32.mrb[0].mxu0
  %162 = vmatprep.mubr.bf16.mxu0 0
  %163 = vmatmul.mubr.bf16.gmra.mrb[0].mxu0 %v60
  %v164 = vpop.f32.mrb[0].mxu0
  %v165 = vadd.f32 0.0, %v164
  %v166 = vpop.f32.mrb[0].mxu0
  %v167 = vpop.f32.mrb[0].mxu0
  %v168 = vadd.f32 0.0, %v167
  %v169 = vpop.f32.mrb[0].mxu0
  %170 = vmatprep.mubr.bf16.mxu0 0
  %171 = vmatmul.mubr.bf16.gmra.mrb[0].mxu0 %v61
  %v172 = vpop.f32.mrb[0].mxu0
  %v173 = vadd.f32 0.0, %v172
  %v174 = vpop.f32.mrb[0].mxu0
  %v175 = vpop.f32.mrb[0].mxu0
  %v176 = vadd.f32 0.0, %v175
  %v177 = vpop.f32.mrb[0].mxu0
  %178 = vdwg.mxu0
  %v179 = vpack.c.bf16 %v152, %v149
  %v180 = vpack.c.bf16 %v160, %v157
  %v181 = vpack.c.bf16 %v168, %v165
  %v182 = vpack.c.bf16 %v176, %v173
  %v183 = vld [vmem:[%s2] sm:$0x3]
  %vm184 = vcmask 31744
  %v186 = vsel %vm184, %v179, 0
  %v189 = vsel %vm184, %v180, 0
  %v192 = vsel %vm184, %v181, 0
  %v195 = vsel %vm184, %v182, 0
  %vm197 = vcmask 1041408
  %v199 = vsel %vm197, %v183, 0
  %201 = vmatprep.subr.bf16.mxu0 0
  %202 = vmatpush1.bf16.msra.mxu0 %v199
  %203 = vmatprep.subr.bf16.mxu0 0
  %204 = vmatpush1.bf16.msra.mxu0 0
  %205 = vmatprep.subr.bf16.mxu0 0
  %206 = vmatpush1.bf16.msra.mxu0 0
  %207 = vmatprep.subr.bf16.mxu0 0
  %208 = vmatpush1.bf16.msra.mxu0 0
  %209 = vmatprep.subr.bf16.mxu0 0
  %210 = vmatpush1.bf16.msra.mxu0 0
  %211 = vmatprep.subr.bf16.mxu0 0
  %212 = vmatpush1.bf16.msra.mxu0 0
  %213 = vmatprep.subr.bf16.mxu0 0
  %214 = vmatpush1.bf16.msra.mxu0 0
  %215 = vmatprep.subr.bf16.mxu0 0
  %216 = vmatpush1.bf16.msra.mxu0 0
  %217 = vmatprep.subr.bf16.mxu0 0
  %218 = vmatpush1.bf16.msra.mxu0 0
  %219 = vmatprep.subr.bf16.mxu0 0
  %220 = vmatpush1.bf16.msra.mxu0 0
  %221 = vmatprep.subr.bf16.mxu0 0
  %222 = vmatpush1.bf16.msra.mxu0 0
  %223 = vmatprep.subr.bf16.mxu0 0
  %224 = vmatpush1.bf16.msra.mxu0 0
  %225 = vmatprep.subr.bf16.mxu0 0
  %226 = vmatpush1.bf16.msra.mxu0 0
  %227 = vmatprep.subr.bf16.mxu0 0
  %228 = vmatpush1.bf16.msra.mxu0 0
  %229 = vmatprep.subr.bf16.mxu0 0
  %230 = vmatpush1.bf16.msra.mxu0 0
  %231 = vmatprep.subr.bf16.mxu0 0
  %232 = vmatpush1.bf16.msra.mxu0 0
  %233 = vmatprep.mubr.bf16.mxu0 0
  %234 = vmatmul.mubr.bf16.gmra.mrb[0].mxu0 %v186
  %v235 = vpop.f32.mrb[0].mxu0
  %v236 = vadd.f32 0.0, %v235
  %v237 = vpop.f32.mrb[0].mxu0
  %v238 = vpop.f32.mrb[0].mxu0
  %v239 = vadd.f32 0.0, %v238
  %v240 = vpop.f32.mrb[0].mxu0
  %241 = vmatprep.mubr.bf16.mxu0 0
  %242 = vmatmul.mubr.bf16.gmra.mrb[0].mxu0 %v189
  %v243 = vpop.f32.mrb[0].mxu0
  %v244 = vadd.f32 0.0, %v243
  %v245 = vpop.f32.mrb[0].mxu0
  %v246 = vpop.f32.mrb[0].mxu0
  %v247 = vadd.f32 0.0, %v246
  %v248 = vpop.f32.mrb[0].mxu0
  %249 = vmatprep.mubr.bf16.mxu0 0
  %250 = vmatmul.mubr.bf16.gmra.mrb[0].mxu0 %v192
  %v251 = vpop.f32.mrb[0].mxu0
  %v252 = vadd.f32 0.0, %v251
  %v253 = vpop.f32.mrb[0].mxu0
  %v254 = vpop.f32.mrb[0].mxu0
  %v255 = vadd.f32 0.0, %v254
  %v256 = vpop.f32.mrb[0].mxu0
  %257 = vmatprep.mubr.bf16.mxu0 0
  %258 = vmatmul.mubr.bf16.gmra.mrb[0].mxu0 %v195
  %v259 = vpop.f32.mrb[0].mxu0
  %v260 = vadd.f32 0.0, %v259
  %v261 = vpop.f32.mrb[0].mxu0
  %v262 = vpop.f32.mrb[0].mxu0
  %v263 = vadd.f32 0.0, %v262
  %v264 = vpop.f32.mrb[0].mxu0
  %265 = vdwg.mxu0
  %v270 = vunpack.c.l.b16 %v179
  %v271 = vunpack.c.h.b16 %v179
  %v272 = vunpack.c.l.b16 %v180
  %v273 = vunpack.c.h.b16 %v180
  %v274 = vunpack.c.l.b16 %v181
  %v275 = vunpack.c.h.b16 %v181
  %v276 = vunpack.c.l.b16 %v182
  %v277 = vunpack.c.h.b16 %v182
  %v278 = vpack.c.b16 %v270, %v270
  %v279 = vpack.c.b16 %v271, %v271
  %v280 = vpack.c.b16 %v272, %v272
  %v281 = vpack.c.b16 %v273, %v273
  %v282 = vpack.c.b16 %v274, %v274
  %v283 = vpack.c.b16 %v275, %v275
  %v284 = vpack.c.b16 %v276, %v276
  %v285 = vpack.c.b16 %v277, %v277
  %vm294 = vcmask 27648
  %295 = vst.msk [vmem:[%s3] sm:$0xf] %vm294, %v278
  %296 = vst.msk [vmem:[%s3 + $0x4] sm:$0xf] %vm294, %v279
  %297 = vst.msk [vmem:[%s3 + $0x8] sm:$0xf] %vm294, %v280
  %298 = vst.msk [vmem:[%s3 + $0xc] sm:$0xf] %vm294, %v281
  %299 = vst.msk [vmem:[%s3 + $0x10] sm:$0xf] %vm294, %v282
  %300 = vst.msk [vmem:[%s3 + $0x14] sm:$0xf] %vm294, %v283
  %301 = vst.msk [vmem:[%s3 + $0x18] sm:$0xf] %vm294, %v284
  %302 = vst.msk [vmem:[%s3 + $0x1c] sm:$0xf] %vm294, %v285
  %vm303 = vcmask 7168
  %304 = vst.msk [vmem:[%s4] sm:$0xff] %vm303, %v236
  %305 = vst.msk [vmem:[%s4 + $0x8] sm:$0xff] %vm303, %v239
  %306 = vst.msk [vmem:[%s4 + $0x10] sm:$0xff] %vm303, %v244
  %307 = vst.msk [vmem:[%s4 + $0x18] sm:$0xff] %vm303, %v247
  %308 = vst.msk [vmem:[%s4 + $0x20] sm:$0xff] %vm303, %v252
  %309 = vst.msk [vmem:[%s4 + $0x28] sm:$0xff] %vm303, %v255
  %310 = vst.msk [vmem:[%s4 + $0x30] sm:$0xff] %vm303, %v260
  %311 = vst.msk [vmem:[%s4 + $0x38] sm:$0xff] %vm303, %v263
  %320 = vrot.lane.b32.xlu0 %v236, 127
  %v321 = vpop.permute.xlu0 %320
  %322 = vrot.lane.b32.xlu0 %v239, 127
  %v323 = vpop.permute.xlu0 %322
  %324 = vrot.lane.b32.xlu0 %v244, 127
  %v325 = vpop.permute.xlu0 %324
  %326 = vrot.lane.b32.xlu0 %v247, 127
  %v327 = vpop.permute.xlu0 %326
  %328 = vrot.lane.b32.xlu0 %v252, 127
  %v329 = vpop.permute.xlu0 %328
  %330 = vrot.lane.b32.xlu0 %v255, 127
  %v331 = vpop.permute.xlu0 %330
  %332 = vrot.lane.b32.xlu0 %v260, 127
  %v333 = vpop.permute.xlu0 %332
  %334 = vrot.lane.b32.xlu0 %v263, 127
  %v335 = vpop.permute.xlu0 %334
  %344 = vst.msk [vmem:[%s5] sm:$0xff] %vm303, %v321
  %345 = vst.msk [vmem:[%s5 + $0x8] sm:$0xff] %vm303, %v323
  %346 = vst.msk [vmem:[%s5 + $0x10] sm:$0xff] %vm303, %v325
  %347 = vst.msk [vmem:[%s5 + $0x18] sm:$0xff] %vm303, %v327
  %348 = vst.msk [vmem:[%s5 + $0x20] sm:$0xff] %vm303, %v329
  %349 = vst.msk [vmem:[%s5 + $0x28] sm:$0xff] %vm303, %v331
  %350 = vst.msk [vmem:[%s5 + $0x30] sm:$0xff] %vm303, %v333
  %351 = vst.msk [vmem:[%s5 + $0x38] sm:$0xff] %vm303, %v335
  // Predicated region
  $region14: #{_lambda_.6} parent=0 // pred_check
    _
  $region15: #{_lambda_.6} parent=0 // pred_check_branch
    %353 = sbr.rel (0) target = $region17
  $region16: #{_lambda_.6} parent=0 // pred_region
    _
  $region17: #{_lambda_.6} parent=0 // pred_fallthru
    _
  // Predicated region
  $region18: #{_lambda_.6} parent=0 // pred_check
    _
  $region19: #{_lambda_.6} parent=0 // pred_check_branch
    %355 = sbr.rel (0) target = $region21
  $region20: #{_lambda_.6} parent=0 // pred_region
    _
  $region21: #{_lambda_.6} parent=0 // pred_fallthru
    _
  // Predicated region
  $region22: #{_lambda_.6} parent=0 // pred_check
    _
  $region23: #{_lambda_.6} parent=0 // pred_check_branch
    %357 = sbr.rel (0) target = $region25
  $region24: #{_lambda_.6} parent=0 // pred_region
    _
  $region25: #{_lambda_.6} parent=0 // pred_fallthru
    _
  // Predicated region
  $region26: #{_lambda_.6} parent=0 // pred_check
    _
  $region27: #{_lambda_.6} parent=0 // pred_check_branch
    %359 = sbr.rel (0) target = $region29
  $region28: #{_lambda_.6} parent=0 // pred_region
    _
  $region29: #{_lambda_.6} parent=0 // pred_fallthru
    _
  // Predicated region
  $region30: #{_lambda_.6} parent=0 // pred_check
    _
  $region31: #{_lambda_.6} parent=0 // pred_check_branch
    %361 = sbr.rel (0) target = $region33
  $region32: #{_lambda_.6} parent=0 // pred_region
    _
  $region33: #{_lambda_.6} parent=0 // pred_fallthru
    _
  // Predicated region
  $region34: #{_lambda_.6} parent=0 // pred_check
    _
  $region35: #{_lambda_.6} parent=0 // pred_check_branch
    %363 = sbr.rel (0) target = $region37
  $region36: #{_lambda_.6} parent=0 // pred_region
    _
  $region37: #{_lambda_.6} parent=0 // pred_fallthru
    _

// kernel: _lambda_.7
$region0: #{_lambda_.7}
  #allocation0 [shape = 'u32[]', space=smem, size = 0x4, offset = 0x4, fixed_abs, tag = 'smem constant byte address 0x4 - core index']
  #allocation1 [shape = 'u32[144,128]{1,0:T(1,128)}', space=vmem, size = 0x12000, scoped, tag = 'internal scratch']
  #allocation2 [shape = 'f32[64,1]{1,0:T(8,128)}', space=vmem, size = 0x8000, scoped, tag = 'scratch operand']
  #allocation3 [shape = 'f32[64,1]{1,0:T(8,128)}', space=vmem, size = 0x8000, scoped, tag = 'scratch operand']
  #allocation4 [shape = 'f32[64,4]{1,0:T(8,128)}', space=vmem, size = 0x8000, scoped, tag = 'scratch operand']
  %s0 = inlined_call_operand.vmem [shape: bf16[64,4], index: 0, kind: input, shape index: {}]
  %s1 = inlined_call_operand.vmem [shape: f32[64,1], index: 1, kind: input, shape index: {}]
  %s2 = inlined_call_operand.vmem [shape: f32[64,1], index: 2, kind: input, shape index: {}]
  %s3 = inlined_call_operand.vmem [shape: s8[64,64], index: 3, kind: input, shape index: {}]
  %s4 = inlined_call_operand.vmem [shape: f32[1,4], index: 4, kind: input, shape index: {}]
  %s5 = inlined_call_operand.vmem [shape: f32[64,128], index: 5, kind: output, shape index: {}]
  %s6 = sld [smem:[#allocation0]]
  $region38: #{_lambda_.7} parent=0
    _
  %s8 = ssub.s32 1, %s6
  %s9 = scalar_select 0, %s8, %s6
  // Predicated region
  $region2: #{_lambda_.7} parent=0 // pred_check
    _
  $region3: #{_lambda_.7} parent=0 // pred_check_branch
    %11 = sbr.rel (0) target = $region5
  $region4: #{_lambda_.7} parent=0 // pred_region
    _
  $region5: #{_lambda_.7} parent=0 // pred_fallthru
    _
  // Predicated region
  $region6: #{_lambda_.7} parent=0 // pred_check
    _
  $region7: #{_lambda_.7} parent=0 // pred_check_branch
    %13 = sbr.rel (0) target = $region9
  $region8: #{_lambda_.7} parent=0 // pred_region
    _
  $region9: #{_lambda_.7} parent=0 // pred_fallthru
    _
  // Predicated region
  $region10: #{_lambda_.7} parent=0 // pred_check
    _
  $region11: #{_lambda_.7} parent=0 // pred_check_branch
    %15 = sbr.rel (0) target = $region13
  $region12: #{_lambda_.7} parent=0 // pred_region
    _
  $region13: #{_lambda_.7} parent=0 // pred_fallthru
    _
  // Predicated region
  $region14: #{_lambda_.7} parent=0 // pred_check
    _
  $region15: #{_lambda_.7} parent=0 // pred_check_branch
    %17 = sbr.rel (0) target = $region17
  $region16: #{_lambda_.7} parent=0 // pred_region
    _
  $region17: #{_lambda_.7} parent=0 // pred_fallthru
    _
  // Predicated region
  $region18: #{_lambda_.7} parent=0 // pred_check
    _
  $region19: #{_lambda_.7} parent=0 // pred_check_branch
    %19 = sbr.rel (0) target = $region21
  $region20: #{_lambda_.7} parent=0 // pred_region
    _
  $region21: #{_lambda_.7} parent=0 // pred_fallthru
    _
  %p21 = scmp.eq.s32.totalorder 0, 0
  // Predicated region
  $region22: #{_lambda_.7} parent=0 // pred_check
    %p22 = pneg %p21
  $region23: #{_lambda_.7} parent=0 // pred_check_branch
    %24 = sbr.rel (%p22) target = $region25
  $region24: #{_lambda_.7} parent=0 // pred_region
    %vm25 = vcmask 7168
    %26 = vst.msk [vmem:[#allocation2] sm:$0xff] %vm25, -1e+20
    %27 = vst.msk [vmem:[#allocation2 + $0x8] sm:$0xff] %vm25, -1e+20
    %28 = vst.msk [vmem:[#allocation2 + $0x10] sm:$0xff] %vm25, -1e+20
    %29 = vst.msk [vmem:[#allocation2 + $0x18] sm:$0xff] %vm25, -1e+20
    %30 = vst.msk [vmem:[#allocation2 + $0x20] sm:$0xff] %vm25, -1e+20
    %31 = vst.msk [vmem:[#allocation2 + $0x28] sm:$0xff] %vm25, -1e+20
    %32 = vst.msk [vmem:[#allocation2 + $0x30] sm:$0xff] %vm25, -1e+20
    %33 = vst.msk [vmem:[#allocation2 + $0x38] sm:$0xff] %vm25, -1e+20
    %34 = vst.msk [vmem:[#allocation3] sm:$0xff] %vm25, 0.0
    %35 = vst.msk [vmem:[#allocation3 + $0x8] sm:$0xff] %vm25, 0.0
    %36 = vst.msk [vmem:[#allocation3 + $0x10] sm:$0xff] %vm25, 0.0
    %37 = vst.msk [vmem:[#allocation3 + $0x18] sm:$0xff] %vm25, 0.0
    %38 = vst.msk [vmem:[#allocation3 + $0x20] sm:$0xff] %vm25, 0.0
    %39 = vst.msk [vmem:[#allocation3 + $0x28] sm:$0xff] %vm25, 0.0
    %40 = vst.msk [vmem:[#allocation3 + $0x30] sm:$0xff] %vm25, 0.0
    %41 = vst.msk [vmem:[#allocation3 + $0x38] sm:$0xff] %vm25, 0.0
    %vm42 = vcmask 31744
    %43 = vst.msk [vmem:[#allocation4] sm:$0xff] %vm42, 0.0
    %44 = vst.msk [vmem:[#allocation4 + $0x8] sm:$0xff] %vm42, 0.0
    %45 = vst.msk [vmem:[#allocation4 + $0x10] sm:$0xff] %vm42, 0.0
    %46 = vst.msk [vmem:[#allocation4 + $0x18] sm:$0xff] %vm42, 0.0
    %47 = vst.msk [vmem:[#allocation4 + $0x20] sm:$0xff] %vm42, 0.0
    %48 = vst.msk [vmem:[#allocation4 + $0x28] sm:$0xff] %vm42, 0.0
    %49 = vst.msk [vmem:[#allocation4 + $0x30] sm:$0xff] %vm42, 0.0
    %50 = vst.msk [vmem:[#allocation4 + $0x38] sm:$0xff] %vm42, 0.0
  $region25: #{_lambda_.7} parent=0 // pred_fallthru
    _
  %v51 = vld [vmem:[%s3] sm:$0xff]
  %v52 = vld [vmem:[%s3 + $0x8] sm:$0xff]
  %v53 = vunpack.c.0.s8 %v51
  %v54 = vunpack.c.1.s8 %v51
  %v55 = vunpack.c.2.s8 %v51
  %v56 = vunpack.c.3.s8 %v51
  %v57 = vunpack.c.0.s8 %v52
  %v58 = vunpack.c.1.s8 %v52
  %v59 = vunpack.c.2.s8 %v52
  %v60 = vunpack.c.3.s8 %v52
  %v61 = vcvt.s32.f32 %v53
  %v62 = vcvt.s32.f32 %v54
  %v63 = vcvt.s32.f32 %v55
  %v64 = vcvt.s32.f32 %v56
  %v65 = vcvt.s32.f32 %v57
  %v66 = vcvt.s32.f32 %v58
  %v67 = vcvt.s32.f32 %v59
  %v68 = vcvt.s32.f32 %v60
  %vm69 = vcmp.gt.f32.partialorder %v61, 0.0
  %vm70 = vcmp.gt.f32.partialorder %v62, 0.0
  %vm71 = vcmp.gt.f32.partialorder %v63, 0.0
  %vm72 = vcmp.gt.f32.partialorder %v64, 0.0
  %vm73 = vcmp.gt.f32.partialorder %v65, 0.0
  %vm74 = vcmp.gt.f32.partialorder %v66, 0.0
  %vm75 = vcmp.gt.f32.partialorder %v67, 0.0
  %vm76 = vcmp.gt.f32.partialorder %v68, 0.0
  %v77 = vld [vmem:[%s2] sm:$0xff]
  %v78 = vld [vmem:[%s2 + $0x8] sm:$0xff]
  %v79 = vld [vmem:[%s2 + $0x10] sm:$0xff]
  %v80 = vld [vmem:[%s2 + $0x18] sm:$0xff]
  %v81 = vld [vmem:[%s2 + $0x20] sm:$0xff]
  %v82 = vld [vmem:[%s2 + $0x28] sm:$0xff]
  %v83 = vld [vmem:[%s2 + $0x30] sm:$0xff]
  %v84 = vld [vmem:[%s2 + $0x38] sm:$0xff]
  %v85 = vld [vmem:[%s1] sm:$0xff]
  %v86 = vld [vmem:[%s1 + $0x8] sm:$0xff]
  %v87 = vld [vmem:[%s1 + $0x10] sm:$0xff]
  %v88 = vld [vmem:[%s1 + $0x18] sm:$0xff]
  %v89 = vld [vmem:[%s1 + $0x20] sm:$0xff]
  %v90 = vld [vmem:[%s1 + $0x28] sm:$0xff]
  %v91 = vld [vmem:[%s1 + $0x30] sm:$0xff]
  %v92 = vld [vmem:[%s1 + $0x38] sm:$0xff]
  %93 = vxpose.xlu0.b32.start [1/16] %v85, 128
  %94 = vxpose.xlu0.b32.cont [2/16] %v86, 128
  %95 = vxpose.xlu0.b32.cont [3/16] %v87, 128
  %96 = vxpose.xlu0.b32.cont [4/16] %v88, 128
  %97 = vxpose.xlu0.b32.cont [5/16] %v89, 128
  %98 = vxpose.xlu0.b32.cont [6/16] %v90, 128
  %99 = vxpose.xlu0.b32.cont [7/16] %v91, 128
  %100 = vxpose.xlu0.b32.cont [8/16] %v92, 128
  %101 = vxpose.xlu0.b32.cont [9/16] 0.0, 128
  %102 = vxpose.xlu0.b32.cont [10/16] 0.0, 128
  %103 = vxpose.xlu0.b32.cont [11/16] 0.0, 128
  %104 = vxpose.xlu0.b32.cont [12/16] 0.0, 128
  %105 = vxpose.xlu0.b32.cont [13/16] 0.0, 128
  %106 = vxpose.xlu0.b32.cont [14/16] 0.0, 128
  %107 = vxpose.xlu0.b32.cont [15/16] 0.0, 128
  %108 = vxpose.xlu0.b32.end [16/16] 0.0, 128
  %v109 = vpop.trf.xlu0
  %v110 = vpop.trf.xlu0
  %v111 = vpop.trf.xlu0
  %v112 = vpop.trf.xlu0
  %v113 = vpop.trf.xlu0
  %v114 = vpop.trf.xlu0
  %v115 = vpop.trf.xlu0
  %v116 = vpop.trf.xlu0
  %v117 = vpop.trf.xlu0
  %v118 = vpop.trf.xlu0
  %v119 = vpop.trf.xlu0
  %v120 = vpop.trf.xlu0
  %v121 = vpop.trf.xlu0
  %v122 = vpop.trf.xlu0
  %v123 = vpop.trf.xlu0
  %v124 = vpop.trf.xlu0
  %v125 = vld [vmem:[%s0] sm:$0xf]
  %v126 = vld [vmem:[%s0 + $0x4] sm:$0xf]
  %v127 = vld [vmem:[%s0 + $0x8] sm:$0xf]
  %v128 = vld [vmem:[%s0 + $0xc] sm:$0xf]
  %v129 = vld [vmem:[%s0 + $0x10] sm:$0xf]
  %v130 = vld [vmem:[%s0 + $0x14] sm:$0xf]
  %v131 = vld [vmem:[%s0 + $0x18] sm:$0xf]
  %v132 = vld [vmem:[%s0 + $0x1c] sm:$0xf]
  %v133 = vld [vmem:[#allocation2] sm:$0xff]
  %v134 = vld [vmem:[#allocation2 + $0x8] sm:$0xff]
  %v135 = vld [vmem:[#allocation2 + $0x10] sm:$0xff]
  %v136 = vld [vmem:[#allocation2 + $0x18] sm:$0xff]
  %v137 = vld [vmem:[#allocation2 + $0x20] sm:$0xff]
  %v138 = vld [vmem:[#allocation2 + $0x28] sm:$0xff]
  %v139 = vld [vmem:[#allocation2 + $0x30] sm:$0xff]
  %v140 = vld [vmem:[#allocation2 + $0x38] sm:$0xff]
  %142 = vset.pattern.permute.xlu0 0
  %143 = vperm.xlu0 %142, %v77
  %v144 = vpop.permute.xlu0 %143
  %147 = vset.pattern.permute.xlu0 0
  %148 = vperm.xlu0 %147, %v78
  %v149 = vpop.permute.xlu0 %148
  %152 = vset.pattern.permute.xlu0 0
  %153 = vperm.xlu0 %152, %v79
  %v154 = vpop.permute.xlu0 %153
  %157 = vset.pattern.permute.xlu0 0
  %158 = vperm.xlu0 %157, %v80
  %v159 = vpop.permute.xlu0 %158
  %162 = vset.pattern.permute.xlu0 0
  %163 = vperm.xlu0 %162, %v81
  %v164 = vpop.permute.xlu0 %163
  %167 = vset.pattern.permute.xlu0 0
  %168 = vperm.xlu0 %167, %v82
  %v169 = vpop.permute.xlu0 %168
  %172 = vset.pattern.permute.xlu0 0
  %173 = vperm.xlu0 %172, %v83
  %v174 = vpop.permute.xlu0 %173
  %177 = vset.pattern.permute.xlu0 0
  %178 = vperm.xlu0 %177, %v84
  %v179 = vpop.permute.xlu0 %178
  %v181 = vlaneseq
  %v182 = vshrl.u32 %v181, 7
  %v183 = vsub.s32 0, %v182
  %v184 = vrot.slane %v109, %v183
  %v185 = vadd.f32 %v144, %v184
  %v186 = vadd.f32 %v149, %v184
  %v187 = vadd.f32 %v154, %v184
  %v188 = vadd.f32 %v159, %v184
  %v189 = vadd.f32 %v164, %v184
  %v190 = vadd.f32 %v169, %v184
  %v191 = vadd.f32 %v174, %v184
  %v192 = vadd.f32 %v179, %v184
  %v193 = vmul.f32 %v185, 0.2
  %v194 = vmul.f32 %v186, 0.2
  %v195 = vmul.f32 %v187, 0.2
  %v196 = vmul.f32 %v188, 0.2
  %v197 = vmul.f32 %v189, 0.2
  %v198 = vmul.f32 %v190, 0.2
  %v199 = vmul.f32 %v191, 0.2
  %v200 = vmul.f32 %v192, 0.2
  %v201 = vmax.f32 %v185, %v193
  %v202 = vmax.f32 %v186, %v194
  %v203 = vmax.f32 %v187, %v195
  %v204 = vmax.f32 %v188, %v196
  %v205 = vmax.f32 %v189, %v197
  %v206 = vmax.f32 %v190, %v198
  %v207 = vmax.f32 %v191, %v199
  %v208 = vmax.f32 %v192, %v200
  %v209 = vsel %vm69, %v201, -1e+30
  %v210 = vsel %vm70, %v202, -1e+30
  %v211 = vsel %vm71, %v203, -1e+30
  %v212 = vsel %vm72, %v204, -1e+30
  %v213 = vsel %vm73, %v205, -1e+30
  %v214 = vsel %vm74, %v206, -1e+30
  %v215 = vsel %vm75, %v207, -1e+30
  %v216 = vsel %vm76, %v208, -1e+30
  %vm217 = vcmask 523264
  %v218 = vsel %vm217, %v209, -inf
  %219 = vmax.xlane.f32.xlu0 %v218
  %v220 = vpop.xlane.xlu0 %219
  %v221 = vsel %vm217, %v210, -inf
  %222 = vmax.xlane.f32.xlu0 %v221
  %v223 = vpop.xlane.xlu0 %222
  %v224 = vsel %vm217, %v211, -inf
  %225 = vmax.xlane.f32.xlu0 %v224
  %v226 = vpop.xlane.xlu0 %225
  %v227 = vsel %vm217, %v212, -inf
  %228 = vmax.xlane.f32.xlu0 %v227
  %v229 = vpop.xlane.xlu0 %228
  %v230 = vsel %vm217, %v213, -inf
  %231 = vmax.xlane.f32.xlu0 %v230
  %v232 = vpop.xlane.xlu0 %231
  %v233 = vsel %vm217, %v214, -inf
  %234 = vmax.xlane.f32.xlu0 %v233
  %v235 = vpop.xlane.xlu0 %234
  %v236 = vsel %vm217, %v215, -inf
  %237 = vmax.xlane.f32.xlu0 %v236
  %v238 = vpop.xlane.xlu0 %237
  %v239 = vsel %vm217, %v216, -inf
  %240 = vmax.xlane.f32.xlu0 %v239
  %v241 = vpop.xlane.xlu0 %240
  %v242 = vmax.f32 %v133, %v220
  %v243 = vmax.f32 %v134, %v223
  %v244 = vmax.f32 %v135, %v226
  %v245 = vmax.f32 %v136, %v229
  %v246 = vmax.f32 %v137, %v232
  %v247 = vmax.f32 %v138, %v235
  %v248 = vmax.f32 %v139, %v238
  %v249 = vmax.f32 %v140, %v241
  %251 = vset.pattern.permute.xlu0 0
  %252 = vperm.xlu0 %251, %v242
  %v253 = vpop.permute.xlu0 %252
  %256 = vset.pattern.permute.xlu0 0
  %257 = vperm.xlu0 %256, %v243
  %v258 = vpop.permute.xlu0 %257
  %261 = vset.pattern.permute.xlu0 0
  %262 = vperm.xlu0 %261, %v244
  %v263 = vpop.permute.xlu0 %262
  %266 = vset.pattern.permute.xlu0 0
  %267 = vperm.xlu0 %266, %v245
  %v268 = vpop.permute.xlu0 %267
  %271 = vset.pattern.permute.xlu0 0
  %272 = vperm.xlu0 %271, %v246
  %v273 = vpop.permute.xlu0 %272
  %276 = vset.pattern.permute.xlu0 0
  %277 = vperm.xlu0 %276, %v247
  %v278 = vpop.permute.xlu0 %277
  %281 = vset.pattern.permute.xlu0 0
  %282 = vperm.xlu0 %281, %v248
  %v283 = vpop.permute.xlu0 %282
  %286 = vset.pattern.permute.xlu0 0
  %287 = vperm.xlu0 %286, %v249
  %v288 = vpop.permute.xlu0 %287
  %v290 = vsub.f32 %v209, %v253
  %v291 = vsub.f32 %v210, %v258
  %v292 = vsub.f32 %v211, %v263
  %v293 = vsub.f32 %v212, %v268
  %v294 = vsub.f32 %v213, %v273
  %v295 = vsub.f32 %v214, %v278
  %v296 = vsub.f32 %v215, %v283
  %v297 = vsub.f32 %v216, %v288
  %v298 = vmul.f32 %v290, 1.442695
  %v299 = vpow.pop %v298
  %v300 = vmul.f32 %v291, 1.442695
  %v301 = vpow.pop %v300
  %v302 = vmul.f32 %v292, 1.442695
  %v303 = vpow.pop %v302
  %v304 = vmul.f32 %v293, 1.442695
  %v305 = vpow.pop %v304
  %v306 = vmul.f32 %v294, 1.442695
  %v307 = vpow.pop %v306
  %v308 = vmul.f32 %v295, 1.442695
  %v309 = vpow.pop %v308
  %v310 = vmul.f32 %v296, 1.442695
  %v311 = vpow.pop %v310
  %v312 = vmul.f32 %v297, 1.442695
  %v313 = vpow.pop %v312
  %v314 = vsel %vm217, %v299, 0.0
  %315 = vadd.xlane.f32.xlu0 %v314
  %v316 = vpop.xlane.xlu0 %315
  %v317 = vsel %vm217, %v301, 0.0
  %318 = vadd.xlane.f32.xlu0 %v317
  %v319 = vpop.xlane.xlu0 %318
  %v320 = vsel %vm217, %v303, 0.0
  %321 = vadd.xlane.f32.xlu0 %v320
  %v322 = vpop.xlane.xlu0 %321
  %v323 = vsel %vm217, %v305, 0.0
  %324 = vadd.xlane.f32.xlu0 %v323
  %v325 = vpop.xlane.xlu0 %324
  %v326 = vsel %vm217, %v307, 0.0
  %327 = vadd.xlane.f32.xlu0 %v326
  %v328 = vpop.xlane.xlu0 %327
  %v329 = vsel %vm217, %v309, 0.0
  %330 = vadd.xlane.f32.xlu0 %v329
  %v331 = vpop.xlane.xlu0 %330
  %v332 = vsel %vm217, %v311, 0.0
  %333 = vadd.xlane.f32.xlu0 %v332
  %v334 = vpop.xlane.xlu0 %333
  %v335 = vsel %vm217, %v313, 0.0
  %336 = vadd.xlane.f32.xlu0 %v335
  %v337 = vpop.xlane.xlu0 %336
  %v338 = vpack.c.bf16 %v301, %v299
  %v339 = vpack.c.bf16 %v305, %v303
  %v340 = vpack.c.bf16 %v309, %v307
  %v341 = vpack.c.bf16 %v313, %v311
  %v350 = vunpack.c.l.b16 %v125
  %v351 = vunpack.c.l.b16 %v126
  %v352 = vunpack.c.l.b16 %v127
  %v353 = vunpack.c.l.b16 %v128
  %v354 = vunpack.c.l.b16 %v129
  %v355 = vunpack.c.l.b16 %v130
  %v356 = vunpack.c.l.b16 %v131
  %v357 = vunpack.c.l.b16 %v132
  %v358 = vpack.c.b16 %v351, %v350
  %v359 = vpack.c.b16 %v353, %v352
  %v360 = vpack.c.b16 %v355, %v354
  %v361 = vpack.c.b16 %v357, %v356
  %v367 = vsel %vm217, %v338, 0
  %v370 = vsel %vm217, %v339, 0
  %v373 = vsel %vm217, %v340, 0
  %v376 = vsel %vm217, %v341, 0
  %378 = vmatprep.subr.bf16.mxu0 0
  %379 = vmatpush1.bf16.msra.mxu0 %v358
  %380 = vmatprep.subr.bf16.mxu0 0
  %381 = vmatpush1.bf16.msra.mxu0 %v359
  %382 = vmatprep.subr.bf16.mxu0 0
  %383 = vmatpush1.bf16.msra.mxu0 %v360
  %384 = vmatprep.subr.bf16.mxu0 0
  %385 = vmatpush1.bf16.msra.mxu0 %v361
  %386 = vmatprep.subr.bf16.mxu0 0
  %387 = vmatpush1.bf16.msra.mxu0 0
  %388 = vmatprep.subr.bf16.mxu0 0
  %389 = vmatpush1.bf16.msra.mxu0 0
  %390 = vmatprep.subr.bf16.mxu0 0
  %391 = vmatpush1.bf16.msra.mxu0 0
  %392 = vmatprep.subr.bf16.mxu0 0
  %393 = vmatpush1.bf16.msra.mxu0 0
  %394 = vmatprep.subr.bf16.mxu0 0
  %395 = vmatpush1.bf16.msra.mxu0 0
  %396 = vmatprep.subr.bf16.mxu0 0
  %397 = vmatpush1.bf16.msra.mxu0 0
  %398 = vmatprep.subr.bf16.mxu0 0
  %399 = vmatpush1.bf16.msra.mxu0 0
  %400 = vmatprep.subr.bf16.mxu0 0
  %401 = vmatpush1.bf16.msra.mxu0 0
  %402 = vmatprep.subr.bf16.mxu0 0
  %403 = vmatpush1.bf16.msra.mxu0 0
  %404 = vmatprep.subr.bf16.mxu0 0
  %405 = vmatpush1.bf16.msra.mxu0 0
  %406 = vmatprep.subr.bf16.mxu0 0
  %407 = vmatpush1.bf16.msra.mxu0 0
  %408 = vmatprep.subr.bf16.mxu0 0
  %409 = vmatpush1.bf16.msra.mxu0 0
  %410 = vmatprep.mubr.bf16.mxu0 0
  %411 = vmatmul.mubr.bf16.gmra.mrb[0].mxu0 %v367
  %v412 = vpop.f32.mrb[0].mxu0
  %v413 = vadd.f32 0.0, %v412
  %v414 = vpop.f32.mrb[0].mxu0
  %v415 = vpop.f32.mrb[0].mxu0
  %v416 = vadd.f32 0.0, %v415
  %v417 = vpop.f32.mrb[0].mxu0
  %418 = vmatprep.mubr.bf16.mxu0 0
  %419 = vmatmul.mubr.bf16.gmra.mrb[0].mxu0 %v370
  %v420 = vpop.f32.mrb[0].mxu0
  %v421 = vadd.f32 0.0, %v420
  %v422 = vpop.f32.mrb[0].mxu0
  %v423 = vpop.f32.mrb[0].mxu0
  %v424 = vadd.f32 0.0, %v423
  %v425 = vpop.f32.mrb[0].mxu0
  %426 = vmatprep.mubr.bf16.mxu0 0
  %427 = vmatmul.mubr.bf16.gmra.mrb[0].mxu0 %v373
  %v428 = vpop.f32.mrb[0].mxu0
  %v429 = vadd.f32 0.0, %v428
  %v430 = vpop.f32.mrb[0].mxu0
  %v431 = vpop.f32.mrb[0].mxu0
  %v432 = vadd.f32 0.0, %v431
  %v433 = vpop.f32.mrb[0].mxu0
  %434 = vmatprep.mubr.bf16.mxu0 0
  %435 = vmatmul.mubr.bf16.gmra.mrb[0].mxu0 %v376
  %v436 = vpop.f32.mrb[0].mxu0
  %v437 = vadd.f32 0.0, %v436
  %v438 = vpop.f32.mrb[0].mxu0
  %v439 = vpop.f32.mrb[0].mxu0
  %v440 = vadd.f32 0.0, %v439
  %v441 = vpop.f32.mrb[0].mxu0
  %442 = vdwg.mxu0
  %v443 = vsub.f32 %v133, %v242
  %v444 = vsub.f32 %v134, %v243
  %v445 = vsub.f32 %v135, %v244
  %v446 = vsub.f32 %v136, %v245
  %v447 = vsub.f32 %v137, %v246
  %v448 = vsub.f32 %v138, %v247
  %v449 = vsub.f32 %v139, %v248
  %v450 = vsub.f32 %v140, %v249
  %v451 = vmul.f32 %v443, 1.442695
  %v452 = vpow.pop %v451
  %v453 = vmul.f32 %v444, 1.442695
  %v454 = vpow.pop %v453
  %v455 = vmul.f32 %v445, 1.442695
  %v456 = vpow.pop %v455
  %v457 = vmul.f32 %v446, 1.442695
  %v458 = vpow.pop %v457
  %v459 = vmul.f32 %v447, 1.442695
  %v460 = vpow.pop %v459
  %v461 = vmul.f32 %v448, 1.442695
  %v462 = vpow.pop %v461
  %v463 = vmul.f32 %v449, 1.442695
  %v464 = vpow.pop %v463
  %v465 = vmul.f32 %v450, 1.442695
  %v466 = vpow.pop %v465
  %v467 = vld [vmem:[#allocation3] sm:$0xff]
  %v468 = vld [vmem:[#allocation3 + $0x8] sm:$0xff]
  %v469 = vld [vmem:[#allocation3 + $0x10] sm:$0xff]
  %v470 = vld [vmem:[#allocation3 + $0x18] sm:$0xff]
  %v471 = vld [vmem:[#allocation3 + $0x20] sm:$0xff]
  %v472 = vld [vmem:[#allocation3 + $0x28] sm:$0xff]
  %v473 = vld [vmem:[#allocation3 + $0x30] sm:$0xff]
  %v474 = vld [vmem:[#allocation3 + $0x38] sm:$0xff]
  %v475 = vmul.f32 %v452, %v467
  %v476 = vmul.f32 %v454, %v468
  %v477 = vmul.f32 %v456, %v469
  %v478 = vmul.f32 %v458, %v470
  %v479 = vmul.f32 %v460, %v471
  %v480 = vmul.f32 %v462, %v472
  %v481 = vmul.f32 %v464, %v473
  %v482 = vmul.f32 %v466, %v474
  %v483 = vadd.f32 %v475, %v316
  %v484 = vadd.f32 %v476, %v319
  %v485 = vadd.f32 %v477, %v322
  %v486 = vadd.f32 %v478, %v325
  %v487 = vadd.f32 %v479, %v328
  %v488 = vadd.f32 %v480, %v331
  %v489 = vadd.f32 %v481, %v334
  %v490 = vadd.f32 %v482, %v337
  %vm491 = vcmask 7168
  %492 = vst.msk [vmem:[#allocation3] sm:$0xff] %vm491, %v483
  %493 = vst.msk [vmem:[#allocation3 + $0x8] sm:$0xff] %vm491, %v484
  %494 = vst.msk [vmem:[#allocation3 + $0x10] sm:$0xff] %vm491, %v485
  %495 = vst.msk [vmem:[#allocation3 + $0x18] sm:$0xff] %vm491, %v486
  %496 = vst.msk [vmem:[#allocation3 + $0x20] sm:$0xff] %vm491, %v487
  %497 = vst.msk [vmem:[#allocation3 + $0x28] sm:$0xff] %vm491, %v488
  %498 = vst.msk [vmem:[#allocation3 + $0x30] sm:$0xff] %vm491, %v489
  %499 = vst.msk [vmem:[#allocation3 + $0x38] sm:$0xff] %vm491, %v490
  %v500 = vld [vmem:[#allocation4] sm:$0xff]
  %v501 = vld [vmem:[#allocation4 + $0x8] sm:$0xff]
  %v502 = vld [vmem:[#allocation4 + $0x10] sm:$0xff]
  %v503 = vld [vmem:[#allocation4 + $0x18] sm:$0xff]
  %v504 = vld [vmem:[#allocation4 + $0x20] sm:$0xff]
  %v505 = vld [vmem:[#allocation4 + $0x28] sm:$0xff]
  %v506 = vld [vmem:[#allocation4 + $0x30] sm:$0xff]
  %v507 = vld [vmem:[#allocation4 + $0x38] sm:$0xff]
  %509 = vset.pattern.permute.xlu0 0
  %510 = vperm.xlu0 %509, %v452
  %v511 = vpop.permute.xlu0 %510
  %514 = vset.pattern.permute.xlu0 0
  %515 = vperm.xlu0 %514, %v454
  %v516 = vpop.permute.xlu0 %515
  %519 = vset.pattern.permute.xlu0 0
  %520 = vperm.xlu0 %519, %v456
  %v521 = vpop.permute.xlu0 %520
  %524 = vset.pattern.permute.xlu0 0
  %525 = vperm.xlu0 %524, %v458
  %v526 = vpop.permute.xlu0 %525
  %529 = vset.pattern.permute.xlu0 0
  %530 = vperm.xlu0 %529, %v460
  %v531 = vpop.permute.xlu0 %530
  %534 = vset.pattern.permute.xlu0 0
  %535 = vperm.xlu0 %534, %v462
  %v536 = vpop.permute.xlu0 %535
  %539 = vset.pattern.permute.xlu0 0
  %540 = vperm.xlu0 %539, %v464
  %v541 = vpop.permute.xlu0 %540
  %544 = vset.pattern.permute.xlu0 0
  %545 = vperm.xlu0 %544, %v466
  %v546 = vpop.permute.xlu0 %545
  %v548 = vmul.f32 %v511, %v500
  %v549 = vmul.f32 %v516, %v501
  %v550 = vmul.f32 %v521, %v502
  %v551 = vmul.f32 %v526, %v503
  %v552 = vmul.f32 %v531, %v504
  %v553 = vmul.f32 %v536, %v505
  %v554 = vmul.f32 %v541, %v506
  %v555 = vmul.f32 %v546, %v507
  %v556 = vadd.f32 %v548, %v413
  %v557 = vadd.f32 %v549, %v416
  %v558 = vadd.f32 %v550, %v421
  %v559 = vadd.f32 %v551, %v424
  %v560 = vadd.f32 %v552, %v429
  %v561 = vadd.f32 %v553, %v432
  %v562 = vadd.f32 %v554, %v437
  %v563 = vadd.f32 %v555, %v440
  %vm564 = vcmask 31744
  %565 = vst.msk [vmem:[#allocation4] sm:$0xff] %vm564, %v556
  %566 = vst.msk [vmem:[#allocation4 + $0x8] sm:$0xff] %vm564, %v557
  %567 = vst.msk [vmem:[#allocation4 + $0x10] sm:$0xff] %vm564, %v558
  %568 = vst.msk [vmem:[#allocation4 + $0x18] sm:$0xff] %vm564, %v559
  %569 = vst.msk [vmem:[#allocation4 + $0x20] sm:$0xff] %vm564, %v560
  %570 = vst.msk [vmem:[#allocation4 + $0x28] sm:$0xff] %vm564, %v561
  %571 = vst.msk [vmem:[#allocation4 + $0x30] sm:$0xff] %vm564, %v562
  %572 = vst.msk [vmem:[#allocation4 + $0x38] sm:$0xff] %vm564, %v563
  %573 = vst.msk [vmem:[#allocation2] sm:$0xff] %vm491, %v242
  %574 = vst.msk [vmem:[#allocation2 + $0x8] sm:$0xff] %vm491, %v243
  %575 = vst.msk [vmem:[#allocation2 + $0x10] sm:$0xff] %vm491, %v244
  %576 = vst.msk [vmem:[#allocation2 + $0x18] sm:$0xff] %vm491, %v245
  %577 = vst.msk [vmem:[#allocation2 + $0x20] sm:$0xff] %vm491, %v246
  %578 = vst.msk [vmem:[#allocation2 + $0x28] sm:$0xff] %vm491, %v247
  %579 = vst.msk [vmem:[#allocation2 + $0x30] sm:$0xff] %vm491, %v248
  %580 = vst.msk [vmem:[#allocation2 + $0x38] sm:$0xff] %vm491, %v249
  // Predicated region
  $region26: #{_lambda_.7} parent=0 // pred_check
    %p581 = pneg %p21
  $region27: #{_lambda_.7} parent=0 // pred_check_branch
    %583 = sbr.rel (%p581) target = $region29
  $region28: #{_lambda_.7} parent=0 // pred_region
    %v584 = vld [vmem:[#allocation3] sm:$0xff]
    %v585 = vld [vmem:[#allocation3 + $0x8] sm:$0xff]
    %v586 = vld [vmem:[#allocation3 + $0x10] sm:$0xff]
    %v587 = vld [vmem:[#allocation3 + $0x18] sm:$0xff]
    %v588 = vld [vmem:[#allocation3 + $0x20] sm:$0xff]
    %v589 = vld [vmem:[#allocation3 + $0x28] sm:$0xff]
    %v590 = vld [vmem:[#allocation3 + $0x30] sm:$0xff]
    %v591 = vld [vmem:[#allocation3 + $0x38] sm:$0xff]
    %v592 = vrcp.pop %v584
    %v593 = vrcp.pop %v585
    %v594 = vrcp.pop %v586
    %v595 = vrcp.pop %v587
    %v596 = vrcp.pop %v588
    %v597 = vrcp.pop %v589
    %v598 = vrcp.pop %v590
    %v599 = vrcp.pop %v591
    %v600 = vld [vmem:[#allocation4] sm:$0xff]
    %v601 = vld [vmem:[#allocation4 + $0x8] sm:$0xff]
    %v602 = vld [vmem:[#allocation4 + $0x10] sm:$0xff]
    %v603 = vld [vmem:[#allocation4 + $0x18] sm:$0xff]
    %v604 = vld [vmem:[#allocation4 + $0x20] sm:$0xff]
    %v605 = vld [vmem:[#allocation4 + $0x28] sm:$0xff]
    %v606 = vld [vmem:[#allocation4 + $0x30] sm:$0xff]
    %v607 = vld [vmem:[#allocation4 + $0x38] sm:$0xff]
    %609 = vset.pattern.permute.xlu0 0
    %610 = vperm.xlu0 %609, %v592
    %v611 = vpop.permute.xlu0 %610
    %614 = vset.pattern.permute.xlu0 0
    %615 = vperm.xlu0 %614, %v593
    %v616 = vpop.permute.xlu0 %615
    %619 = vset.pattern.permute.xlu0 0
    %620 = vperm.xlu0 %619, %v594
    %v621 = vpop.permute.xlu0 %620
    %624 = vset.pattern.permute.xlu0 0
    %625 = vperm.xlu0 %624, %v595
    %v626 = vpop.permute.xlu0 %625
    %629 = vset.pattern.permute.xlu0 0
    %630 = vperm.xlu0 %629, %v596
    %v631 = vpop.permute.xlu0 %630
    %634 = vset.pattern.permute.xlu0 0
    %635 = vperm.xlu0 %634, %v597
    %v636 = vpop.permute.xlu0 %635
    %639 = vset.pattern.permute.xlu0 0
    %640 = vperm.xlu0 %639, %v598
    %v641 = vpop.permute.xlu0 %640
    %644 = vset.pattern.permute.xlu0 0
    %645 = vperm.xlu0 %644, %v599
    %v646 = vpop.permute.xlu0 %645
    %v648 = vmul.f32 %v600, %v611
    %v649 = vmul.f32 %v601, %v616
    %v650 = vmul.f32 %v602, %v621
    %v651 = vmul.f32 %v603, %v626
    %v652 = vmul.f32 %v604, %v631
    %v653 = vmul.f32 %v605, %v636
    %v654 = vmul.f32 %v606, %v641
    %v655 = vmul.f32 %v607, %v646
    %v656 = vsel %vm564, %v648, 0.0
    %v657 = vsel %vm564, %v649, 0.0
    %v658 = vsel %vm564, %v650, 0.0
    %v659 = vsel %vm564, %v651, 0.0
    %v660 = vsel %vm564, %v652, 0.0
    %v661 = vsel %vm564, %v653, 0.0
    %v662 = vsel %vm564, %v654, 0.0
    %v663 = vsel %vm564, %v655, 0.0
    %664 = vst [vmem:[%s5] sm:$0xff] %v656
    %665 = vst [vmem:[%s5 + $0x8] sm:$0xff] %v657
    %666 = vst [vmem:[%s5 + $0x10] sm:$0xff] %v658
    %667 = vst [vmem:[%s5 + $0x18] sm:$0xff] %v659
    %668 = vst [vmem:[%s5 + $0x20] sm:$0xff] %v660
    %669 = vst [vmem:[%s5 + $0x28] sm:$0xff] %v661
    %670 = vst [vmem:[%s5 + $0x30] sm:$0xff] %v662
    %671 = vst [vmem:[%s5 + $0x38] sm:$0xff] %v663
  $region29: #{_lambda_.7} parent=0 // pred_fallthru
    _
  // Predicated region
  $region30: #{_lambda_.7} parent=0 // pred_check
    _
  $region31: #{_lambda_.7} parent=0 // pred_check_branch
    %673 = sbr.rel (0) target = $region33
  $region32: #{_lambda_.7} parent=0 // pred_region
    _
  $region33: #{_lambda_.7} parent=0 // pred_fallthru
    _
  // Predicated region
  $region34: #{_lambda_.7} parent=0 // pred_check
    _
  $region35: #{_lambda_.7} parent=0 // pred_check_branch
    %675 = sbr.rel (0) target = $region37
  $region36: #{_lambda_.7} parent=0 // pred_region
    _
  $region37: #{_lambda_.7} parent=0 // pred_fallthru
    _

// kernel: _lambda_.5
$region0: #{_lambda_.5}
  #allocation0 [shape = 'u32[]', space=smem, size = 0x4, offset = 0x4, fixed_abs, tag = 'smem constant byte address 0x4 - core index']
  #allocation1 [shape = 'u32[144,128]{1,0:T(1,128)}', space=vmem, size = 0x12000, scoped, tag = 'internal scratch']
  #allocation2 [shape = 'f32[64,8]{1,0:T(8,128)}', space=vmem, size = 0x8000, scoped, tag = 'scratch operand']
  #allocation3 [shape = 'f32[64,8]{1,0:T(8,128)}', space=vmem, size = 0x8000, scoped, tag = 'scratch operand']
  #allocation4 [shape = 'f32[64,64]{1,0:T(8,128)}', space=vmem, size = 0x8000, scoped, tag = 'scratch operand']
  %s0 = inlined_call_operand.vmem [shape: bf16[64,64], index: 0, kind: input, shape index: {}]
  %s1 = inlined_call_operand.vmem [shape: f32[64,8], index: 1, kind: input, shape index: {}]
  %s2 = inlined_call_operand.vmem [shape: f32[64,8], index: 2, kind: input, shape index: {}]
  %s3 = inlined_call_operand.vmem [shape: s8[64,64], index: 3, kind: input, shape index: {}]
  %s4 = inlined_call_operand.vmem [shape: f32[8,64], index: 4, kind: input, shape index: {}]
  %s5 = inlined_call_operand.vmem [shape: bf16[64,128], index: 5, kind: output, shape index: {}]
  %s6 = sld [smem:[#allocation0]]
  $region38: #{_lambda_.5} parent=0
    _
  %s8 = ssub.s32 1, %s6
  %s9 = scalar_select 0, %s8, %s6
  // Predicated region
  $region2: #{_lambda_.5} parent=0 // pred_check
    _
  $region3: #{_lambda_.5} parent=0 // pred_check_branch
    %11 = sbr.rel (0) target = $region5
  $region4: #{_lambda_.5} parent=0 // pred_region
    _
  $region5: #{_lambda_.5} parent=0 // pred_fallthru
    _
  // Predicated region
  $region6: #{_lambda_.5} parent=0 // pred_check
    _
  $region7: #{_lambda_.5} parent=0 // pred_check_branch
    %13 = sbr.rel (0) target = $region9
  $region8: #{_lambda_.5} parent=0 // pred_region
    _
  $region9: #{_lambda_.5} parent=0 // pred_fallthru
    _
  // Predicated region
  $region10: #{_lambda_.5} parent=0 // pred_check
    _
  $region11: #{_lambda_.5} parent=0 // pred_check_branch
    %15 = sbr.rel (0) target = $region13
  $region12: #{_lambda_.5} parent=0 // pred_region
    _
  $region13: #{_lambda_.5} parent=0 // pred_fallthru
    _
  // Predicated region
  $region14: #{_lambda_.5} parent=0 // pred_check
    _
  $region15: #{_lambda_.5} parent=0 // pred_check_branch
    %17 = sbr.rel (0) target = $region17
  $region16: #{_lambda_.5} parent=0 // pred_region
    _
  $region17: #{_lambda_.5} parent=0 // pred_fallthru
    _
  // Predicated region
  $region18: #{_lambda_.5} parent=0 // pred_check
    _
  $region19: #{_lambda_.5} parent=0 // pred_check_branch
    %19 = sbr.rel (0) target = $region21
  $region20: #{_lambda_.5} parent=0 // pred_region
    _
  $region21: #{_lambda_.5} parent=0 // pred_fallthru
    _
  %p21 = scmp.eq.s32.totalorder 0, 0
  // Predicated region
  $region22: #{_lambda_.5} parent=0 // pred_check
    %p22 = pneg %p21
  $region23: #{_lambda_.5} parent=0 // pred_check_branch
    %24 = sbr.rel (%p22) target = $region25
  $region24: #{_lambda_.5} parent=0 // pred_region
    %vm25 = vcmask 64512
    %26 = vst.msk [vmem:[#allocation2] sm:$0xff] %vm25, -1e+20
    %27 = vst.msk [vmem:[#allocation2 + $0x8] sm:$0xff] %vm25, -1e+20
    %28 = vst.msk [vmem:[#allocation2 + $0x10] sm:$0xff] %vm25, -1e+20
    %29 = vst.msk [vmem:[#allocation2 + $0x18] sm:$0xff] %vm25, -1e+20
    %30 = vst.msk [vmem:[#allocation2 + $0x20] sm:$0xff] %vm25, -1e+20
    %31 = vst.msk [vmem:[#allocation2 + $0x28] sm:$0xff] %vm25, -1e+20
    %32 = vst.msk [vmem:[#allocation2 + $0x30] sm:$0xff] %vm25, -1e+20
    %33 = vst.msk [vmem:[#allocation2 + $0x38] sm:$0xff] %vm25, -1e+20
    %34 = vst.msk [vmem:[#allocation3] sm:$0xff] %vm25, 0.0
    %35 = vst.msk [vmem:[#allocation3 + $0x8] sm:$0xff] %vm25, 0.0
    %36 = vst.msk [vmem:[#allocation3 + $0x10] sm:$0xff] %vm25, 0.0
    %37 = vst.msk [vmem:[#allocation3 + $0x18] sm:$0xff] %vm25, 0.0
    %38 = vst.msk [vmem:[#allocation3 + $0x20] sm:$0xff] %vm25, 0.0
    %39 = vst.msk [vmem:[#allocation3 + $0x28] sm:$0xff] %vm25, 0.0
    %40 = vst.msk [vmem:[#allocation3 + $0x30] sm:$0xff] %vm25, 0.0
    %41 = vst.msk [vmem:[#allocation3 + $0x38] sm:$0xff] %vm25, 0.0
    %vm42 = vcmask 523264
    %43 = vst.msk [vmem:[#allocation4] sm:$0xff] %vm42, 0.0
    %44 = vst.msk [vmem:[#allocation4 + $0x8] sm:$0xff] %vm42, 0.0
    %45 = vst.msk [vmem:[#allocation4 + $0x10] sm:$0xff] %vm42, 0.0
    %46 = vst.msk [vmem:[#allocation4 + $0x18] sm:$0xff] %vm42, 0.0
    %47 = vst.msk [vmem:[#allocation4 + $0x20] sm:$0xff] %vm42, 0.0
    %48 = vst.msk [vmem:[#allocation4 + $0x28] sm:$0xff] %vm42, 0.0
    %49 = vst.msk [vmem:[#allocation4 + $0x30] sm:$0xff] %vm42, 0.0
    %50 = vst.msk [vmem:[#allocation4 + $0x38] sm:$0xff] %vm42, 0.0
  $region25: #{_lambda_.5} parent=0 // pred_fallthru
    _
  %v51 = vld [vmem:[%s3] sm:$0xff]
  %v52 = vld [vmem:[%s3 + $0x8] sm:$0xff]
  %v53 = vunpack.c.0.s8 %v51
  %v54 = vunpack.c.1.s8 %v51
  %v55 = vunpack.c.2.s8 %v51
  %v56 = vunpack.c.3.s8 %v51
  %v57 = vunpack.c.0.s8 %v52
  %v58 = vunpack.c.1.s8 %v52
  %v59 = vunpack.c.2.s8 %v52
  %v60 = vunpack.c.3.s8 %v52
  %v61 = vcvt.s32.f32 %v53
  %v62 = vcvt.s32.f32 %v54
  %v63 = vcvt.s32.f32 %v55
  %v64 = vcvt.s32.f32 %v56
  %v65 = vcvt.s32.f32 %v57
  %v66 = vcvt.s32.f32 %v58
  %v67 = vcvt.s32.f32 %v59
  %v68 = vcvt.s32.f32 %v60
  %vm69 = vcmp.gt.f32.partialorder %v61, 0.0
  %vm70 = vcmp.gt.f32.partialorder %v62, 0.0
  %vm71 = vcmp.gt.f32.partialorder %v63, 0.0
  %vm72 = vcmp.gt.f32.partialorder %v64, 0.0
  %vm73 = vcmp.gt.f32.partialorder %v65, 0.0
  %vm74 = vcmp.gt.f32.partialorder %v66, 0.0
  %vm75 = vcmp.gt.f32.partialorder %v67, 0.0
  %vm76 = vcmp.gt.f32.partialorder %v68, 0.0
  %v77 = vld [vmem:[%s2] sm:$0xff]
  %v78 = vld [vmem:[%s2 + $0x8] sm:$0xff]
  %v79 = vld [vmem:[%s2 + $0x10] sm:$0xff]
  %v80 = vld [vmem:[%s2 + $0x18] sm:$0xff]
  %v81 = vld [vmem:[%s2 + $0x20] sm:$0xff]
  %v82 = vld [vmem:[%s2 + $0x28] sm:$0xff]
  %v83 = vld [vmem:[%s2 + $0x30] sm:$0xff]
  %v84 = vld [vmem:[%s2 + $0x38] sm:$0xff]
  %v85 = vld [vmem:[%s1] sm:$0xff]
  %v86 = vld [vmem:[%s1 + $0x8] sm:$0xff]
  %v87 = vld [vmem:[%s1 + $0x10] sm:$0xff]
  %v88 = vld [vmem:[%s1 + $0x18] sm:$0xff]
  %v89 = vld [vmem:[%s1 + $0x20] sm:$0xff]
  %v90 = vld [vmem:[%s1 + $0x28] sm:$0xff]
  %v91 = vld [vmem:[%s1 + $0x30] sm:$0xff]
  %v92 = vld [vmem:[%s1 + $0x38] sm:$0xff]
  %93 = vxpose.xlu0.b32.start [1/16] %v85, 128
  %94 = vxpose.xlu0.b32.cont [2/16] %v86, 128
  %95 = vxpose.xlu0.b32.cont [3/16] %v87, 128
  %96 = vxpose.xlu0.b32.cont [4/16] %v88, 128
  %97 = vxpose.xlu0.b32.cont [5/16] %v89, 128
  %98 = vxpose.xlu0.b32.cont [6/16] %v90, 128
  %99 = vxpose.xlu0.b32.cont [7/16] %v91, 128
  %100 = vxpose.xlu0.b32.cont [8/16] %v92, 128
  %101 = vxpose.xlu0.b32.cont [9/16] 0.0, 128
  %102 = vxpose.xlu0.b32.cont [10/16] 0.0, 128
  %103 = vxpose.xlu0.b32.cont [11/16] 0.0, 128
  %104 = vxpose.xlu0.b32.cont [12/16] 0.0, 128
  %105 = vxpose.xlu0.b32.cont [13/16] 0.0, 128
  %106 = vxpose.xlu0.b32.cont [14/16] 0.0, 128
  %107 = vxpose.xlu0.b32.cont [15/16] 0.0, 128
  %108 = vxpose.xlu0.b32.end [16/16] 0.0, 128
  %v109 = vpop.trf.xlu0
  %v110 = vpop.trf.xlu0
  %v111 = vpop.trf.xlu0
  %v112 = vpop.trf.xlu0
  %v113 = vpop.trf.xlu0
  %v114 = vpop.trf.xlu0
  %v115 = vpop.trf.xlu0
  %v116 = vpop.trf.xlu0
  %v117 = vpop.trf.xlu0
  %v118 = vpop.trf.xlu0
  %v119 = vpop.trf.xlu0
  %v120 = vpop.trf.xlu0
  %v121 = vpop.trf.xlu0
  %v122 = vpop.trf.xlu0
  %v123 = vpop.trf.xlu0
  %v124 = vpop.trf.xlu0
  %v125 = vld [vmem:[%s0] sm:$0xf]
  %v126 = vld [vmem:[%s0 + $0x4] sm:$0xf]
  %v127 = vld [vmem:[%s0 + $0x8] sm:$0xf]
  %v128 = vld [vmem:[%s0 + $0xc] sm:$0xf]
  %v129 = vld [vmem:[%s0 + $0x10] sm:$0xf]
  %v130 = vld [vmem:[%s0 + $0x14] sm:$0xf]
  %v131 = vld [vmem:[%s0 + $0x18] sm:$0xf]
  %v132 = vld [vmem:[%s0 + $0x1c] sm:$0xf]
  %v133 = vld [vmem:[#allocation2] sm:$0xff]
  %v134 = vld [vmem:[#allocation2 + $0x8] sm:$0xff]
  %v135 = vld [vmem:[#allocation2 + $0x10] sm:$0xff]
  %v136 = vld [vmem:[#allocation2 + $0x18] sm:$0xff]
  %v137 = vld [vmem:[#allocation2 + $0x20] sm:$0xff]
  %v138 = vld [vmem:[#allocation2 + $0x28] sm:$0xff]
  %v139 = vld [vmem:[#allocation2 + $0x30] sm:$0xff]
  %v140 = vld [vmem:[#allocation2 + $0x38] sm:$0xff]
  %142 = vset.pattern.permute.xlu0 0
  %143 = vperm.xlu0 %142, %v77
  %v144 = vpop.permute.xlu0 %143
  %147 = vset.pattern.permute.xlu0 0
  %148 = vperm.xlu0 %147, %v78
  %v149 = vpop.permute.xlu0 %148
  %152 = vset.pattern.permute.xlu0 0
  %153 = vperm.xlu0 %152, %v79
  %v154 = vpop.permute.xlu0 %153
  %157 = vset.pattern.permute.xlu0 0
  %158 = vperm.xlu0 %157, %v80
  %v159 = vpop.permute.xlu0 %158
  %162 = vset.pattern.permute.xlu0 0
  %163 = vperm.xlu0 %162, %v81
  %v164 = vpop.permute.xlu0 %163
  %167 = vset.pattern.permute.xlu0 0
  %168 = vperm.xlu0 %167, %v82
  %v169 = vpop.permute.xlu0 %168
  %172 = vset.pattern.permute.xlu0 0
  %173 = vperm.xlu0 %172, %v83
  %v174 = vpop.permute.xlu0 %173
  %177 = vset.pattern.permute.xlu0 0
  %178 = vperm.xlu0 %177, %v84
  %v179 = vpop.permute.xlu0 %178
  %v181 = vlaneseq
  %v182 = vshrl.u32 %v181, 7
  %v183 = vsub.s32 0, %v182
  %v184 = vrot.slane %v109, %v183
  %v185 = vadd.f32 %v144, %v184
  %v186 = vadd.f32 %v149, %v184
  %v187 = vadd.f32 %v154, %v184
  %v188 = vadd.f32 %v159, %v184
  %v189 = vadd.f32 %v164, %v184
  %v190 = vadd.f32 %v169, %v184
  %v191 = vadd.f32 %v174, %v184
  %v192 = vadd.f32 %v179, %v184
  %v193 = vmul.f32 %v185, 0.2
  %v194 = vmul.f32 %v186, 0.2
  %v195 = vmul.f32 %v187, 0.2
  %v196 = vmul.f32 %v188, 0.2
  %v197 = vmul.f32 %v189, 0.2
  %v198 = vmul.f32 %v190, 0.2
  %v199 = vmul.f32 %v191, 0.2
  %v200 = vmul.f32 %v192, 0.2
  %v201 = vmax.f32 %v185, %v193
  %v202 = vmax.f32 %v186, %v194
  %v203 = vmax.f32 %v187, %v195
  %v204 = vmax.f32 %v188, %v196
  %v205 = vmax.f32 %v189, %v197
  %v206 = vmax.f32 %v190, %v198
  %v207 = vmax.f32 %v191, %v199
  %v208 = vmax.f32 %v192, %v200
  %v209 = vsel %vm69, %v201, -1e+30
  %v210 = vsel %vm70, %v202, -1e+30
  %v211 = vsel %vm71, %v203, -1e+30
  %v212 = vsel %vm72, %v204, -1e+30
  %v213 = vsel %vm73, %v205, -1e+30
  %v214 = vsel %vm74, %v206, -1e+30
  %v215 = vsel %vm75, %v207, -1e+30
  %v216 = vsel %vm76, %v208, -1e+30
  %vm217 = vcmask 523264
  %v218 = vsel %vm217, %v209, -inf
  %219 = vmax.xlane.f32.xlu0 %v218
  %v220 = vpop.xlane.xlu0 %219
  %v221 = vsel %vm217, %v210, -inf
  %222 = vmax.xlane.f32.xlu0 %v221
  %v223 = vpop.xlane.xlu0 %222
  %v224 = vsel %vm217, %v211, -inf
  %225 = vmax.xlane.f32.xlu0 %v224
  %v226 = vpop.xlane.xlu0 %225
  %v227 = vsel %vm217, %v212, -inf
  %228 = vmax.xlane.f32.xlu0 %v227
  %v229 = vpop.xlane.xlu0 %228
  %v230 = vsel %vm217, %v213, -inf
  %231 = vmax.xlane.f32.xlu0 %v230
  %v232 = vpop.xlane.xlu0 %231
  %v233 = vsel %vm217, %v214, -inf
  %234 = vmax.xlane.f32.xlu0 %v233
  %v235 = vpop.xlane.xlu0 %234
  %v236 = vsel %vm217, %v215, -inf
  %237 = vmax.xlane.f32.xlu0 %v236
  %v238 = vpop.xlane.xlu0 %237
  %v239 = vsel %vm217, %v216, -inf
  %240 = vmax.xlane.f32.xlu0 %v239
  %v241 = vpop.xlane.xlu0 %240
  %v242 = vmax.f32 %v133, %v220
  %v243 = vmax.f32 %v134, %v223
  %v244 = vmax.f32 %v135, %v226
  %v245 = vmax.f32 %v136, %v229
  %v246 = vmax.f32 %v137, %v232
  %v247 = vmax.f32 %v138, %v235
  %v248 = vmax.f32 %v139, %v238
  %v249 = vmax.f32 %v140, %v241
  %251 = vset.pattern.permute.xlu0 0
  %252 = vperm.xlu0 %251, %v242
  %v253 = vpop.permute.xlu0 %252
  %256 = vset.pattern.permute.xlu0 0
  %257 = vperm.xlu0 %256, %v243
  %v258 = vpop.permute.xlu0 %257
  %261 = vset.pattern.permute.xlu0 0
  %262 = vperm.xlu0 %261, %v244
  %v263 = vpop.permute.xlu0 %262
  %266 = vset.pattern.permute.xlu0 0
  %267 = vperm.xlu0 %266, %v245
  %v268 = vpop.permute.xlu0 %267
  %271 = vset.pattern.permute.xlu0 0
  %272 = vperm.xlu0 %271, %v246
  %v273 = vpop.permute.xlu0 %272
  %276 = vset.pattern.permute.xlu0 0
  %277 = vperm.xlu0 %276, %v247
  %v278 = vpop.permute.xlu0 %277
  %281 = vset.pattern.permute.xlu0 0
  %282 = vperm.xlu0 %281, %v248
  %v283 = vpop.permute.xlu0 %282
  %286 = vset.pattern.permute.xlu0 0
  %287 = vperm.xlu0 %286, %v249
  %v288 = vpop.permute.xlu0 %287
  %v290 = vsub.f32 %v209, %v253
  %v291 = vsub.f32 %v210, %v258
  %v292 = vsub.f32 %v211, %v263
  %v293 = vsub.f32 %v212, %v268
  %v294 = vsub.f32 %v213, %v273
  %v295 = vsub.f32 %v214, %v278
  %v296 = vsub.f32 %v215, %v283
  %v297 = vsub.f32 %v216, %v288
  %v298 = vmul.f32 %v290, 1.442695
  %v299 = vpow.pop %v298
  %v300 = vmul.f32 %v291, 1.442695
  %v301 = vpow.pop %v300
  %v302 = vmul.f32 %v292, 1.442695
  %v303 = vpow.pop %v302
  %v304 = vmul.f32 %v293, 1.442695
  %v305 = vpow.pop %v304
  %v306 = vmul.f32 %v294, 1.442695
  %v307 = vpow.pop %v306
  %v308 = vmul.f32 %v295, 1.442695
  %v309 = vpow.pop %v308
  %v310 = vmul.f32 %v296, 1.442695
  %v311 = vpow.pop %v310
  %v312 = vmul.f32 %v297, 1.442695
  %v313 = vpow.pop %v312
  %v314 = vsel %vm217, %v299, 0.0
  %315 = vadd.xlane.f32.xlu0 %v314
  %v316 = vpop.xlane.xlu0 %315
  %v317 = vsel %vm217, %v301, 0.0
  %318 = vadd.xlane.f32.xlu0 %v317
  %v319 = vpop.xlane.xlu0 %318
  %v320 = vsel %vm217, %v303, 0.0
  %321 = vadd.xlane.f32.xlu0 %v320
  %v322 = vpop.xlane.xlu0 %321
  %v323 = vsel %vm217, %v305, 0.0
  %324 = vadd.xlane.f32.xlu0 %v323
  %v325 = vpop.xlane.xlu0 %324
  %v326 = vsel %vm217, %v307, 0.0
  %327 = vadd.xlane.f32.xlu0 %v326
  %v328 = vpop.xlane.xlu0 %327
  %v329 = vsel %vm217, %v309, 0.0
  %330 = vadd.xlane.f32.xlu0 %v329
  %v331 = vpop.xlane.xlu0 %330
  %v332 = vsel %vm217, %v311, 0.0
  %333 = vadd.xlane.f32.xlu0 %v332
  %v334 = vpop.xlane.xlu0 %333
  %v335 = vsel %vm217, %v313, 0.0
  %336 = vadd.xlane.f32.xlu0 %v335
  %v337 = vpop.xlane.xlu0 %336
  %v338 = vpack.c.bf16 %v301, %v299
  %v339 = vpack.c.bf16 %v305, %v303
  %v340 = vpack.c.bf16 %v309, %v307
  %v341 = vpack.c.bf16 %v313, %v311
  %v350 = vunpack.c.l.b16 %v125
  %v351 = vunpack.c.l.b16 %v126
  %v352 = vunpack.c.l.b16 %v127
  %v353 = vunpack.c.l.b16 %v128
  %v354 = vunpack.c.l.b16 %v129
  %v355 = vunpack.c.l.b16 %v130
  %v356 = vunpack.c.l.b16 %v131
  %v357 = vunpack.c.l.b16 %v132
  %v358 = vpack.c.b16 %v351, %v350
  %v359 = vpack.c.b16 %v353, %v352
  %v360 = vpack.c.b16 %v355, %v354
  %v361 = vpack.c.b16 %v357, %v356
  %v367 = vsel %vm217, %v338, 0
  %v370 = vsel %vm217, %v339, 0
  %v373 = vsel %vm217, %v340, 0
  %v376 = vsel %vm217, %v341, 0
  %378 = vmatprep.subr.bf16.mxu0 0
  %379 = vmatpush1.bf16.msra.mxu0 %v358
  %380 = vmatprep.subr.bf16.mxu0 0
  %381 = vmatpush1.bf16.msra.mxu0 %v359
  %382 = vmatprep.subr.bf16.mxu0 0
  %383 = vmatpush1.bf16.msra.mxu0 %v360
  %384 = vmatprep.subr.bf16.mxu0 0
  %385 = vmatpush1.bf16.msra.mxu0 %v361
  %386 = vmatprep.subr.bf16.mxu0 0
  %387 = vmatpush1.bf16.msra.mxu0 0
  %388 = vmatprep.subr.bf16.mxu0 0
  %389 = vmatpush1.bf16.msra.mxu0 0
  %390 = vmatprep.subr.bf16.mxu0 0
  %391 = vmatpush1.bf16.msra.mxu0 0
  %392 = vmatprep.subr.bf16.mxu0 0
  %393 = vmatpush1.bf16.msra.mxu0 0
  %394 = vmatprep.subr.bf16.mxu0 0
  %395 = vmatpush1.bf16.msra.mxu0 0
  %396 = vmatprep.subr.bf16.mxu0 0
  %397 = vmatpush1.bf16.msra.mxu0 0
  %398 = vmatprep.subr.bf16.mxu0 0
  %399 = vmatpush1.bf16.msra.mxu0 0
  %400 = vmatprep.subr.bf16.mxu0 0
  %401 = vmatpush1.bf16.msra.mxu0 0
  %402 = vmatprep.subr.bf16.mxu0 0
  %403 = vmatpush1.bf16.msra.mxu0 0
  %404 = vmatprep.subr.bf16.mxu0 0
  %405 = vmatpush1.bf16.msra.mxu0 0
  %406 = vmatprep.subr.bf16.mxu0 0
  %407 = vmatpush1.bf16.msra.mxu0 0
  %408 = vmatprep.subr.bf16.mxu0 0
  %409 = vmatpush1.bf16.msra.mxu0 0
  %410 = vmatprep.mubr.bf16.mxu0 0
  %411 = vmatmul.mubr.bf16.gmra.mrb[0].mxu0 %v367
  %v412 = vpop.f32.mrb[0].mxu0
  %v413 = vadd.f32 0.0, %v412
  %v414 = vpop.f32.mrb[0].mxu0
  %v415 = vpop.f32.mrb[0].mxu0
  %v416 = vadd.f32 0.0, %v415
  %v417 = vpop.f32.mrb[0].mxu0
  %418 = vmatprep.mubr.bf16.mxu0 0
  %419 = vmatmul.mubr.bf16.gmra.mrb[0].mxu0 %v370
  %v420 = vpop.f32.mrb[0].mxu0
  %v421 = vadd.f32 0.0, %v420
  %v422 = vpop.f32.mrb[0].mxu0
  %v423 = vpop.f32.mrb[0].mxu0
  %v424 = vadd.f32 0.0, %v423
  %v425 = vpop.f32.mrb[0].mxu0
  %426 = vmatprep.mubr.bf16.mxu0 0
  %427 = vmatmul.mubr.bf16.gmra.mrb[0].mxu0 %v373
  %v428 = vpop.f32.mrb[0].mxu0
  %v429 = vadd.f32 0.0, %v428
  %v430 = vpop.f32.mrb[0].mxu0
  %v431 = vpop.f32.mrb[0].mxu0
  %v432 = vadd.f32 0.0, %v431
  %v433 = vpop.f32.mrb[0].mxu0
  %434 = vmatprep.mubr.bf16.mxu0 0
  %435 = vmatmul.mubr.bf16.gmra.mrb[0].mxu0 %v376
  %v436 = vpop.f32.mrb[0].mxu0
  %v437 = vadd.f32 0.0, %v436
  %v438 = vpop.f32.mrb[0].mxu0
  %v439 = vpop.f32.mrb[0].mxu0
  %v440 = vadd.f32 0.0, %v439
  %v441 = vpop.f32.mrb[0].mxu0
  %442 = vdwg.mxu0
  %443 = vset.pattern.permute.xlu0 1
  %444 = vperm.xlu0 %443, %v77
  %v445 = vpop.permute.xlu0 %444
  %447 = vset.pattern.permute.xlu0 1
  %448 = vperm.xlu0 %447, %v78
  %v449 = vpop.permute.xlu0 %448
  %451 = vset.pattern.permute.xlu0 1
  %452 = vperm.xlu0 %451, %v79
  %v453 = vpop.permute.xlu0 %452
  %455 = vset.pattern.permute.xlu0 1
  %456 = vperm.xlu0 %455, %v80
  %v457 = vpop.permute.xlu0 %456
  %459 = vset.pattern.permute.xlu0 1
  %460 = vperm.xlu0 %459, %v81
  %v461 = vpop.permute.xlu0 %460
  %463 = vset.pattern.permute.xlu0 1
  %464 = vperm.xlu0 %463, %v82
  %v465 = vpop.permute.xlu0 %464
  %467 = vset.pattern.permute.xlu0 1
  %468 = vperm.xlu0 %467, %v83
  %v469 = vpop.permute.xlu0 %468
  %471 = vset.pattern.permute.xlu0 1
  %472 = vperm.xlu0 %471, %v84
  %v473 = vpop.permute.xlu0 %472
  %v475 = vlaneseq
  %v476 = vshrl.u32 %v475, 7
  %v477 = vsub.s32 1, %v476
  %v478 = vrot.slane %v109, %v477
  %v479 = vadd.f32 %v445, %v478
  %v480 = vadd.f32 %v449, %v478
  %v481 = vadd.f32 %v453, %v478
  %v482 = vadd.f32 %v457, %v478
  %v483 = vadd.f32 %v461, %v478
  %v484 = vadd.f32 %v465, %v478
  %v485 = vadd.f32 %v469, %v478
  %v486 = vadd.f32 %v473, %v478
  %v487 = vmul.f32 %v479, 0.2
  %v488 = vmul.f32 %v480, 0.2
  %v489 = vmul.f32 %v481, 0.2
  %v490 = vmul.f32 %v482, 0.2
  %v491 = vmul.f32 %v483, 0.2
  %v492 = vmul.f32 %v484, 0.2
  %v493 = vmul.f32 %v485, 0.2
  %v494 = vmul.f32 %v486, 0.2
  %v495 = vmax.f32 %v479, %v487
  %v496 = vmax.f32 %v480, %v488
  %v497 = vmax.f32 %v481, %v489
  %v498 = vmax.f32 %v482, %v490
  %v499 = vmax.f32 %v483, %v491
  %v500 = vmax.f32 %v484, %v492
  %v501 = vmax.f32 %v485, %v493
  %v502 = vmax.f32 %v486, %v494
  %v503 = vsel %vm69, %v495, -1e+30
  %v504 = vsel %vm70, %v496, -1e+30
  %v505 = vsel %vm71, %v497, -1e+30
  %v506 = vsel %vm72, %v498, -1e+30
  %v507 = vsel %vm73, %v499, -1e+30
  %v508 = vsel %vm74, %v500, -1e+30
  %v509 = vsel %vm75, %v501, -1e+30
  %v510 = vsel %vm76, %v502, -1e+30
  %v511 = vsel %vm217, %v503, -inf
  %512 = vmax.xlane.f32.xlu0 %v511
  %v513 = vpop.xlane.xlu0 %512
  %v514 = vsel %vm217, %v504, -inf
  %515 = vmax.xlane.f32.xlu0 %v514
  %v516 = vpop.xlane.xlu0 %515
  %v517 = vsel %vm217, %v505, -inf
  %518 = vmax.xlane.f32.xlu0 %v517
  %v519 = vpop.xlane.xlu0 %518
  %v520 = vsel %vm217, %v506, -inf
  %521 = vmax.xlane.f32.xlu0 %v520
  %v522 = vpop.xlane.xlu0 %521
  %v523 = vsel %vm217, %v507, -inf
  %524 = vmax.xlane.f32.xlu0 %v523
  %v525 = vpop.xlane.xlu0 %524
  %v526 = vsel %vm217, %v508, -inf
  %527 = vmax.xlane.f32.xlu0 %v526
  %v528 = vpop.xlane.xlu0 %527
  %v529 = vsel %vm217, %v509, -inf
  %530 = vmax.xlane.f32.xlu0 %v529
  %v531 = vpop.xlane.xlu0 %530
  %v532 = vsel %vm217, %v510, -inf
  %533 = vmax.xlane.f32.xlu0 %v532
  %v534 = vpop.xlane.xlu0 %533
  %v535 = vmax.f32 %v133, %v513
  %v536 = vmax.f32 %v134, %v516
  %v537 = vmax.f32 %v135, %v519
  %v538 = vmax.f32 %v136, %v522
  %v539 = vmax.f32 %v137, %v525
  %v540 = vmax.f32 %v138, %v528
  %v541 = vmax.f32 %v139, %v531
  %v542 = vmax.f32 %v140, %v534
  %544 = vset.pattern.permute.xlu0 1
  %545 = vperm.xlu0 %544, %v535
  %v546 = vpop.permute.xlu0 %545
  %549 = vset.pattern.permute.xlu0 1
  %550 = vperm.xlu0 %549, %v536
  %v551 = vpop.permute.xlu0 %550
  %554 = vset.pattern.permute.xlu0 1
  %555 = vperm.xlu0 %554, %v537
  %v556 = vpop.permute.xlu0 %555
  %559 = vset.pattern.permute.xlu0 1
  %560 = vperm.xlu0 %559, %v538
  %v561 = vpop.permute.xlu0 %560
  %564 = vset.pattern.permute.xlu0 1
  %565 = vperm.xlu0 %564, %v539
  %v566 = vpop.permute.xlu0 %565
  %569 = vset.pattern.permute.xlu0 1
  %570 = vperm.xlu0 %569, %v540
  %v571 = vpop.permute.xlu0 %570
  %574 = vset.pattern.permute.xlu0 1
  %575 = vperm.xlu0 %574, %v541
  %v576 = vpop.permute.xlu0 %575
  %579 = vset.pattern.permute.xlu0 1
  %580 = vperm.xlu0 %579, %v542
  %v581 = vpop.permute.xlu0 %580
  %v583 = vsub.f32 %v503, %v546
  %v584 = vsub.f32 %v504, %v551
  %v585 = vsub.f32 %v505, %v556
  %v586 = vsub.f32 %v506, %v561
  %v587 = vsub.f32 %v507, %v566
  %v588 = vsub.f32 %v508, %v571
  %v589 = vsub.f32 %v509, %v576
  %v590 = vsub.f32 %v510, %v581
  %v591 = vmul.f32 %v583, 1.442695
  %v592 = vpow.pop %v591
  %v593 = vmul.f32 %v584, 1.442695
  %v594 = vpow.pop %v593
  %v595 = vmul.f32 %v585, 1.442695
  %v596 = vpow.pop %v595
  %v597 = vmul.f32 %v586, 1.442695
  %v598 = vpow.pop %v597
  %v599 = vmul.f32 %v587, 1.442695
  %v600 = vpow.pop %v599
  %v601 = vmul.f32 %v588, 1.442695
  %v602 = vpow.pop %v601
  %v603 = vmul.f32 %v589, 1.442695
  %v604 = vpow.pop %v603
  %v605 = vmul.f32 %v590, 1.442695
  %v606 = vpow.pop %v605
  %v607 = vsel %vm217, %v592, 0.0
  %608 = vadd.xlane.f32.xlu0 %v607
  %v609 = vpop.xlane.xlu0 %608
  %v610 = vsel %vm217, %v594, 0.0
  %611 = vadd.xlane.f32.xlu0 %v610
  %v612 = vpop.xlane.xlu0 %611
  %v613 = vsel %vm217, %v596, 0.0
  %614 = vadd.xlane.f32.xlu0 %v613
  %v615 = vpop.xlane.xlu0 %614
  %v616 = vsel %vm217, %v598, 0.0
  %617 = vadd.xlane.f32.xlu0 %v616
  %v618 = vpop.xlane.xlu0 %617
  %v619 = vsel %vm217, %v600, 0.0
  %620 = vadd.xlane.f32.xlu0 %v619
  %v621 = vpop.xlane.xlu0 %620
  %v622 = vsel %vm217, %v602, 0.0
  %623 = vadd.xlane.f32.xlu0 %v622
  %v624 = vpop.xlane.xlu0 %623
  %v625 = vsel %vm217, %v604, 0.0
  %626 = vadd.xlane.f32.xlu0 %v625
  %v627 = vpop.xlane.xlu0 %626
  %v628 = vsel %vm217, %v606, 0.0
  %629 = vadd.xlane.f32.xlu0 %v628
  %v630 = vpop.xlane.xlu0 %629
  %v631 = vpack.c.bf16 %v594, %v592
  %v632 = vpack.c.bf16 %v598, %v596
  %v633 = vpack.c.bf16 %v602, %v600
  %v634 = vpack.c.bf16 %v606, %v604
  %635 = vrot.lane.b32.xlu0 %v358, 120
  %v636 = vpop.permute.xlu0 %635
  %637 = vrot.lane.b32.xlu0 %v359, 120
  %v638 = vpop.permute.xlu0 %637
  %639 = vrot.lane.b32.xlu0 %v360, 120
  %v640 = vpop.permute.xlu0 %639
  %641 = vrot.lane.b32.xlu0 %v361, 120
  %v642 = vpop.permute.xlu0 %641
  %v648 = vsel %vm217, %v631, 0
  %v651 = vsel %vm217, %v632, 0
  %v654 = vsel %vm217, %v633, 0
  %v657 = vsel %vm217, %v634, 0
  %659 = vmatprep.subr.bf16.mxu0 0
  %660 = vmatpush1.bf16.msra.mxu0 %v636
  %661 = vmatprep.subr.bf16.mxu0 0
  %662 = vmatpush1.bf16.msra.mxu0 %v638
  %663 = vmatprep.subr.bf16.mxu0 0
  %664 = vmatpush1.bf16.msra.mxu0 %v640
  %665 = vmatprep.subr.bf16.mxu0 0
  %666 = vmatpush1.bf16.msra.mxu0 %v642
  %667 = vmatprep.subr.bf16.mxu0 0
  %668 = vmatpush1.bf16.msra.mxu0 0
  %669 = vmatprep.subr.bf16.mxu0 0
  %670 = vmatpush1.bf16.msra.mxu0 0
  %671 = vmatprep.subr.bf16.mxu0 0
  %672 = vmatpush1.bf16.msra.mxu0 0
  %673 = vmatprep.subr.bf16.mxu0 0
  %674 = vmatpush1.bf16.msra.mxu0 0
  %675 = vmatprep.subr.bf16.mxu0 0
  %676 = vmatpush1.bf16.msra.mxu0 0
  %677 = vmatprep.subr.bf16.mxu0 0
  %678 = vmatpush1.bf16.msra.mxu0 0
  %679 = vmatprep.subr.bf16.mxu0 0
  %680 = vmatpush1.bf16.msra.mxu0 0
  %681 = vmatprep.subr.bf16.mxu0 0
  %682 = vmatpush1.bf16.msra.mxu0 0
  %683 = vmatprep.subr.bf16.mxu0 0
  %684 = vmatpush1.bf16.msra.mxu0 0
  %685 = vmatprep.subr.bf16.mxu0 0
  %686 = vmatpush1.bf16.msra.mxu0 0
  %687 = vmatprep.subr.bf16.mxu0 0
  %688 = vmatpush1.bf16.msra.mxu0 0
  %689 = vmatprep.subr.bf16.mxu0 0
  %690 = vmatpush1.bf16.msra.mxu0 0
  %691 = vmatprep.mubr.bf16.mxu0 0
  %692 = vmatmul.mubr.bf16.gmra.mrb[0].mxu0 %v648
  %v693 = vpop.f32.mrb[0].mxu0
  %v694 = vadd.f32 0.0, %v693
  %v695 = vpop.f32.mrb[0].mxu0
  %v696 = vpop.f32.mrb[0].mxu0
  %v697 = vadd.f32 0.0, %v696
  %v698 = vpop.f32.mrb[0].mxu0
  %699 = vmatprep.mubr.bf16.mxu0 0
  %700 = vmatmul.mubr.bf16.gmra.mrb[0].mxu0 %v651
  %v701 = vpop.f32.mrb[0].mxu0
  %v702 = vadd.f32 0.0, %v701
  %v703 = vpop.f32.mrb[0].mxu0
  %v704 = vpop.f32.mrb[0].mxu0
  %v705 = vadd.f32 0.0, %v704
  %v706 = vpop.f32.mrb[0].mxu0
  %707 = vmatprep.mubr.bf16.mxu0 0
  %708 = vmatmul.mubr.bf16.gmra.mrb[0].mxu0 %v654
  %v709 = vpop.f32.mrb[0].mxu0
  %v710 = vadd.f32 0.0, %v709
  %v711 = vpop.f32.mrb[0].mxu0
  %v712 = vpop.f32.mrb[0].mxu0
  %v713 = vadd.f32 0.0, %v712
  %v714 = vpop.f32.mrb[0].mxu0
  %715 = vmatprep.mubr.bf16.mxu0 0
  %716 = vmatmul.mubr.bf16.gmra.mrb[0].mxu0 %v657
  %v717 = vpop.f32.mrb[0].mxu0
  %v718 = vadd.f32 0.0, %v717
  %v719 = vpop.f32.mrb[0].mxu0
  %v720 = vpop.f32.mrb[0].mxu0
  %v721 = vadd.f32 0.0, %v720
  %v722 = vpop.f32.mrb[0].mxu0
  %723 = vdwg.mxu0
  %724 = vset.pattern.permute.xlu0 2
  %725 = vperm.xlu0 %724, %v77
  %v726 = vpop.permute.xlu0 %725
  %728 = vset.pattern.permute.xlu0 2
  %729 = vperm.xlu0 %728, %v78
  %v730 = vpop.permute.xlu0 %729
  %732 = vset.pattern.permute.xlu0 2
  %733 = vperm.xlu0 %732, %v79
  %v734 = vpop.permute.xlu0 %733
  %736 = vset.pattern.permute.xlu0 2
  %737 = vperm.xlu0 %736, %v80
  %v738 = vpop.permute.xlu0 %737
  %740 = vset.pattern.permute.xlu0 2
  %741 = vperm.xlu0 %740, %v81
  %v742 = vpop.permute.xlu0 %741
  %744 = vset.pattern.permute.xlu0 2
  %745 = vperm.xlu0 %744, %v82
  %v746 = vpop.permute.xlu0 %745
  %748 = vset.pattern.permute.xlu0 2
  %749 = vperm.xlu0 %748, %v83
  %v750 = vpop.permute.xlu0 %749
  %752 = vset.pattern.permute.xlu0 2
  %753 = vperm.xlu0 %752, %v84
  %v754 = vpop.permute.xlu0 %753
  %v756 = vlaneseq
  %v757 = vshrl.u32 %v756, 7
  %v758 = vsub.s32 2, %v757
  %v759 = vrot.slane %v109, %v758
  %v760 = vadd.f32 %v726, %v759
  %v761 = vadd.f32 %v730, %v759
  %v762 = vadd.f32 %v734, %v759
  %v763 = vadd.f32 %v738, %v759
  %v764 = vadd.f32 %v742, %v759
  %v765 = vadd.f32 %v746, %v759
  %v766 = vadd.f32 %v750, %v759
  %v767 = vadd.f32 %v754, %v759
  %v768 = vmul.f32 %v760, 0.2
  %v769 = vmul.f32 %v761, 0.2
  %v770 = vmul.f32 %v762, 0.2
  %v771 = vmul.f32 %v763, 0.2
  %v772 = vmul.f32 %v764, 0.2
  %v773 = vmul.f32 %v765, 0.2
  %v774 = vmul.f32 %v766, 0.2
  %v775 = vmul.f32 %v767, 0.2
  %v776 = vmax.f32 %v760, %v768
  %v777 = vmax.f32 %v761, %v769
  %v778 = vmax.f32 %v762, %v770
  %v779 = vmax.f32 %v763, %v771
  %v780 = vmax.f32 %v764, %v772
  %v781 = vmax.f32 %v765, %v773
  %v782 = vmax.f32 %v766, %v774
  %v783 = vmax.f32 %v767, %v775
  %v784 = vsel %vm69, %v776, -1e+30
  %v785 = vsel %vm70, %v777, -1e+30
  %v786 = vsel %vm71, %v778, -1e+30
  %v787 = vsel %vm72, %v779, -1e+30
  %v788 = vsel %vm73, %v780, -1e+30
  %v789 = vsel %vm74, %v781, -1e+30
  %v790 = vsel %vm75, %v782, -1e+30
  %v791 = vsel %vm76, %v783, -1e+30
  %v792 = vsel %vm217, %v784, -inf
  %793 = vmax.xlane.f32.xlu0 %v792
  %v794 = vpop.xlane.xlu0 %793
  %v795 = vsel %vm217, %v785, -inf
  %796 = vmax.xlane.f32.xlu0 %v795
  %v797 = vpop.xlane.xlu0 %796
  %v798 = vsel %vm217, %v786, -inf
  %799 = vmax.xlane.f32.xlu0 %v798
  %v800 = vpop.xlane.xlu0 %799
  %v801 = vsel %vm217, %v787, -inf
  %802 = vmax.xlane.f32.xlu0 %v801
  %v803 = vpop.xlane.xlu0 %802
  %v804 = vsel %vm217, %v788, -inf
  %805 = vmax.xlane.f32.xlu0 %v804
  %v806 = vpop.xlane.xlu0 %805
  %v807 = vsel %vm217, %v789, -inf
  %808 = vmax.xlane.f32.xlu0 %v807
  %v809 = vpop.xlane.xlu0 %808
  %v810 = vsel %vm217, %v790, -inf
  %811 = vmax.xlane.f32.xlu0 %v810
  %v812 = vpop.xlane.xlu0 %811
  %v813 = vsel %vm217, %v791, -inf
  %814 = vmax.xlane.f32.xlu0 %v813
  %v815 = vpop.xlane.xlu0 %814
  %v816 = vmax.f32 %v133, %v794
  %v817 = vmax.f32 %v134, %v797
  %v818 = vmax.f32 %v135, %v800
  %v819 = vmax.f32 %v136, %v803
  %v820 = vmax.f32 %v137, %v806
  %v821 = vmax.f32 %v138, %v809
  %v822 = vmax.f32 %v139, %v812
  %v823 = vmax.f32 %v140, %v815
  %825 = vset.pattern.permute.xlu0 2
  %826 = vperm.xlu0 %825, %v816
  %v827 = vpop.permute.xlu0 %826
  %830 = vset.pattern.permute.xlu0 2
  %831 = vperm.xlu0 %830, %v817
  %v832 = vpop.permute.xlu0 %831
  %835 = vset.pattern.permute.xlu0 2
  %836 = vperm.xlu0 %835, %v818
  %v837 = vpop.permute.xlu0 %836
  %840 = vset.pattern.permute.xlu0 2
  %841 = vperm.xlu0 %840, %v819
  %v842 = vpop.permute.xlu0 %841
  %845 = vset.pattern.permute.xlu0 2
  %846 = vperm.xlu0 %845, %v820
  %v847 = vpop.permute.xlu0 %846
  %850 = vset.pattern.permute.xlu0 2
  %851 = vperm.xlu0 %850, %v821
  %v852 = vpop.permute.xlu0 %851
  %855 = vset.pattern.permute.xlu0 2
  %856 = vperm.xlu0 %855, %v822
  %v857 = vpop.permute.xlu0 %856
  %860 = vset.pattern.permute.xlu0 2
  %861 = vperm.xlu0 %860, %v823
  %v862 = vpop.permute.xlu0 %861
  %v864 = vsub.f32 %v784, %v827
  %v865 = vsub.f32 %v785, %v832
  %v866 = vsub.f32 %v786, %v837
  %v867 = vsub.f32 %v787, %v842
  %v868 = vsub.f32 %v788, %v847
  %v869 = vsub.f32 %v789, %v852
  %v870 = vsub.f32 %v790, %v857
  %v871 = vsub.f32 %v791, %v862
  %v872 = vmul.f32 %v864, 1.442695
  %v873 = vpow.pop %v872
  %v874 = vmul.f32 %v865, 1.442695
  %v875 = vpow.pop %v874
  %v876 = vmul.f32 %v866, 1.442695
  %v877 = vpow.pop %v876
  %v878 = vmul.f32 %v867, 1.442695
  %v879 = vpow.pop %v878
  %v880 = vmul.f32 %v868, 1.442695
  %v881 = vpow.pop %v880
  %v882 = vmul.f32 %v869, 1.442695
  %v883 = vpow.pop %v882
  %v884 = vmul.f32 %v870, 1.442695
  %v885 = vpow.pop %v884
  %v886 = vmul.f32 %v871, 1.442695
  %v887 = vpow.pop %v886
  %v888 = vsel %vm217, %v873, 0.0
  %889 = vadd.xlane.f32.xlu0 %v888
  %v890 = vpop.xlane.xlu0 %889
  %v891 = vsel %vm217, %v875, 0.0
  %892 = vadd.xlane.f32.xlu0 %v891
  %v893 = vpop.xlane.xlu0 %892
  %v894 = vsel %vm217, %v877, 0.0
  %895 = vadd.xlane.f32.xlu0 %v894
  %v896 = vpop.xlane.xlu0 %895
  %v897 = vsel %vm217, %v879, 0.0
  %898 = vadd.xlane.f32.xlu0 %v897
  %v899 = vpop.xlane.xlu0 %898
  %v900 = vsel %vm217, %v881, 0.0
  %901 = vadd.xlane.f32.xlu0 %v900
  %v902 = vpop.xlane.xlu0 %901
  %v903 = vsel %vm217, %v883, 0.0
  %904 = vadd.xlane.f32.xlu0 %v903
  %v905 = vpop.xlane.xlu0 %904
  %v906 = vsel %vm217, %v885, 0.0
  %907 = vadd.xlane.f32.xlu0 %v906
  %v908 = vpop.xlane.xlu0 %907
  %v909 = vsel %vm217, %v887, 0.0
  %910 = vadd.xlane.f32.xlu0 %v909
  %v911 = vpop.xlane.xlu0 %910
  %v912 = vpack.c.bf16 %v875, %v873
  %v913 = vpack.c.bf16 %v879, %v877
  %v914 = vpack.c.bf16 %v883, %v881
  %v915 = vpack.c.bf16 %v887, %v885
  %916 = vrot.lane.b32.xlu0 %v358, 112
  %v917 = vpop.permute.xlu0 %916
  %918 = vrot.lane.b32.xlu0 %v359, 112
  %v919 = vpop.permute.xlu0 %918
  %920 = vrot.lane.b32.xlu0 %v360, 112
  %v921 = vpop.permute.xlu0 %920
  %922 = vrot.lane.b32.xlu0 %v361, 112
  %v923 = vpop.permute.xlu0 %922
  %v929 = vsel %vm217, %v912, 0
  %v932 = vsel %vm217, %v913, 0
  %v935 = vsel %vm217, %v914, 0
  %v938 = vsel %vm217, %v915, 0
  %940 = vmatprep.subr.bf16.mxu0 0
  %941 = vmatpush1.bf16.msra.mxu0 %v917
  %942 = vmatprep.subr.bf16.mxu0 0
  %943 = vmatpush1.bf16.msra.mxu0 %v919
  %944 = vmatprep.subr.bf16.mxu0 0
  %945 = vmatpush1.bf16.msra.mxu0 %v921
  %946 = vmatprep.subr.bf16.mxu0 0
  %947 = vmatpush1.bf16.msra.mxu0 %v923
  %948 = vmatprep.subr.bf16.mxu0 0
  %949 = vmatpush1.bf16.msra.mxu0 0
  %950 = vmatprep.subr.bf16.mxu0 0
  %951 = vmatpush1.bf16.msra.mxu0 0
  %952 = vmatprep.subr.bf16.mxu0 0
  %953 = vmatpush1.bf16.msra.mxu0 0
  %954 = vmatprep.subr.bf16.mxu0 0
  %955 = vmatpush1.bf16.msra.mxu0 0
  %956 = vmatprep.subr.bf16.mxu0 0
  %957 = vmatpush1.bf16.msra.mxu0 0
  %958 = vmatprep.subr.bf16.mxu0 0
  %959 = vmatpush1.bf16.msra.mxu0 0
  %960 = vmatprep.subr.bf16.mxu0 0
  %961 = vmatpush1.bf16.msra.mxu0 0
  %962 = vmatprep.subr.bf16.mxu0 0
  %963 = vmatpush1.bf16.msra.mxu0 0
  %964 = vmatprep.subr.bf16.mxu0 0
  %965 = vmatpush1.bf16.msra.mxu0 0
  %966 = vmatprep.subr.bf16.mxu0 0
  %967 = vmatpush1.bf16.msra.mxu0 0
  %968 = vmatprep.subr.bf16.mxu0 0
  %969 = vmatpush1.bf16.msra.mxu0 0
  %970 = vmatprep.subr.bf16.mxu0 0
  %971 = vmatpush1.bf16.msra.mxu0 0
  %972 = vmatprep.mubr.bf16.mxu0 0
  %973 = vmatmul.mubr.bf16.gmra.mrb[0].mxu0 %v929
  %v974 = vpop.f32.mrb[0].mxu0
  %v975 = vadd.f32 0.0, %v974
  %v976 = vpop.f32.mrb[0].mxu0
  %v977 = vpop.f32.mrb[0].mxu0
  %v978 = vadd.f32 0.0, %v977
  %v979 = vpop.f32.mrb[0].mxu0
  %980 = vmatprep.mubr.bf16.mxu0 0
  %981 = vmatmul.mubr.bf16.gmra.mrb[0].mxu0 %v932
  %v982 = vpop.f32.mrb[0].mxu0
  %v983 = vadd.f32 0.0, %v982
  %v984 = vpop.f32.mrb[0].mxu0
  %v985 = vpop.f32.mrb[0].mxu0
  %v986 = vadd.f32 0.0, %v985
  %v987 = vpop.f32.mrb[0].mxu0
  %988 = vmatprep.mubr.bf16.mxu0 0
  %989 = vmatmul.mubr.bf16.gmra.mrb[0].mxu0 %v935
  %v990 = vpop.f32.mrb[0].mxu0
  %v991 = vadd.f32 0.0, %v990
  %v992 = vpop.f32.mrb[0].mxu0
  %v993 = vpop.f32.mrb[0].mxu0
  %v994 = vadd.f32 0.0, %v993
  %v995 = vpop.f32.mrb[0].mxu0
  %996 = vmatprep.mubr.bf16.mxu0 0
  %997 = vmatmul.mubr.bf16.gmra.mrb[0].mxu0 %v938
  %v998 = vpop.f32.mrb[0].mxu0
  %v999 = vadd.f32 0.0, %v998
  %v1000 = vpop.f32.mrb[0].mxu0
  %v1001 = vpop.f32.mrb[0].mxu0
  %v1002 = vadd.f32 0.0, %v1001
  %v1003 = vpop.f32.mrb[0].mxu0
  %1004 = vdwg.mxu0
  %1005 = vset.pattern.permute.xlu0 3
  %1006 = vperm.xlu0 %1005, %v77
  %v1007 = vpop.permute.xlu0 %1006
  %1009 = vset.pattern.permute.xlu0 3
  %1010 = vperm.xlu0 %1009, %v78
  %v1011 = vpop.permute.xlu0 %1010
  %1013 = vset.pattern.permute.xlu0 3
  %1014 = vperm.xlu0 %1013, %v79
  %v1015 = vpop.permute.xlu0 %1014
  %1017 = vset.pattern.permute.xlu0 3
  %1018 = vperm.xlu0 %1017, %v80
  %v1019 = vpop.permute.xlu0 %1018
  %1021 = vset.pattern.permute.xlu0 3
  %1022 = vperm.xlu0 %1021, %v81
  %v1023 = vpop.permute.xlu0 %1022
  %1025 = vset.pattern.permute.xlu0 3
  %1026 = vperm.xlu0 %1025, %v82
  %v1027 = vpop.permute.xlu0 %1026
  %1029 = vset.pattern.permute.xlu0 3
  %1030 = vperm.xlu0 %1029, %v83
  %v1031 = vpop.permute.xlu0 %1030
  %1033 = vset.pattern.permute.xlu0 3
  %1034 = vperm.xlu0 %1033, %v84
  %v1035 = vpop.permute.xlu0 %1034
  %v1037 = vlaneseq
  %v1038 = vshrl.u32 %v1037, 7
  %v1039 = vsub.s32 3, %v1038
  %v1040 = vrot.slane %v109, %v1039
  %v1041 = vadd.f32 %v1007, %v1040
  %v1042 = vadd.f32 %v1011, %v1040
  %v1043 = vadd.f32 %v1015, %v1040
  %v1044 = vadd.f32 %v1019, %v1040
  %v1045 = vadd.f32 %v1023, %v1040
  %v1046 = vadd.f32 %v1027, %v1040
  %v1047 = vadd.f32 %v1031, %v1040
  %v1048 = vadd.f32 %v1035, %v1040
  %v1049 = vmul.f32 %v1041, 0.2
  %v1050 = vmul.f32 %v1042, 0.2
  %v1051 = vmul.f32 %v1043, 0.2
  %v1052 = vmul.f32 %v1044, 0.2
  %v1053 = vmul.f32 %v1045, 0.2
  %v1054 = vmul.f32 %v1046, 0.2
  %v1055 = vmul.f32 %v1047, 0.2
  %v1056 = vmul.f32 %v1048, 0.2
  %v1057 = vmax.f32 %v1041, %v1049
  %v1058 = vmax.f32 %v1042, %v1050
  %v1059 = vmax.f32 %v1043, %v1051
  %v1060 = vmax.f32 %v1044, %v1052
  %v1061 = vmax.f32 %v1045, %v1053
  %v1062 = vmax.f32 %v1046, %v1054
  %v1063 = vmax.f32 %v1047, %v1055
  %v1064 = vmax.f32 %v1048, %v1056
  %v1065 = vsel %vm69, %v1057, -1e+30
  %v1066 = vsel %vm70, %v1058, -1e+30
  %v1067 = vsel %vm71, %v1059, -1e+30
  %v1068 = vsel %vm72, %v1060, -1e+30
  %v1069 = vsel %vm73, %v1061, -1e+30
  %v1070 = vsel %vm74, %v1062, -1e+30
  %v1071 = vsel %vm75, %v1063, -1e+30
  %v1072 = vsel %vm76, %v1064, -1e+30
  %v1073 = vsel %vm217, %v1065, -inf
  %1074 = vmax.xlane.f32.xlu0 %v1073
  %v1075 = vpop.xlane.xlu0 %1074
  %v1076 = vsel %vm217, %v1066, -inf
  %1077 = vmax.xlane.f32.xlu0 %v1076
  %v1078 = vpop.xlane.xlu0 %1077
  %v1079 = vsel %vm217, %v1067, -inf
  %1080 = vmax.xlane.f32.xlu0 %v1079
  %v1081 = vpop.xlane.xlu0 %1080
  %v1082 = vsel %vm217, %v1068, -inf
  %1083 = vmax.xlane.f32.xlu0 %v1082
  %v1084 = vpop.xlane.xlu0 %1083
  %v1085 = vsel %vm217, %v1069, -inf
  %1086 = vmax.xlane.f32.xlu0 %v1085
  %v1087 = vpop.xlane.xlu0 %1086
  %v1088 = vsel %vm217, %v1070, -inf
  %1089 = vmax.xlane.f32.xlu0 %v1088
  %v1090 = vpop.xlane.xlu0 %1089
  %v1091 = vsel %vm217, %v1071, -inf
  %1092 = vmax.xlane.f32.xlu0 %v1091
  %v1093 = vpop.xlane.xlu0 %1092
  %v1094 = vsel %vm217, %v1072, -inf
  %1095 = vmax.xlane.f32.xlu0 %v1094
  %v1096 = vpop.xlane.xlu0 %1095
  %v1097 = vmax.f32 %v133, %v1075
  %v1098 = vmax.f32 %v134, %v1078
  %v1099 = vmax.f32 %v135, %v1081
  %v1100 = vmax.f32 %v136, %v1084
  %v1101 = vmax.f32 %v137, %v1087
  %v1102 = vmax.f32 %v138, %v1090
  %v1103 = vmax.f32 %v139, %v1093
  %v1104 = vmax.f32 %v140, %v1096
  %1106 = vset.pattern.permute.xlu0 3
  %1107 = vperm.xlu0 %1106, %v1097
  %v1108 = vpop.permute.xlu0 %1107
  %1111 = vset.pattern.permute.xlu0 3
  %1112 = vperm.xlu0 %1111, %v1098
  %v1113 = vpop.permute.xlu0 %1112
  %1116 = vset.pattern.permute.xlu0 3
  %1117 = vperm.xlu0 %1116, %v1099
  %v1118 = vpop.permute.xlu0 %1117
  %1121 = vset.pattern.permute.xlu0 3
  %1122 = vperm.xlu0 %1121, %v1100
  %v1123 = vpop.permute.xlu0 %1122
  %1126 = vset.pattern.permute.xlu0 3
  %1127 = vperm.xlu0 %1126, %v1101
  %v1128 = vpop.permute.xlu0 %1127
  %1131 = vset.pattern.permute.xlu0 3
  %1132 = vperm.xlu0 %1131, %v1102
  %v1133 = vpop.permute.xlu0 %1132
  %1136 = vset.pattern.permute.xlu0 3
  %1137 = vperm.xlu0 %1136, %v1103
  %v1138 = vpop.permute.xlu0 %1137
  %1141 = vset.pattern.permute.xlu0 3
  %1142 = vperm.xlu0 %1141, %v1104
  %v1143 = vpop.permute.xlu0 %1142
  %v1145 = vsub.f32 %v1065, %v1108
  %v1146 = vsub.f32 %v1066, %v1113
  %v1147 = vsub.f32 %v1067, %v1118
  %v1148 = vsub.f32 %v1068, %v1123
  %v1149 = vsub.f32 %v1069, %v1128
  %v1150 = vsub.f32 %v1070, %v1133
  %v1151 = vsub.f32 %v1071, %v1138
  %v1152 = vsub.f32 %v1072, %v1143
  %v1153 = vmul.f32 %v1145, 1.442695
  %v1154 = vpow.pop %v1153
  %v1155 = vmul.f32 %v1146, 1.442695
  %v1156 = vpow.pop %v1155
  %v1157 = vmul.f32 %v1147, 1.442695
  %v1158 = vpow.pop %v1157
  %v1159 = vmul.f32 %v1148, 1.442695
  %v1160 = vpow.pop %v1159
  %v1161 = vmul.f32 %v1149, 1.442695
  %v1162 = vpow.pop %v1161
  %v1163 = vmul.f32 %v1150, 1.442695
  %v1164 = vpow.pop %v1163
  %v1165 = vmul.f32 %v1151, 1.442695
  %v1166 = vpow.pop %v1165
  %v1167 = vmul.f32 %v1152, 1.442695
  %v1168 = vpow.pop %v1167
  %v1169 = vsel %vm217, %v1154, 0.0
  %1170 = vadd.xlane.f32.xlu0 %v1169
  %v1171 = vpop.xlane.xlu0 %1170
  %v1172 = vsel %vm217, %v1156, 0.0
  %1173 = vadd.xlane.f32.xlu0 %v1172
  %v1174 = vpop.xlane.xlu0 %1173
  %v1175 = vsel %vm217, %v1158, 0.0
  %1176 = vadd.xlane.f32.xlu0 %v1175
  %v1177 = vpop.xlane.xlu0 %1176
  %v1178 = vsel %vm217, %v1160, 0.0
  %1179 = vadd.xlane.f32.xlu0 %v1178
  %v1180 = vpop.xlane.xlu0 %1179
  %v1181 = vsel %vm217, %v1162, 0.0
  %1182 = vadd.xlane.f32.xlu0 %v1181
  %v1183 = vpop.xlane.xlu0 %1182
  %v1184 = vsel %vm217, %v1164, 0.0
  %1185 = vadd.xlane.f32.xlu0 %v1184
  %v1186 = vpop.xlane.xlu0 %1185
  %v1187 = vsel %vm217, %v1166, 0.0
  %1188 = vadd.xlane.f32.xlu0 %v1187
  %v1189 = vpop.xlane.xlu0 %1188
  %v1190 = vsel %vm217, %v1168, 0.0
  %1191 = vadd.xlane.f32.xlu0 %v1190
  %v1192 = vpop.xlane.xlu0 %1191
  %v1193 = vpack.c.bf16 %v1156, %v1154
  %v1194 = vpack.c.bf16 %v1160, %v1158
  %v1195 = vpack.c.bf16 %v1164, %v1162
  %v1196 = vpack.c.bf16 %v1168, %v1166
  %1197 = vrot.lane.b32.xlu0 %v358, 104
  %v1198 = vpop.permute.xlu0 %1197
  %1199 = vrot.lane.b32.xlu0 %v359, 104
  %v1200 = vpop.permute.xlu0 %1199
  %1201 = vrot.lane.b32.xlu0 %v360, 104
  %v1202 = vpop.permute.xlu0 %1201
  %1203 = vrot.lane.b32.xlu0 %v361, 104
  %v1204 = vpop.permute.xlu0 %1203
  %v1210 = vsel %vm217, %v1193, 0
  %v1213 = vsel %vm217, %v1194, 0
  %v1216 = vsel %vm217, %v1195, 0
  %v1219 = vsel %vm217, %v1196, 0
  %1221 = vmatprep.subr.bf16.mxu0 0
  %1222 = vmatpush1.bf16.msra.mxu0 %v1198
  %1223 = vmatprep.subr.bf16.mxu0 0
  %1224 = vmatpush1.bf16.msra.mxu0 %v1200
  %1225 = vmatprep.subr.bf16.mxu0 0
  %1226 = vmatpush1.bf16.msra.mxu0 %v1202
  %1227 = vmatprep.subr.bf16.mxu0 0
  %1228 = vmatpush1.bf16.msra.mxu0 %v1204
  %1229 = vmatprep.subr.bf16.mxu0 0
  %1230 = vmatpush1.bf16.msra.mxu0 0
  %1231 = vmatprep.subr.bf16.mxu0 0
  %1232 = vmatpush1.bf16.msra.mxu0 0
  %1233 = vmatprep.subr.bf16.mxu0 0
  %1234 = vmatpush1.bf16.msra.mxu0 0
  %1235 = vmatprep.subr.bf16.mxu0 0
  %1236 = vmatpush1.bf16.msra.mxu0 0
  %1237 = vmatprep.subr.bf16.mxu0 0
  %1238 = vmatpush1.bf16.msra.mxu0 0
  %1239 = vmatprep.subr.bf16.mxu0 0
  %1240 = vmatpush1.bf16.msra.mxu0 0
  %1241 = vmatprep.subr.bf16.mxu0 0
  %1242 = vmatpush1.bf16.msra.mxu0 0
  %1243 = vmatprep.subr.bf16.mxu0 0
  %1244 = vmatpush1.bf16.msra.mxu0 0
  %1245 = vmatprep.subr.bf16.mxu0 0
  %1246 = vmatpush1.bf16.msra.mxu0 0
  %1247 = vmatprep.subr.bf16.mxu0 0
  %1248 = vmatpush1.bf16.msra.mxu0 0
  %1249 = vmatprep.subr.bf16.mxu0 0
  %1250 = vmatpush1.bf16.msra.mxu0 0
  %1251 = vmatprep.subr.bf16.mxu0 0
  %1252 = vmatpush1.bf16.msra.mxu0 0
  %1253 = vmatprep.mubr.bf16.mxu0 0
  %1254 = vmatmul.mubr.bf16.gmra.mrb[0].mxu0 %v1210
  %v1255 = vpop.f32.mrb[0].mxu0
  %v1256 = vadd.f32 0.0, %v1255
  %v1257 = vpop.f32.mrb[0].mxu0
  %v1258 = vpop.f32.mrb[0].mxu0
  %v1259 = vadd.f32 0.0, %v1258
  %v1260 = vpop.f32.mrb[0].mxu0
  %1261 = vmatprep.mubr.bf16.mxu0 0
  %1262 = vmatmul.mubr.bf16.gmra.mrb[0].mxu0 %v1213
  %v1263 = vpop.f32.mrb[0].mxu0
  %v1264 = vadd.f32 0.0, %v1263
  %v1265 = vpop.f32.mrb[0].mxu0
  %v1266 = vpop.f32.mrb[0].mxu0
  %v1267 = vadd.f32 0.0, %v1266
  %v1268 = vpop.f32.mrb[0].mxu0
  %1269 = vmatprep.mubr.bf16.mxu0 0
  %1270 = vmatmul.mubr.bf16.gmra.mrb[0].mxu0 %v1216
  %v1271 = vpop.f32.mrb[0].mxu0
  %v1272 = vadd.f32 0.0, %v1271
  %v1273 = vpop.f32.mrb[0].mxu0
  %v1274 = vpop.f32.mrb[0].mxu0
  %v1275 = vadd.f32 0.0, %v1274
  %v1276 = vpop.f32.mrb[0].mxu0
  %1277 = vmatprep.mubr.bf16.mxu0 0
  %1278 = vmatmul.mubr.bf16.gmra.mrb[0].mxu0 %v1219
  %v1279 = vpop.f32.mrb[0].mxu0
  %v1280 = vadd.f32 0.0, %v1279
  %v1281 = vpop.f32.mrb[0].mxu0
  %v1282 = vpop.f32.mrb[0].mxu0
  %v1283 = vadd.f32 0.0, %v1282
  %v1284 = vpop.f32.mrb[0].mxu0
  %1285 = vdwg.mxu0
  %1286 = vset.pattern.permute.xlu0 4
  %1287 = vperm.xlu0 %1286, %v77
  %v1288 = vpop.permute.xlu0 %1287
  %1290 = vset.pattern.permute.xlu0 4
  %1291 = vperm.xlu0 %1290, %v78
  %v1292 = vpop.permute.xlu0 %1291
  %1294 = vset.pattern.permute.xlu0 4
  %1295 = vperm.xlu0 %1294, %v79
  %v1296 = vpop.permute.xlu0 %1295
  %1298 = vset.pattern.permute.xlu0 4
  %1299 = vperm.xlu0 %1298, %v80
  %v1300 = vpop.permute.xlu0 %1299
  %1302 = vset.pattern.permute.xlu0 4
  %1303 = vperm.xlu0 %1302, %v81
  %v1304 = vpop.permute.xlu0 %1303
  %1306 = vset.pattern.permute.xlu0 4
  %1307 = vperm.xlu0 %1306, %v82
  %v1308 = vpop.permute.xlu0 %1307
  %1310 = vset.pattern.permute.xlu0 4
  %1311 = vperm.xlu0 %1310, %v83
  %v1312 = vpop.permute.xlu0 %1311
  %1314 = vset.pattern.permute.xlu0 4
  %1315 = vperm.xlu0 %1314, %v84
  %v1316 = vpop.permute.xlu0 %1315
  %v1318 = vlaneseq
  %v1319 = vshrl.u32 %v1318, 7
  %v1320 = vsub.s32 4, %v1319
  %v1321 = vrot.slane %v109, %v1320
  %v1322 = vadd.f32 %v1288, %v1321
  %v1323 = vadd.f32 %v1292, %v1321
  %v1324 = vadd.f32 %v1296, %v1321
  %v1325 = vadd.f32 %v1300, %v1321
  %v1326 = vadd.f32 %v1304, %v1321
  %v1327 = vadd.f32 %v1308, %v1321
  %v1328 = vadd.f32 %v1312, %v1321
  %v1329 = vadd.f32 %v1316, %v1321
  %v1330 = vmul.f32 %v1322, 0.2
  %v1331 = vmul.f32 %v1323, 0.2
  %v1332 = vmul.f32 %v1324, 0.2
  %v1333 = vmul.f32 %v1325, 0.2
  %v1334 = vmul.f32 %v1326, 0.2
  %v1335 = vmul.f32 %v1327, 0.2
  %v1336 = vmul.f32 %v1328, 0.2
  %v1337 = vmul.f32 %v1329, 0.2
  %v1338 = vmax.f32 %v1322, %v1330
  %v1339 = vmax.f32 %v1323, %v1331
  %v1340 = vmax.f32 %v1324, %v1332
  %v1341 = vmax.f32 %v1325, %v1333
  %v1342 = vmax.f32 %v1326, %v1334
  %v1343 = vmax.f32 %v1327, %v1335
  %v1344 = vmax.f32 %v1328, %v1336
  %v1345 = vmax.f32 %v1329, %v1337
  %v1346 = vsel %vm69, %v1338, -1e+30
  %v1347 = vsel %vm70, %v1339, -1e+30
  %v1348 = vsel %vm71, %v1340, -1e+30
  %v1349 = vsel %vm72, %v1341, -1e+30
  %v1350 = vsel %vm73, %v1342, -1e+30
  %v1351 = vsel %vm74, %v1343, -1e+30
  %v1352 = vsel %vm75, %v1344, -1e+30
  %v1353 = vsel %vm76, %v1345, -1e+30
  %v1354 = vsel %vm217, %v1346, -inf
  %1355 = vmax.xlane.f32.xlu0 %v1354
  %v1356 = vpop.xlane.xlu0 %1355
  %v1357 = vsel %vm217, %v1347, -inf
  %1358 = vmax.xlane.f32.xlu0 %v1357
  %v1359 = vpop.xlane.xlu0 %1358
  %v1360 = vsel %vm217, %v1348, -inf
  %1361 = vmax.xlane.f32.xlu0 %v1360
  %v1362 = vpop.xlane.xlu0 %1361
  %v1363 = vsel %vm217, %v1349, -inf
  %1364 = vmax.xlane.f32.xlu0 %v1363
  %v1365 = vpop.xlane.xlu0 %1364
  %v1366 = vsel %vm217, %v1350, -inf
  %1367 = vmax.xlane.f32.xlu0 %v1366
  %v1368 = vpop.xlane.xlu0 %1367
  %v1369 = vsel %vm217, %v1351, -inf
  %1370 = vmax.xlane.f32.xlu0 %v1369
  %v1371 = vpop.xlane.xlu0 %1370
  %v1372 = vsel %vm217, %v1352, -inf
  %1373 = vmax.xlane.f32.xlu0 %v1372
  %v1374 = vpop.xlane.xlu0 %1373
  %v1375 = vsel %vm217, %v1353, -inf
  %1376 = vmax.xlane.f32.xlu0 %v1375
  %v1377 = vpop.xlane.xlu0 %1376
  %v1378 = vmax.f32 %v133, %v1356
  %v1379 = vmax.f32 %v134, %v1359
  %v1380 = vmax.f32 %v135, %v1362
  %v1381 = vmax.f32 %v136, %v1365
  %v1382 = vmax.f32 %v137, %v1368
  %v1383 = vmax.f32 %v138, %v1371
  %v1384 = vmax.f32 %v139, %v1374
  %v1385 = vmax.f32 %v140, %v1377
  %1387 = vset.pattern.permute.xlu0 4
  %1388 = vperm.xlu0 %1387, %v1378
  %v1389 = vpop.permute.xlu0 %1388
  %1392 = vset.pattern.permute.xlu0 4
  %1393 = vperm.xlu0 %1392, %v1379
  %v1394 = vpop.permute.xlu0 %1393
  %1397 = vset.pattern.permute.xlu0 4
  %1398 = vperm.xlu0 %1397, %v1380
  %v1399 = vpop.permute.xlu0 %1398
  %1402 = vset.pattern.permute.xlu0 4
  %1403 = vperm.xlu0 %1402, %v1381
  %v1404 = vpop.permute.xlu0 %1403
  %1407 = vset.pattern.permute.xlu0 4
  %1408 = vperm.xlu0 %1407, %v1382
  %v1409 = vpop.permute.xlu0 %1408
  %1412 = vset.pattern.permute.xlu0 4
  %1413 = vperm.xlu0 %1412, %v1383
  %v1414 = vpop.permute.xlu0 %1413
  %1417 = vset.pattern.permute.xlu0 4
  %1418 = vperm.xlu0 %1417, %v1384
  %v1419 = vpop.permute.xlu0 %1418
  %1422 = vset.pattern.permute.xlu0 4
  %1423 = vperm.xlu0 %1422, %v1385
  %v1424 = vpop.permute.xlu0 %1423
  %v1426 = vsub.f32 %v1346, %v1389
  %v1427 = vsub.f32 %v1347, %v1394
  %v1428 = vsub.f32 %v1348, %v1399
  %v1429 = vsub.f32 %v1349, %v1404
  %v1430 = vsub.f32 %v1350, %v1409
  %v1431 = vsub.f32 %v1351, %v1414
  %v1432 = vsub.f32 %v1352, %v1419
  %v1433 = vsub.f32 %v1353, %v1424
  %v1434 = vmul.f32 %v1426, 1.442695
  %v1435 = vpow.pop %v1434
  %v1436 = vmul.f32 %v1427, 1.442695
  %v1437 = vpow.pop %v1436
  %v1438 = vmul.f32 %v1428, 1.442695
  %v1439 = vpow.pop %v1438
  %v1440 = vmul.f32 %v1429, 1.442695
  %v1441 = vpow.pop %v1440
  %v1442 = vmul.f32 %v1430, 1.442695
  %v1443 = vpow.pop %v1442
  %v1444 = vmul.f32 %v1431, 1.442695
  %v1445 = vpow.pop %v1444
  %v1446 = vmul.f32 %v1432, 1.442695
  %v1447 = vpow.pop %v1446
  %v1448 = vmul.f32 %v1433, 1.442695
  %v1449 = vpow.pop %v1448
  %v1450 = vsel %vm217, %v1435, 0.0
  %1451 = vadd.xlane.f32.xlu0 %v1450
  %v1452 = vpop.xlane.xlu0 %1451
  %v1453 = vsel %vm217, %v1437, 0.0
  %1454 = vadd.xlane.f32.xlu0 %v1453
  %v1455 = vpop.xlane.xlu0 %1454
  %v1456 = vsel %vm217, %v1439, 0.0
  %1457 = vadd.xlane.f32.xlu0 %v1456
  %v1458 = vpop.xlane.xlu0 %1457
  %v1459 = vsel %vm217, %v1441, 0.0
  %1460 = vadd.xlane.f32.xlu0 %v1459
  %v1461 = vpop.xlane.xlu0 %1460
  %v1462 = vsel %vm217, %v1443, 0.0
  %1463 = vadd.xlane.f32.xlu0 %v1462
  %v1464 = vpop.xlane.xlu0 %1463
  %v1465 = vsel %vm217, %v1445, 0.0
  %1466 = vadd.xlane.f32.xlu0 %v1465
  %v1467 = vpop.xlane.xlu0 %1466
  %v1468 = vsel %vm217, %v1447, 0.0
  %1469 = vadd.xlane.f32.xlu0 %v1468
  %v1470 = vpop.xlane.xlu0 %1469
  %v1471 = vsel %vm217, %v1449, 0.0
  %1472 = vadd.xlane.f32.xlu0 %v1471
  %v1473 = vpop.xlane.xlu0 %1472
  %v1474 = vpack.c.bf16 %v1437, %v1435
  %v1475 = vpack.c.bf16 %v1441, %v1439
  %v1476 = vpack.c.bf16 %v1445, %v1443
  %v1477 = vpack.c.bf16 %v1449, %v1447
  %1478 = vrot.lane.b32.xlu0 %v358, 96
  %v1479 = vpop.permute.xlu0 %1478
  %1480 = vrot.lane.b32.xlu0 %v359, 96
  %v1481 = vpop.permute.xlu0 %1480
  %1482 = vrot.lane.b32.xlu0 %v360, 96
  %v1483 = vpop.permute.xlu0 %1482
  %1484 = vrot.lane.b32.xlu0 %v361, 96
  %v1485 = vpop.permute.xlu0 %1484
  %v1491 = vsel %vm217, %v1474, 0
  %v1494 = vsel %vm217, %v1475, 0
  %v1497 = vsel %vm217, %v1476, 0
  %v1500 = vsel %vm217, %v1477, 0
  %1502 = vmatprep.subr.bf16.mxu0 0
  %1503 = vmatpush1.bf16.msra.mxu0 %v1479
  %1504 = vmatprep.subr.bf16.mxu0 0
  %1505 = vmatpush1.bf16.msra.mxu0 %v1481
  %1506 = vmatprep.subr.bf16.mxu0 0
  %1507 = vmatpush1.bf16.msra.mxu0 %v1483
  %1508 = vmatprep.subr.bf16.mxu0 0
  %1509 = vmatpush1.bf16.msra.mxu0 %v1485
  %1510 = vmatprep.subr.bf16.mxu0 0
  %1511 = vmatpush1.bf16.msra.mxu0 0
  %1512 = vmatprep.subr.bf16.mxu0 0
  %1513 = vmatpush1.bf16.msra.mxu0 0
  %1514 = vmatprep.subr.bf16.mxu0 0
  %1515 = vmatpush1.bf16.msra.mxu0 0
  %1516 = vmatprep.subr.bf16.mxu0 0
  %1517 = vmatpush1.bf16.msra.mxu0 0
  %1518 = vmatprep.subr.bf16.mxu0 0
  %1519 = vmatpush1.bf16.msra.mxu0 0
  %1520 = vmatprep.subr.bf16.mxu0 0
  %1521 = vmatpush1.bf16.msra.mxu0 0
  %1522 = vmatprep.subr.bf16.mxu0 0
  %1523 = vmatpush1.bf16.msra.mxu0 0
  %1524 = vmatprep.subr.bf16.mxu0 0
  %1525 = vmatpush1.bf16.msra.mxu0 0
  %1526 = vmatprep.subr.bf16.mxu0 0
  %1527 = vmatpush1.bf16.msra.mxu0 0
  %1528 = vmatprep.subr.bf16.mxu0 0
  %1529 = vmatpush1.bf16.msra.mxu0 0
  %1530 = vmatprep.subr.bf16.mxu0 0
  %1531 = vmatpush1.bf16.msra.mxu0 0
  %1532 = vmatprep.subr.bf16.mxu0 0
  %1533 = vmatpush1.bf16.msra.mxu0 0
  %1534 = vmatprep.mubr.bf16.mxu0 0
  %1535 = vmatmul.mubr.bf16.gmra.mrb[0].mxu0 %v1491
  %v1536 = vpop.f32.mrb[0].mxu0
  %v1537 = vadd.f32 0.0, %v1536
  %v1538 = vpop.f32.mrb[0].mxu0
  %v1539 = vpop.f32.mrb[0].mxu0
  %v1540 = vadd.f32 0.0, %v1539
  %v1541 = vpop.f32.mrb[0].mxu0
  %1542 = vmatprep.mubr.bf16.mxu0 0
  %1543 = vmatmul.mubr.bf16.gmra.mrb[0].mxu0 %v1494
  %v1544 = vpop.f32.mrb[0].mxu0
  %v1545 = vadd.f32 0.0, %v1544
  %v1546 = vpop.f32.mrb[0].mxu0
  %v1547 = vpop.f32.mrb[0].mxu0
  %v1548 = vadd.f32 0.0, %v1547
  %v1549 = vpop.f32.mrb[0].mxu0
  %1550 = vmatprep.mubr.bf16.mxu0 0
  %1551 = vmatmul.mubr.bf16.gmra.mrb[0].mxu0 %v1497
  %v1552 = vpop.f32.mrb[0].mxu0
  %v1553 = vadd.f32 0.0, %v1552
  %v1554 = vpop.f32.mrb[0].mxu0
  %v1555 = vpop.f32.mrb[0].mxu0
  %v1556 = vadd.f32 0.0, %v1555
  %v1557 = vpop.f32.mrb[0].mxu0
  %1558 = vmatprep.mubr.bf16.mxu0 0
  %1559 = vmatmul.mubr.bf16.gmra.mrb[0].mxu0 %v1500
  %v1560 = vpop.f32.mrb[0].mxu0
  %v1561 = vadd.f32 0.0, %v1560
  %v1562 = vpop.f32.mrb[0].mxu0
  %v1563 = vpop.f32.mrb[0].mxu0
  %v1564 = vadd.f32 0.0, %v1563
  %v1565 = vpop.f32.mrb[0].mxu0
  %1566 = vdwg.mxu0
  %1567 = vset.pattern.permute.xlu0 5
  %1568 = vperm.xlu0 %1567, %v77
  %v1569 = vpop.permute.xlu0 %1568
  %1571 = vset.pattern.permute.xlu0 5
  %1572 = vperm.xlu0 %1571, %v78
  %v1573 = vpop.permute.xlu0 %1572
  %1575 = vset.pattern.permute.xlu0 5
  %1576 = vperm.xlu0 %1575, %v79
  %v1577 = vpop.permute.xlu0 %1576
  %1579 = vset.pattern.permute.xlu0 5
  %1580 = vperm.xlu0 %1579, %v80
  %v1581 = vpop.permute.xlu0 %1580
  %1583 = vset.pattern.permute.xlu0 5
  %1584 = vperm.xlu0 %1583, %v81
  %v1585 = vpop.permute.xlu0 %1584
  %1587 = vset.pattern.permute.xlu0 5
  %1588 = vperm.xlu0 %1587, %v82
  %v1589 = vpop.permute.xlu0 %1588
  %1591 = vset.pattern.permute.xlu0 5
  %1592 = vperm.xlu0 %1591, %v83
  %v1593 = vpop.permute.xlu0 %1592
  %1595 = vset.pattern.permute.xlu0 5
  %1596 = vperm.xlu0 %1595, %v84
  %v1597 = vpop.permute.xlu0 %1596
  %v1599 = vlaneseq
  %v1600 = vshrl.u32 %v1599, 7
  %v1601 = vsub.s32 5, %v1600
  %v1602 = vrot.slane %v109, %v1601
  %v1603 = vadd.f32 %v1569, %v1602
  %v1604 = vadd.f32 %v1573, %v1602
  %v1605 = vadd.f32 %v1577, %v1602
  %v1606 = vadd.f32 %v1581, %v1602
  %v1607 = vadd.f32 %v1585, %v1602
  %v1608 = vadd.f32 %v1589, %v1602
  %v1609 = vadd.f32 %v1593, %v1602
  %v1610 = vadd.f32 %v1597, %v1602
  %v1611 = vmul.f32 %v1603, 0.2
  %v1612 = vmul.f32 %v1604, 0.2
  %v1613 = vmul.f32 %v1605, 0.2
  %v1614 = vmul.f32 %v1606, 0.2
  %v1615 = vmul.f32 %v1607, 0.2
  %v1616 = vmul.f32 %v1608, 0.2
  %v1617 = vmul.f32 %v1609, 0.2
  %v1618 = vmul.f32 %v1610, 0.2
  %v1619 = vmax.f32 %v1603, %v1611
  %v1620 = vmax.f32 %v1604, %v1612
  %v1621 = vmax.f32 %v1605, %v1613
  %v1622 = vmax.f32 %v1606, %v1614
  %v1623 = vmax.f32 %v1607, %v1615
  %v1624 = vmax.f32 %v1608, %v1616
  %v1625 = vmax.f32 %v1609, %v1617
  %v1626 = vmax.f32 %v1610, %v1618
  %v1627 = vsel %vm69, %v1619, -1e+30
  %v1628 = vsel %vm70, %v1620, -1e+30
  %v1629 = vsel %vm71, %v1621, -1e+30
  %v1630 = vsel %vm72, %v1622, -1e+30
  %v1631 = vsel %vm73, %v1623, -1e+30
  %v1632 = vsel %vm74, %v1624, -1e+30
  %v1633 = vsel %vm75, %v1625, -1e+30
  %v1634 = vsel %vm76, %v1626, -1e+30
  %v1635 = vsel %vm217, %v1627, -inf
  %1636 = vmax.xlane.f32.xlu0 %v1635
  %v1637 = vpop.xlane.xlu0 %1636
  %v1638 = vsel %vm217, %v1628, -inf
  %1639 = vmax.xlane.f32.xlu0 %v1638
  %v1640 = vpop.xlane.xlu0 %1639
  %v1641 = vsel %vm217, %v1629, -inf
  %1642 = vmax.xlane.f32.xlu0 %v1641
  %v1643 = vpop.xlane.xlu0 %1642
  %v1644 = vsel %vm217, %v1630, -inf
  %1645 = vmax.xlane.f32.xlu0 %v1644
  %v1646 = vpop.xlane.xlu0 %1645
  %v1647 = vsel %vm217, %v1631, -inf
  %1648 = vmax.xlane.f32.xlu0 %v1647
  %v1649 = vpop.xlane.xlu0 %1648
  %v1650 = vsel %vm217, %v1632, -inf
  %1651 = vmax.xlane.f32.xlu0 %v1650
  %v1652 = vpop.xlane.xlu0 %1651
  %v1653 = vsel %vm217, %v1633, -inf
  %1654 = vmax.xlane.f32.xlu0 %v1653
  %v1655 = vpop.xlane.xlu0 %1654
  %v1656 = vsel %vm217, %v1634, -inf
  %1657 = vmax.xlane.f32.xlu0 %v1656
  %v1658 = vpop.xlane.xlu0 %1657
  %v1659 = vmax.f32 %v133, %v1637
  %v1660 = vmax.f32 %v134, %v1640
  %v1661 = vmax.f32 %v135, %v1643
  %v1662 = vmax.f32 %v136, %v1646
  %v1663 = vmax.f32 %v137, %v1649
  %v1664 = vmax.f32 %v138, %v1652
  %v1665 = vmax.f32 %v139, %v1655
  %v1666 = vmax.f32 %v140, %v1658
  %1668 = vset.pattern.permute.xlu0 5
  %1669 = vperm.xlu0 %1668, %v1659
  %v1670 = vpop.permute.xlu0 %1669
  %1673 = vset.pattern.permute.xlu0 5
  %1674 = vperm.xlu0 %1673, %v1660
  %v1675 = vpop.permute.xlu0 %1674
  %1678 = vset.pattern.permute.xlu0 5
  %1679 = vperm.xlu0 %1678, %v1661
  %v1680 = vpop.permute.xlu0 %1679
  %1683 = vset.pattern.permute.xlu0 5
  %1684 = vperm.xlu0 %1683, %v1662
  %v1685 = vpop.permute.xlu0 %1684
  %1688 = vset.pattern.permute.xlu0 5
  %1689 = vperm.xlu0 %1688, %v1663
  %v1690 = vpop.permute.xlu0 %1689
  %1693 = vset.pattern.permute.xlu0 5
  %1694 = vperm.xlu0 %1693, %v1664
  %v1695 = vpop.permute.xlu0 %1694
  %1698 = vset.pattern.permute.xlu0 5
  %1699 = vperm.xlu0 %1698, %v1665
  %v1700 = vpop.permute.xlu0 %1699
  %1703 = vset.pattern.permute.xlu0 5
  %1704 = vperm.xlu0 %1703, %v1666
  %v1705 = vpop.permute.xlu0 %1704
  %v1707 = vsub.f32 %v1627, %v1670
  %v1708 = vsub.f32 %v1628, %v1675
  %v1709 = vsub.f32 %v1629, %v1680
  %v1710 = vsub.f32 %v1630, %v1685
  %v1711 = vsub.f32 %v1631, %v1690
  %v1712 = vsub.f32 %v1632, %v1695
  %v1713 = vsub.f32 %v1633, %v1700
  %v1714 = vsub.f32 %v1634, %v1705
  %v1715 = vmul.f32 %v1707, 1.442695
  %v1716 = vpow.pop %v1715
  %v1717 = vmul.f32 %v1708, 1.442695
  %v1718 = vpow.pop %v1717
  %v1719 = vmul.f32 %v1709, 1.442695
  %v1720 = vpow.pop %v1719
  %v1721 = vmul.f32 %v1710, 1.442695
  %v1722 = vpow.pop %v1721
  %v1723 = vmul.f32 %v1711, 1.442695
  %v1724 = vpow.pop %v1723
  %v1725 = vmul.f32 %v1712, 1.442695
  %v1726 = vpow.pop %v1725
  %v1727 = vmul.f32 %v1713, 1.442695
  %v1728 = vpow.pop %v1727
  %v1729 = vmul.f32 %v1714, 1.442695
  %v1730 = vpow.pop %v1729
  %v1731 = vsel %vm217, %v1716, 0.0
  %1732 = vadd.xlane.f32.xlu0 %v1731
  %v1733 = vpop.xlane.xlu0 %1732
  %v1734 = vsel %vm217, %v1718, 0.0
  %1735 = vadd.xlane.f32.xlu0 %v1734
  %v1736 = vpop.xlane.xlu0 %1735
  %v1737 = vsel %vm217, %v1720, 0.0
  %1738 = vadd.xlane.f32.xlu0 %v1737
  %v1739 = vpop.xlane.xlu0 %1738
  %v1740 = vsel %vm217, %v1722, 0.0
  %1741 = vadd.xlane.f32.xlu0 %v1740
  %v1742 = vpop.xlane.xlu0 %1741
  %v1743 = vsel %vm217, %v1724, 0.0
  %1744 = vadd.xlane.f32.xlu0 %v1743
  %v1745 = vpop.xlane.xlu0 %1744
  %v1746 = vsel %vm217, %v1726, 0.0
  %1747 = vadd.xlane.f32.xlu0 %v1746
  %v1748 = vpop.xlane.xlu0 %1747
  %v1749 = vsel %vm217, %v1728, 0.0
  %1750 = vadd.xlane.f32.xlu0 %v1749
  %v1751 = vpop.xlane.xlu0 %1750
  %v1752 = vsel %vm217, %v1730, 0.0
  %1753 = vadd.xlane.f32.xlu0 %v1752
  %v1754 = vpop.xlane.xlu0 %1753
  %v1755 = vpack.c.bf16 %v1718, %v1716
  %v1756 = vpack.c.bf16 %v1722, %v1720
  %v1757 = vpack.c.bf16 %v1726, %v1724
  %v1758 = vpack.c.bf16 %v1730, %v1728
  %1759 = vrot.lane.b32.xlu0 %v358, 88
  %v1760 = vpop.permute.xlu0 %1759
  %1761 = vrot.lane.b32.xlu0 %v359, 88
  %v1762 = vpop.permute.xlu0 %1761
  %1763 = vrot.lane.b32.xlu0 %v360, 88
  %v1764 = vpop.permute.xlu0 %1763
  %1765 = vrot.lane.b32.xlu0 %v361, 88
  %v1766 = vpop.permute.xlu0 %1765
  %v1772 = vsel %vm217, %v1755, 0
  %v1775 = vsel %vm217, %v1756, 0
  %v1778 = vsel %vm217, %v1757, 0
  %v1781 = vsel %vm217, %v1758, 0
  %1783 = vmatprep.subr.bf16.mxu0 0
  %1784 = vmatpush1.bf16.msra.mxu0 %v1760
  %1785 = vmatprep.subr.bf16.mxu0 0
  %1786 = vmatpush1.bf16.msra.mxu0 %v1762
  %1787 = vmatprep.subr.bf16.mxu0 0
  %1788 = vmatpush1.bf16.msra.mxu0 %v1764
  %1789 = vmatprep.subr.bf16.mxu0 0
  %1790 = vmatpush1.bf16.msra.mxu0 %v1766
  %1791 = vmatprep.subr.bf16.mxu0 0
  %1792 = vmatpush1.bf16.msra.mxu0 0
  %1793 = vmatprep.subr.bf16.mxu0 0
  %1794 = vmatpush1.bf16.msra.mxu0 0
  %1795 = vmatprep.subr.bf16.mxu0 0
  %1796 = vmatpush1.bf16.msra.mxu0 0
  %1797 = vmatprep.subr.bf16.mxu0 0
  %1798 = vmatpush1.bf16.msra.mxu0 0
  %1799 = vmatprep.subr.bf16.mxu0 0
  %1800 = vmatpush1.bf16.msra.mxu0 0
  %1801 = vmatprep.subr.bf16.mxu0 0
  %1802 = vmatpush1.bf16.msra.mxu0 0
  %1803 = vmatprep.subr.bf16.mxu0 0
  %1804 = vmatpush1.bf16.msra.mxu0 0
  %1805 = vmatprep.subr.bf16.mxu0 0
  %1806 = vmatpush1.bf16.msra.mxu0 0
  %1807 = vmatprep.subr.bf16.mxu0 0
  %1808 = vmatpush1.bf16.msra.mxu0 0
  %1809 = vmatprep.subr.bf16.mxu0 0
  %1810 = vmatpush1.bf16.msra.mxu0 0
  %1811 = vmatprep.subr.bf16.mxu0 0
  %1812 = vmatpush1.bf16.msra.mxu0 0
  %1813 = vmatprep.subr.bf16.mxu0 0
  %1814 = vmatpush1.bf16.msra.mxu0 0
  %1815 = vmatprep.mubr.bf16.mxu0 0
  %1816 = vmatmul.mubr.bf16.gmra.mrb[0].mxu0 %v1772
  %v1817 = vpop.f32.mrb[0].mxu0
  %v1818 = vadd.f32 0.0, %v1817
  %v1819 = vpop.f32.mrb[0].mxu0
  %v1820 = vpop.f32.mrb[0].mxu0
  %v1821 = vadd.f32 0.0, %v1820
  %v1822 = vpop.f32.mrb[0].mxu0
  %1823 = vmatprep.mubr.bf16.mxu0 0
  %1824 = vmatmul.mubr.bf16.gmra.mrb[0].mxu0 %v1775
  %v1825 = vpop.f32.mrb[0].mxu0
  %v1826 = vadd.f32 0.0, %v1825
  %v1827 = vpop.f32.mrb[0].mxu0
  %v1828 = vpop.f32.mrb[0].mxu0
  %v1829 = vadd.f32 0.0, %v1828
  %v1830 = vpop.f32.mrb[0].mxu0
  %1831 = vmatprep.mubr.bf16.mxu0 0
  %1832 = vmatmul.mubr.bf16.gmra.mrb[0].mxu0 %v1778
  %v1833 = vpop.f32.mrb[0].mxu0
  %v1834 = vadd.f32 0.0, %v1833
  %v1835 = vpop.f32.mrb[0].mxu0
  %v1836 = vpop.f32.mrb[0].mxu0
  %v1837 = vadd.f32 0.0, %v1836
  %v1838 = vpop.f32.mrb[0].mxu0
  %1839 = vmatprep.mubr.bf16.mxu0 0
  %1840 = vmatmul.mubr.bf16.gmra.mrb[0].mxu0 %v1781
  %v1841 = vpop.f32.mrb[0].mxu0
  %v1842 = vadd.f32 0.0, %v1841
  %v1843 = vpop.f32.mrb[0].mxu0
  %v1844 = vpop.f32.mrb[0].mxu0
  %v1845 = vadd.f32 0.0, %v1844
  %v1846 = vpop.f32.mrb[0].mxu0
  %1847 = vdwg.mxu0
  %1848 = vset.pattern.permute.xlu0 6
  %1849 = vperm.xlu0 %1848, %v77
  %v1850 = vpop.permute.xlu0 %1849
  %1852 = vset.pattern.permute.xlu0 6
  %1853 = vperm.xlu0 %1852, %v78
  %v1854 = vpop.permute.xlu0 %1853
  %1856 = vset.pattern.permute.xlu0 6
  %1857 = vperm.xlu0 %1856, %v79
  %v1858 = vpop.permute.xlu0 %1857
  %1860 = vset.pattern.permute.xlu0 6
  %1861 = vperm.xlu0 %1860, %v80
  %v1862 = vpop.permute.xlu0 %1861
  %1864 = vset.pattern.permute.xlu0 6
  %1865 = vperm.xlu0 %1864, %v81
  %v1866 = vpop.permute.xlu0 %1865
  %1868 = vset.pattern.permute.xlu0 6
  %1869 = vperm.xlu0 %1868, %v82
  %v1870 = vpop.permute.xlu0 %1869
  %1872 = vset.pattern.permute.xlu0 6
  %1873 = vperm.xlu0 %1872, %v83
  %v1874 = vpop.permute.xlu0 %1873
  %1876 = vset.pattern.permute.xlu0 6
  %1877 = vperm.xlu0 %1876, %v84
  %v1878 = vpop.permute.xlu0 %1877
  %v1880 = vlaneseq
  %v1881 = vshrl.u32 %v1880, 7
  %v1882 = vsub.s32 6, %v1881
  %v1883 = vrot.slane %v109, %v1882
  %v1884 = vadd.f32 %v1850, %v1883
  %v1885 = vadd.f32 %v1854, %v1883
  %v1886 = vadd.f32 %v1858, %v1883
  %v1887 = vadd.f32 %v1862, %v1883
  %v1888 = vadd.f32 %v1866, %v1883
  %v1889 = vadd.f32 %v1870, %v1883
  %v1890 = vadd.f32 %v1874, %v1883
  %v1891 = vadd.f32 %v1878, %v1883
  %v1892 = vmul.f32 %v1884, 0.2
  %v1893 = vmul.f32 %v1885, 0.2
  %v1894 = vmul.f32 %v1886, 0.2
  %v1895 = vmul.f32 %v1887, 0.2
  %v1896 = vmul.f32 %v1888, 0.2
  %v1897 = vmul.f32 %v1889, 0.2
  %v1898 = vmul.f32 %v1890, 0.2
  %v1899 = vmul.f32 %v1891, 0.2
  %v1900 = vmax.f32 %v1884, %v1892
  %v1901 = vmax.f32 %v1885, %v1893
  %v1902 = vmax.f32 %v1886, %v1894
  %v1903 = vmax.f32 %v1887, %v1895
  %v1904 = vmax.f32 %v1888, %v1896
  %v1905 = vmax.f32 %v1889, %v1897
  %v1906 = vmax.f32 %v1890, %v1898
  %v1907 = vmax.f32 %v1891, %v1899
  %v1908 = vsel %vm69, %v1900, -1e+30
  %v1909 = vsel %vm70, %v1901, -1e+30
  %v1910 = vsel %vm71, %v1902, -1e+30
  %v1911 = vsel %vm72, %v1903, -1e+30
  %v1912 = vsel %vm73, %v1904, -1e+30
  %v1913 = vsel %vm74, %v1905, -1e+30
  %v1914 = vsel %vm75, %v1906, -1e+30
  %v1915 = vsel %vm76, %v1907, -1e+30
  %v1916 = vsel %vm217, %v1908, -inf
  %1917 = vmax.xlane.f32.xlu0 %v1916
  %v1918 = vpop.xlane.xlu0 %1917
  %v1919 = vsel %vm217, %v1909, -inf
  %1920 = vmax.xlane.f32.xlu0 %v1919
  %v1921 = vpop.xlane.xlu0 %1920
  %v1922 = vsel %vm217, %v1910, -inf
  %1923 = vmax.xlane.f32.xlu0 %v1922
  %v1924 = vpop.xlane.xlu0 %1923
  %v1925 = vsel %vm217, %v1911, -inf
  %1926 = vmax.xlane.f32.xlu0 %v1925
  %v1927 = vpop.xlane.xlu0 %1926
  %v1928 = vsel %vm217, %v1912, -inf
  %1929 = vmax.xlane.f32.xlu0 %v1928
  %v1930 = vpop.xlane.xlu0 %1929
  %v1931 = vsel %vm217, %v1913, -inf
  %1932 = vmax.xlane.f32.xlu0 %v1931
  %v1933 = vpop.xlane.xlu0 %1932
  %v1934 = vsel %vm217, %v1914, -inf
  %1935 = vmax.xlane.f32.xlu0 %v1934
  %v1936 = vpop.xlane.xlu0 %1935
  %v1937 = vsel %vm217, %v1915, -inf
  %1938 = vmax.xlane.f32.xlu0 %v1937
  %v1939 = vpop.xlane.xlu0 %1938
  %v1940 = vmax.f32 %v133, %v1918
  %v1941 = vmax.f32 %v134, %v1921
  %v1942 = vmax.f32 %v135, %v1924
  %v1943 = vmax.f32 %v136, %v1927
  %v1944 = vmax.f32 %v137, %v1930
  %v1945 = vmax.f32 %v138, %v1933
  %v1946 = vmax.f32 %v139, %v1936
  %v1947 = vmax.f32 %v140, %v1939
  %1949 = vset.pattern.permute.xlu0 6
  %1950 = vperm.xlu0 %1949, %v1940
  %v1951 = vpop.permute.xlu0 %1950
  %1954 = vset.pattern.permute.xlu0 6
  %1955 = vperm.xlu0 %1954, %v1941
  %v1956 = vpop.permute.xlu0 %1955
  %1959 = vset.pattern.permute.xlu0 6
  %1960 = vperm.xlu0 %1959, %v1942
  %v1961 = vpop.permute.xlu0 %1960
  %1964 = vset.pattern.permute.xlu0 6
  %1965 = vperm.xlu0 %1964, %v1943
  %v1966 = vpop.permute.xlu0 %1965
  %1969 = vset.pattern.permute.xlu0 6
  %1970 = vperm.xlu0 %1969, %v1944
  %v1971 = vpop.permute.xlu0 %1970
  %1974 = vset.pattern.permute.xlu0 6
  %1975 = vperm.xlu0 %1974, %v1945
  %v1976 = vpop.permute.xlu0 %1975
  %1979 = vset.pattern.permute.xlu0 6
  %1980 = vperm.xlu0 %1979, %v1946
  %v1981 = vpop.permute.xlu0 %1980
  %1984 = vset.pattern.permute.xlu0 6
  %1985 = vperm.xlu0 %1984, %v1947
  %v1986 = vpop.permute.xlu0 %1985
  %v1988 = vsub.f32 %v1908, %v1951
  %v1989 = vsub.f32 %v1909, %v1956
  %v1990 = vsub.f32 %v1910, %v1961
  %v1991 = vsub.f32 %v1911, %v1966
  %v1992 = vsub.f32 %v1912, %v1971
  %v1993 = vsub.f32 %v1913, %v1976
  %v1994 = vsub.f32 %v1914, %v1981
  %v1995 = vsub.f32 %v1915, %v1986
  %v1996 = vmul.f32 %v1988, 1.442695
  %v1997 = vpow.pop %v1996
  %v1998 = vmul.f32 %v1989, 1.442695
  %v1999 = vpow.pop %v1998
  %v2000 = vmul.f32 %v1990, 1.442695
  %v2001 = vpow.pop %v2000
  %v2002 = vmul.f32 %v1991, 1.442695
  %v2003 = vpow.pop %v2002
  %v2004 = vmul.f32 %v1992, 1.442695
  %v2005 = vpow.pop %v2004
  %v2006 = vmul.f32 %v1993, 1.442695
  %v2007 = vpow.pop %v2006
  %v2008 = vmul.f32 %v1994, 1.442695
  %v2009 = vpow.pop %v2008
  %v2010 = vmul.f32 %v1995, 1.442695
  %v2011 = vpow.pop %v2010
  %v2012 = vsel %vm217, %v1997, 0.0
  %2013 = vadd.xlane.f32.xlu0 %v2012
  %v2014 = vpop.xlane.xlu0 %2013
  %v2015 = vsel %vm217, %v1999, 0.0
  %2016 = vadd.xlane.f32.xlu0 %v2015
  %v2017 = vpop.xlane.xlu0 %2016
  %v2018 = vsel %vm217, %v2001, 0.0
  %2019 = vadd.xlane.f32.xlu0 %v2018
  %v2020 = vpop.xlane.xlu0 %2019
  %v2021 = vsel %vm217, %v2003, 0.0
  %2022 = vadd.xlane.f32.xlu0 %v2021
  %v2023 = vpop.xlane.xlu0 %2022
  %v2024 = vsel %vm217, %v2005, 0.0
  %2025 = vadd.xlane.f32.xlu0 %v2024
  %v2026 = vpop.xlane.xlu0 %2025
  %v2027 = vsel %vm217, %v2007, 0.0
  %2028 = vadd.xlane.f32.xlu0 %v2027
  %v2029 = vpop.xlane.xlu0 %2028
  %v2030 = vsel %vm217, %v2009, 0.0
  %2031 = vadd.xlane.f32.xlu0 %v2030
  %v2032 = vpop.xlane.xlu0 %2031
  %v2033 = vsel %vm217, %v2011, 0.0
  %2034 = vadd.xlane.f32.xlu0 %v2033
  %v2035 = vpop.xlane.xlu0 %2034
  %v2036 = vpack.c.bf16 %v1999, %v1997
  %v2037 = vpack.c.bf16 %v2003, %v2001
  %v2038 = vpack.c.bf16 %v2007, %v2005
  %v2039 = vpack.c.bf16 %v2011, %v2009
  %2040 = vrot.lane.b32.xlu0 %v358, 80
  %v2041 = vpop.permute.xlu0 %2040
  %2042 = vrot.lane.b32.xlu0 %v359, 80
  %v2043 = vpop.permute.xlu0 %2042
  %2044 = vrot.lane.b32.xlu0 %v360, 80
  %v2045 = vpop.permute.xlu0 %2044
  %2046 = vrot.lane.b32.xlu0 %v361, 80
  %v2047 = vpop.permute.xlu0 %2046
  %v2053 = vsel %vm217, %v2036, 0
  %v2056 = vsel %vm217, %v2037, 0
  %v2059 = vsel %vm217, %v2038, 0
  %v2062 = vsel %vm217, %v2039, 0
  %2064 = vmatprep.subr.bf16.mxu0 0
  %2065 = vmatpush1.bf16.msra.mxu0 %v2041
  %2066 = vmatprep.subr.bf16.mxu0 0
  %2067 = vmatpush1.bf16.msra.mxu0 %v2043
  %2068 = vmatprep.subr.bf16.mxu0 0
  %2069 = vmatpush1.bf16.msra.mxu0 %v2045
  %2070 = vmatprep.subr.bf16.mxu0 0
  %2071 = vmatpush1.bf16.msra.mxu0 %v2047
  %2072 = vmatprep.subr.bf16.mxu0 0
  %2073 = vmatpush1.bf16.msra.mxu0 0
  %2074 = vmatprep.subr.bf16.mxu0 0
  %2075 = vmatpush1.bf16.msra.mxu0 0
  %2076 = vmatprep.subr.bf16.mxu0 0
  %2077 = vmatpush1.bf16.msra.mxu0 0
  %2078 = vmatprep.subr.bf16.mxu0 0
  %2079 = vmatpush1.bf16.msra.mxu0 0
  %2080 = vmatprep.subr.bf16.mxu0 0
  %2081 = vmatpush1.bf16.msra.mxu0 0
  %2082 = vmatprep.subr.bf16.mxu0 0
  %2083 = vmatpush1.bf16.msra.mxu0 0
  %2084 = vmatprep.subr.bf16.mxu0 0
  %2085 = vmatpush1.bf16.msra.mxu0 0
  %2086 = vmatprep.subr.bf16.mxu0 0
  %2087 = vmatpush1.bf16.msra.mxu0 0
  %2088 = vmatprep.subr.bf16.mxu0 0
  %2089 = vmatpush1.bf16.msra.mxu0 0
  %2090 = vmatprep.subr.bf16.mxu0 0
  %2091 = vmatpush1.bf16.msra.mxu0 0
  %2092 = vmatprep.subr.bf16.mxu0 0
  %2093 = vmatpush1.bf16.msra.mxu0 0
  %2094 = vmatprep.subr.bf16.mxu0 0
  %2095 = vmatpush1.bf16.msra.mxu0 0
  %2096 = vmatprep.mubr.bf16.mxu0 0
  %2097 = vmatmul.mubr.bf16.gmra.mrb[0].mxu0 %v2053
  %v2098 = vpop.f32.mrb[0].mxu0
  %v2099 = vadd.f32 0.0, %v2098
  %v2100 = vpop.f32.mrb[0].mxu0
  %v2101 = vpop.f32.mrb[0].mxu0
  %v2102 = vadd.f32 0.0, %v2101
  %v2103 = vpop.f32.mrb[0].mxu0
  %2104 = vmatprep.mubr.bf16.mxu0 0
  %2105 = vmatmul.mubr.bf16.gmra.mrb[0].mxu0 %v2056
  %v2106 = vpop.f32.mrb[0].mxu0
  %v2107 = vadd.f32 0.0, %v2106
  %v2108 = vpop.f32.mrb[0].mxu0
  %v2109 = vpop.f32.mrb[0].mxu0
  %v2110 = vadd.f32 0.0, %v2109
  %v2111 = vpop.f32.mrb[0].mxu0
  %2112 = vmatprep.mubr.bf16.mxu0 0
  %2113 = vmatmul.mubr.bf16.gmra.mrb[0].mxu0 %v2059
  %v2114 = vpop.f32.mrb[0].mxu0
  %v2115 = vadd.f32 0.0, %v2114
  %v2116 = vpop.f32.mrb[0].mxu0
  %v2117 = vpop.f32.mrb[0].mxu0
  %v2118 = vadd.f32 0.0, %v2117
  %v2119 = vpop.f32.mrb[0].mxu0
  %2120 = vmatprep.mubr.bf16.mxu0 0
  %2121 = vmatmul.mubr.bf16.gmra.mrb[0].mxu0 %v2062
  %v2122 = vpop.f32.mrb[0].mxu0
  %v2123 = vadd.f32 0.0, %v2122
  %v2124 = vpop.f32.mrb[0].mxu0
  %v2125 = vpop.f32.mrb[0].mxu0
  %v2126 = vadd.f32 0.0, %v2125
  %v2127 = vpop.f32.mrb[0].mxu0
  %2128 = vdwg.mxu0
  %2129 = vset.pattern.permute.xlu0 7
  %2130 = vperm.xlu0 %2129, %v77
  %v2131 = vpop.permute.xlu0 %2130
  %2133 = vset.pattern.permute.xlu0 7
  %2134 = vperm.xlu0 %2133, %v78
  %v2135 = vpop.permute.xlu0 %2134
  %2137 = vset.pattern.permute.xlu0 7
  %2138 = vperm.xlu0 %2137, %v79
  %v2139 = vpop.permute.xlu0 %2138
  %2141 = vset.pattern.permute.xlu0 7
  %2142 = vperm.xlu0 %2141, %v80
  %v2143 = vpop.permute.xlu0 %2142
  %2145 = vset.pattern.permute.xlu0 7
  %2146 = vperm.xlu0 %2145, %v81
  %v2147 = vpop.permute.xlu0 %2146
  %2149 = vset.pattern.permute.xlu0 7
  %2150 = vperm.xlu0 %2149, %v82
  %v2151 = vpop.permute.xlu0 %2150
  %2153 = vset.pattern.permute.xlu0 7
  %2154 = vperm.xlu0 %2153, %v83
  %v2155 = vpop.permute.xlu0 %2154
  %2157 = vset.pattern.permute.xlu0 7
  %2158 = vperm.xlu0 %2157, %v84
  %v2159 = vpop.permute.xlu0 %2158
  %v2161 = vlaneseq
  %v2162 = vshrl.u32 %v2161, 7
  %v2163 = vsub.s32 7, %v2162
  %v2164 = vrot.slane %v109, %v2163
  %v2165 = vadd.f32 %v2131, %v2164
  %v2166 = vadd.f32 %v2135, %v2164
  %v2167 = vadd.f32 %v2139, %v2164
  %v2168 = vadd.f32 %v2143, %v2164
  %v2169 = vadd.f32 %v2147, %v2164
  %v2170 = vadd.f32 %v2151, %v2164
  %v2171 = vadd.f32 %v2155, %v2164
  %v2172 = vadd.f32 %v2159, %v2164
  %v2173 = vmul.f32 %v2165, 0.2
  %v2174 = vmul.f32 %v2166, 0.2
  %v2175 = vmul.f32 %v2167, 0.2
  %v2176 = vmul.f32 %v2168, 0.2
  %v2177 = vmul.f32 %v2169, 0.2
  %v2178 = vmul.f32 %v2170, 0.2
  %v2179 = vmul.f32 %v2171, 0.2
  %v2180 = vmul.f32 %v2172, 0.2
  %v2181 = vmax.f32 %v2165, %v2173
  %v2182 = vmax.f32 %v2166, %v2174
  %v2183 = vmax.f32 %v2167, %v2175
  %v2184 = vmax.f32 %v2168, %v2176
  %v2185 = vmax.f32 %v2169, %v2177
  %v2186 = vmax.f32 %v2170, %v2178
  %v2187 = vmax.f32 %v2171, %v2179
  %v2188 = vmax.f32 %v2172, %v2180
  %v2189 = vsel %vm69, %v2181, -1e+30
  %v2190 = vsel %vm70, %v2182, -1e+30
  %v2191 = vsel %vm71, %v2183, -1e+30
  %v2192 = vsel %vm72, %v2184, -1e+30
  %v2193 = vsel %vm73, %v2185, -1e+30
  %v2194 = vsel %vm74, %v2186, -1e+30
  %v2195 = vsel %vm75, %v2187, -1e+30
  %v2196 = vsel %vm76, %v2188, -1e+30
  %v2197 = vsel %vm217, %v2189, -inf
  %2198 = vmax.xlane.f32.xlu0 %v2197
  %v2199 = vpop.xlane.xlu0 %2198
  %v2200 = vsel %vm217, %v2190, -inf
  %2201 = vmax.xlane.f32.xlu0 %v2200
  %v2202 = vpop.xlane.xlu0 %2201
  %v2203 = vsel %vm217, %v2191, -inf
  %2204 = vmax.xlane.f32.xlu0 %v2203
  %v2205 = vpop.xlane.xlu0 %2204
  %v2206 = vsel %vm217, %v2192, -inf
  %2207 = vmax.xlane.f32.xlu0 %v2206
  %v2208 = vpop.xlane.xlu0 %2207
  %v2209 = vsel %vm217, %v2193, -inf
  %2210 = vmax.xlane.f32.xlu0 %v2209
  %v2211 = vpop.xlane.xlu0 %2210
  %v2212 = vsel %vm217, %v2194, -inf
  %2213 = vmax.xlane.f32.xlu0 %v2212
  %v2214 = vpop.xlane.xlu0 %2213
  %v2215 = vsel %vm217, %v2195, -inf
  %2216 = vmax.xlane.f32.xlu0 %v2215
  %v2217 = vpop.xlane.xlu0 %2216
  %v2218 = vsel %vm217, %v2196, -inf
  %2219 = vmax.xlane.f32.xlu0 %v2218
  %v2220 = vpop.xlane.xlu0 %2219
  %v2221 = vmax.f32 %v133, %v2199
  %v2222 = vmax.f32 %v134, %v2202
  %v2223 = vmax.f32 %v135, %v2205
  %v2224 = vmax.f32 %v136, %v2208
  %v2225 = vmax.f32 %v137, %v2211
  %v2226 = vmax.f32 %v138, %v2214
  %v2227 = vmax.f32 %v139, %v2217
  %v2228 = vmax.f32 %v140, %v2220
  %2230 = vset.pattern.permute.xlu0 7
  %2231 = vperm.xlu0 %2230, %v2221
  %v2232 = vpop.permute.xlu0 %2231
  %2235 = vset.pattern.permute.xlu0 7
  %2236 = vperm.xlu0 %2235, %v2222
  %v2237 = vpop.permute.xlu0 %2236
  %2240 = vset.pattern.permute.xlu0 7
  %2241 = vperm.xlu0 %2240, %v2223
  %v2242 = vpop.permute.xlu0 %2241
  %2245 = vset.pattern.permute.xlu0 7
  %2246 = vperm.xlu0 %2245, %v2224
  %v2247 = vpop.permute.xlu0 %2246
  %2250 = vset.pattern.permute.xlu0 7
  %2251 = vperm.xlu0 %2250, %v2225
  %v2252 = vpop.permute.xlu0 %2251
  %2255 = vset.pattern.permute.xlu0 7
  %2256 = vperm.xlu0 %2255, %v2226
  %v2257 = vpop.permute.xlu0 %2256
  %2260 = vset.pattern.permute.xlu0 7
  %2261 = vperm.xlu0 %2260, %v2227
  %v2262 = vpop.permute.xlu0 %2261
  %2265 = vset.pattern.permute.xlu0 7
  %2266 = vperm.xlu0 %2265, %v2228
  %v2267 = vpop.permute.xlu0 %2266
  %v2269 = vsub.f32 %v2189, %v2232
  %v2270 = vsub.f32 %v2190, %v2237
  %v2271 = vsub.f32 %v2191, %v2242
  %v2272 = vsub.f32 %v2192, %v2247
  %v2273 = vsub.f32 %v2193, %v2252
  %v2274 = vsub.f32 %v2194, %v2257
  %v2275 = vsub.f32 %v2195, %v2262
  %v2276 = vsub.f32 %v2196, %v2267
  %v2277 = vmul.f32 %v2269, 1.442695
  %v2278 = vpow.pop %v2277
  %v2279 = vmul.f32 %v2270, 1.442695
  %v2280 = vpow.pop %v2279
  %v2281 = vmul.f32 %v2271, 1.442695
  %v2282 = vpow.pop %v2281
  %v2283 = vmul.f32 %v2272, 1.442695
  %v2284 = vpow.pop %v2283
  %v2285 = vmul.f32 %v2273, 1.442695
  %v2286 = vpow.pop %v2285
  %v2287 = vmul.f32 %v2274, 1.442695
  %v2288 = vpow.pop %v2287
  %v2289 = vmul.f32 %v2275, 1.442695
  %v2290 = vpow.pop %v2289
  %v2291 = vmul.f32 %v2276, 1.442695
  %v2292 = vpow.pop %v2291
  %v2293 = vsel %vm217, %v2278, 0.0
  %2294 = vadd.xlane.f32.xlu0 %v2293
  %v2295 = vpop.xlane.xlu0 %2294
  %v2296 = vsel %vm217, %v2280, 0.0
  %2297 = vadd.xlane.f32.xlu0 %v2296
  %v2298 = vpop.xlane.xlu0 %2297
  %v2299 = vsel %vm217, %v2282, 0.0
  %2300 = vadd.xlane.f32.xlu0 %v2299
  %v2301 = vpop.xlane.xlu0 %2300
  %v2302 = vsel %vm217, %v2284, 0.0
  %2303 = vadd.xlane.f32.xlu0 %v2302
  %v2304 = vpop.xlane.xlu0 %2303
  %v2305 = vsel %vm217, %v2286, 0.0
  %2306 = vadd.xlane.f32.xlu0 %v2305
  %v2307 = vpop.xlane.xlu0 %2306
  %v2308 = vsel %vm217, %v2288, 0.0
  %2309 = vadd.xlane.f32.xlu0 %v2308
  %v2310 = vpop.xlane.xlu0 %2309
  %v2311 = vsel %vm217, %v2290, 0.0
  %2312 = vadd.xlane.f32.xlu0 %v2311
  %v2313 = vpop.xlane.xlu0 %2312
  %v2314 = vsel %vm217, %v2292, 0.0
  %2315 = vadd.xlane.f32.xlu0 %v2314
  %v2316 = vpop.xlane.xlu0 %2315
  %v2317 = vpack.c.bf16 %v2280, %v2278
  %v2318 = vpack.c.bf16 %v2284, %v2282
  %v2319 = vpack.c.bf16 %v2288, %v2286
  %v2320 = vpack.c.bf16 %v2292, %v2290
  %2321 = vrot.lane.b32.xlu0 %v358, 72
  %v2322 = vpop.permute.xlu0 %2321
  %2323 = vrot.lane.b32.xlu0 %v359, 72
  %v2324 = vpop.permute.xlu0 %2323
  %2325 = vrot.lane.b32.xlu0 %v360, 72
  %v2326 = vpop.permute.xlu0 %2325
  %2327 = vrot.lane.b32.xlu0 %v361, 72
  %v2328 = vpop.permute.xlu0 %2327
  %v2334 = vsel %vm217, %v2317, 0
  %v2337 = vsel %vm217, %v2318, 0
  %v2340 = vsel %vm217, %v2319, 0
  %v2343 = vsel %vm217, %v2320, 0
  %2345 = vmatprep.subr.bf16.mxu0 0
  %2346 = vmatpush1.bf16.msra.mxu0 %v2322
  %2347 = vmatprep.subr.bf16.mxu0 0
  %2348 = vmatpush1.bf16.msra.mxu0 %v2324
  %2349 = vmatprep.subr.bf16.mxu0 0
  %2350 = vmatpush1.bf16.msra.mxu0 %v2326
  %2351 = vmatprep.subr.bf16.mxu0 0
  %2352 = vmatpush1.bf16.msra.mxu0 %v2328
  %2353 = vmatprep.subr.bf16.mxu0 0
  %2354 = vmatpush1.bf16.msra.mxu0 0
  %2355 = vmatprep.subr.bf16.mxu0 0
  %2356 = vmatpush1.bf16.msra.mxu0 0
  %2357 = vmatprep.subr.bf16.mxu0 0
  %2358 = vmatpush1.bf16.msra.mxu0 0
  %2359 = vmatprep.subr.bf16.mxu0 0
  %2360 = vmatpush1.bf16.msra.mxu0 0
  %2361 = vmatprep.subr.bf16.mxu0 0
  %2362 = vmatpush1.bf16.msra.mxu0 0
  %2363 = vmatprep.subr.bf16.mxu0 0
  %2364 = vmatpush1.bf16.msra.mxu0 0
  %2365 = vmatprep.subr.bf16.mxu0 0
  %2366 = vmatpush1.bf16.msra.mxu0 0
  %2367 = vmatprep.subr.bf16.mxu0 0
  %2368 = vmatpush1.bf16.msra.mxu0 0
  %2369 = vmatprep.subr.bf16.mxu0 0
  %2370 = vmatpush1.bf16.msra.mxu0 0
  %2371 = vmatprep.subr.bf16.mxu0 0
  %2372 = vmatpush1.bf16.msra.mxu0 0
  %2373 = vmatprep.subr.bf16.mxu0 0
  %2374 = vmatpush1.bf16.msra.mxu0 0
  %2375 = vmatprep.subr.bf16.mxu0 0
  %2376 = vmatpush1.bf16.msra.mxu0 0
  %2377 = vmatprep.mubr.bf16.mxu0 0
  %2378 = vmatmul.mubr.bf16.gmra.mrb[0].mxu0 %v2334
  %v2379 = vpop.f32.mrb[0].mxu0
  %v2380 = vadd.f32 0.0, %v2379
  %v2381 = vpop.f32.mrb[0].mxu0
  %v2382 = vpop.f32.mrb[0].mxu0
  %v2383 = vadd.f32 0.0, %v2382
  %v2384 = vpop.f32.mrb[0].mxu0
  %2385 = vmatprep.mubr.bf16.mxu0 0
  %2386 = vmatmul.mubr.bf16.gmra.mrb[0].mxu0 %v2337
  %v2387 = vpop.f32.mrb[0].mxu0
  %v2388 = vadd.f32 0.0, %v2387
  %v2389 = vpop.f32.mrb[0].mxu0
  %v2390 = vpop.f32.mrb[0].mxu0
  %v2391 = vadd.f32 0.0, %v2390
  %v2392 = vpop.f32.mrb[0].mxu0
  %2393 = vmatprep.mubr.bf16.mxu0 0
  %2394 = vmatmul.mubr.bf16.gmra.mrb[0].mxu0 %v2340
  %v2395 = vpop.f32.mrb[0].mxu0
  %v2396 = vadd.f32 0.0, %v2395
  %v2397 = vpop.f32.mrb[0].mxu0
  %v2398 = vpop.f32.mrb[0].mxu0
  %v2399 = vadd.f32 0.0, %v2398
  %v2400 = vpop.f32.mrb[0].mxu0
  %2401 = vmatprep.mubr.bf16.mxu0 0
  %2402 = vmatmul.mubr.bf16.gmra.mrb[0].mxu0 %v2343
  %v2403 = vpop.f32.mrb[0].mxu0
  %v2404 = vadd.f32 0.0, %v2403
  %v2405 = vpop.f32.mrb[0].mxu0
  %v2406 = vpop.f32.mrb[0].mxu0
  %v2407 = vadd.f32 0.0, %v2406
  %v2408 = vpop.f32.mrb[0].mxu0
  %2409 = vdwg.mxu0
  %vm2410 = vcmask 7168
  %v2411 = vsel %vm2410, %v242, %v535
  %v2412 = vsel %vm2410, %v243, %v536
  %v2413 = vsel %vm2410, %v244, %v537
  %v2414 = vsel %vm2410, %v245, %v538
  %v2415 = vsel %vm2410, %v246, %v539
  %v2416 = vsel %vm2410, %v247, %v540
  %v2417 = vsel %vm2410, %v248, %v541
  %v2418 = vsel %vm2410, %v249, %v542
  %vm2419 = vcmask 15360
  %v2420 = vsel %vm2419, %v2411, %v816
  %v2421 = vsel %vm2419, %v2412, %v817
  %v2422 = vsel %vm2419, %v2413, %v818
  %v2423 = vsel %vm2419, %v2414, %v819
  %v2424 = vsel %vm2419, %v2415, %v820
  %v2425 = vsel %vm2419, %v2416, %v821
  %v2426 = vsel %vm2419, %v2417, %v822
  %v2427 = vsel %vm2419, %v2418, %v823
  %vm2428 = vcmask 23552
  %v2429 = vsel %vm2428, %v2420, %v1097
  %v2430 = vsel %vm2428, %v2421, %v1098
  %v2431 = vsel %vm2428, %v2422, %v1099
  %v2432 = vsel %vm2428, %v2423, %v1100
  %v2433 = vsel %vm2428, %v2424, %v1101
  %v2434 = vsel %vm2428, %v2425, %v1102
  %v2435 = vsel %vm2428, %v2426, %v1103
  %v2436 = vsel %vm2428, %v2427, %v1104
  %vm2437 = vcmask 31744
  %v2438 = vsel %vm2437, %v2429, %v1378
  %v2439 = vsel %vm2437, %v2430, %v1379
  %v2440 = vsel %vm2437, %v2431, %v1380
  %v2441 = vsel %vm2437, %v2432, %v1381
  %v2442 = vsel %vm2437, %v2433, %v1382
  %v2443 = vsel %vm2437, %v2434, %v1383
  %v2444 = vsel %vm2437, %v2435, %v1384
  %v2445 = vsel %vm2437, %v2436, %v1385
  %vm2446 = vcmask 39936
  %v2447 = vsel %vm2446, %v2438, %v1659
  %v2448 = vsel %vm2446, %v2439, %v1660
  %v2449 = vsel %vm2446, %v2440, %v1661
  %v2450 = vsel %vm2446, %v2441, %v1662
  %v2451 = vsel %vm2446, %v2442, %v1663
  %v2452 = vsel %vm2446, %v2443, %v1664
  %v2453 = vsel %vm2446, %v2444, %v1665
  %v2454 = vsel %vm2446, %v2445, %v1666
  %vm2455 = vcmask 48128
  %v2456 = vsel %vm2455, %v2447, %v1940
  %v2457 = vsel %vm2455, %v2448, %v1941
  %v2458 = vsel %vm2455, %v2449, %v1942
  %v2459 = vsel %vm2455, %v2450, %v1943
  %v2460 = vsel %vm2455, %v2451, %v1944
  %v2461 = vsel %vm2455, %v2452, %v1945
  %v2462 = vsel %vm2455, %v2453, %v1946
  %v2463 = vsel %vm2455, %v2454, %v1947
  %vm2464 = vcmask 56320
  %v2465 = vsel %vm2464, %v2456, %v2221
  %v2466 = vsel %vm2464, %v2457, %v2222
  %v2467 = vsel %vm2464, %v2458, %v2223
  %v2468 = vsel %vm2464, %v2459, %v2224
  %v2469 = vsel %vm2464, %v2460, %v2225
  %v2470 = vsel %vm2464, %v2461, %v2226
  %v2471 = vsel %vm2464, %v2462, %v2227
  %v2472 = vsel %vm2464, %v2463, %v2228
  %v2473 = vsel %vm2410, %v316, %v609
  %v2474 = vsel %vm2410, %v319, %v612
  %v2475 = vsel %vm2410, %v322, %v615
  %v2476 = vsel %vm2410, %v325, %v618
  %v2477 = vsel %vm2410, %v328, %v621
  %v2478 = vsel %vm2410, %v331, %v624
  %v2479 = vsel %vm2410, %v334, %v627
  %v2480 = vsel %vm2410, %v337, %v630
  %v2481 = vsel %vm2419, %v2473, %v890
  %v2482 = vsel %vm2419, %v2474, %v893
  %v2483 = vsel %vm2419, %v2475, %v896
  %v2484 = vsel %vm2419, %v2476, %v899
  %v2485 = vsel %vm2419, %v2477, %v902
  %v2486 = vsel %vm2419, %v2478, %v905
  %v2487 = vsel %vm2419, %v2479, %v908
  %v2488 = vsel %vm2419, %v2480, %v911
  %v2489 = vsel %vm2428, %v2481, %v1171
  %v2490 = vsel %vm2428, %v2482, %v1174
  %v2491 = vsel %vm2428, %v2483, %v1177
  %v2492 = vsel %vm2428, %v2484, %v1180
  %v2493 = vsel %vm2428, %v2485, %v1183
  %v2494 = vsel %vm2428, %v2486, %v1186
  %v2495 = vsel %vm2428, %v2487, %v1189
  %v2496 = vsel %vm2428, %v2488, %v1192
  %v2497 = vsel %vm2437, %v2489, %v1452
  %v2498 = vsel %vm2437, %v2490, %v1455
  %v2499 = vsel %vm2437, %v2491, %v1458
  %v2500 = vsel %vm2437, %v2492, %v1461
  %v2501 = vsel %vm2437, %v2493, %v1464
  %v2502 = vsel %vm2437, %v2494, %v1467
  %v2503 = vsel %vm2437, %v2495, %v1470
  %v2504 = vsel %vm2437, %v2496, %v1473
  %v2505 = vsel %vm2446, %v2497, %v1733
  %v2506 = vsel %vm2446, %v2498, %v1736
  %v2507 = vsel %vm2446, %v2499, %v1739
  %v2508 = vsel %vm2446, %v2500, %v1742
  %v2509 = vsel %vm2446, %v2501, %v1745
  %v2510 = vsel %vm2446, %v2502, %v1748
  %v2511 = vsel %vm2446, %v2503, %v1751
  %v2512 = vsel %vm2446, %v2504, %v1754
  %v2513 = vsel %vm2455, %v2505, %v2014
  %v2514 = vsel %vm2455, %v2506, %v2017
  %v2515 = vsel %vm2455, %v2507, %v2020
  %v2516 = vsel %vm2455, %v2508, %v2023
  %v2517 = vsel %vm2455, %v2509, %v2026
  %v2518 = vsel %vm2455, %v2510, %v2029
  %v2519 = vsel %vm2455, %v2511, %v2032
  %v2520 = vsel %vm2455, %v2512, %v2035
  %v2521 = vsel %vm2464, %v2513, %v2295
  %v2522 = vsel %vm2464, %v2514, %v2298
  %v2523 = vsel %vm2464, %v2515, %v2301
  %v2524 = vsel %vm2464, %v2516, %v2304
  %v2525 = vsel %vm2464, %v2517, %v2307
  %v2526 = vsel %vm2464, %v2518, %v2310
  %v2527 = vsel %vm2464, %v2519, %v2313
  %v2528 = vsel %vm2464, %v2520, %v2316
  %2537 = vrot.lane.b32.xlu0 %v694, 8
  %v2538 = vpop.permute.xlu0 %2537
  %2539 = vrot.lane.b32.xlu0 %v697, 8
  %v2540 = vpop.permute.xlu0 %2539
  %2541 = vrot.lane.b32.xlu0 %v702, 8
  %v2542 = vpop.permute.xlu0 %2541
  %2543 = vrot.lane.b32.xlu0 %v705, 8
  %v2544 = vpop.permute.xlu0 %2543
  %2545 = vrot.lane.b32.xlu0 %v710, 8
  %v2546 = vpop.permute.xlu0 %2545
  %2547 = vrot.lane.b32.xlu0 %v713, 8
  %v2548 = vpop.permute.xlu0 %2547
  %2549 = vrot.lane.b32.xlu0 %v718, 8
  %v2550 = vpop.permute.xlu0 %2549
  %2551 = vrot.lane.b32.xlu0 %v721, 8
  %v2552 = vpop.permute.xlu0 %2551
  %2569 = vrot.lane.b32.xlu0 %v975, 16
  %v2570 = vpop.permute.xlu0 %2569
  %2571 = vrot.lane.b32.xlu0 %v978, 16
  %v2572 = vpop.permute.xlu0 %2571
  %2573 = vrot.lane.b32.xlu0 %v983, 16
  %v2574 = vpop.permute.xlu0 %2573
  %2575 = vrot.lane.b32.xlu0 %v986, 16
  %v2576 = vpop.permute.xlu0 %2575
  %2577 = vrot.lane.b32.xlu0 %v991, 16
  %v2578 = vpop.permute.xlu0 %2577
  %2579 = vrot.lane.b32.xlu0 %v994, 16
  %v2580 = vpop.permute.xlu0 %2579
  %2581 = vrot.lane.b32.xlu0 %v999, 16
  %v2582 = vpop.permute.xlu0 %2581
  %2583 = vrot.lane.b32.xlu0 %v1002, 16
  %v2584 = vpop.permute.xlu0 %2583
  %2601 = vrot.lane.b32.xlu0 %v1256, 24
  %v2602 = vpop.permute.xlu0 %2601
  %2603 = vrot.lane.b32.xlu0 %v1259, 24
  %v2604 = vpop.permute.xlu0 %2603
  %2605 = vrot.lane.b32.xlu0 %v1264, 24
  %v2606 = vpop.permute.xlu0 %2605
  %2607 = vrot.lane.b32.xlu0 %v1267, 24
  %v2608 = vpop.permute.xlu0 %2607
  %2609 = vrot.lane.b32.xlu0 %v1272, 24
  %v2610 = vpop.permute.xlu0 %2609
  %2611 = vrot.lane.b32.xlu0 %v1275, 24
  %v2612 = vpop.permute.xlu0 %2611
  %2613 = vrot.lane.b32.xlu0 %v1280, 24
  %v2614 = vpop.permute.xlu0 %2613
  %2615 = vrot.lane.b32.xlu0 %v1283, 24
  %v2616 = vpop.permute.xlu0 %2615
  %2633 = vrot.lane.b32.xlu0 %v1537, 32
  %v2634 = vpop.permute.xlu0 %2633
  %2635 = vrot.lane.b32.xlu0 %v1540, 32
  %v2636 = vpop.permute.xlu0 %2635
  %2637 = vrot.lane.b32.xlu0 %v1545, 32
  %v2638 = vpop.permute.xlu0 %2637
  %2639 = vrot.lane.b32.xlu0 %v1548, 32
  %v2640 = vpop.permute.xlu0 %2639
  %2641 = vrot.lane.b32.xlu0 %v1553, 32
  %v2642 = vpop.permute.xlu0 %2641
  %2643 = vrot.lane.b32.xlu0 %v1556, 32
  %v2644 = vpop.permute.xlu0 %2643
  %2645 = vrot.lane.b32.xlu0 %v1561, 32
  %v2646 = vpop.permute.xlu0 %2645
  %2647 = vrot.lane.b32.xlu0 %v1564, 32
  %v2648 = vpop.permute.xlu0 %2647
  %2665 = vrot.lane.b32.xlu0 %v1818, 40
  %v2666 = vpop.permute.xlu0 %2665
  %2667 = vrot.lane.b32.xlu0 %v1821, 40
  %v2668 = vpop.permute.xlu0 %2667
  %2669 = vrot.lane.b32.xlu0 %v1826, 40
  %v2670 = vpop.permute.xlu0 %2669
  %2671 = vrot.lane.b32.xlu0 %v1829, 40
  %v2672 = vpop.permute.xlu0 %2671
  %2673 = vrot.lane.b32.xlu0 %v1834, 40
  %v2674 = vpop.permute.xlu0 %2673
  %2675 = vrot.lane.b32.xlu0 %v1837, 40
  %v2676 = vpop.permute.xlu0 %2675
  %2677 = vrot.lane.b32.xlu0 %v1842, 40
  %v2678 = vpop.permute.xlu0 %2677
  %2679 = vrot.lane.b32.xlu0 %v1845, 40
  %v2680 = vpop.permute.xlu0 %2679
  %2697 = vrot.lane.b32.xlu0 %v2099, 48
  %v2698 = vpop.permute.xlu0 %2697
  %2699 = vrot.lane.b32.xlu0 %v2102, 48
  %v2700 = vpop.permute.xlu0 %2699
  %2701 = vrot.lane.b32.xlu0 %v2107, 48
  %v2702 = vpop.permute.xlu0 %2701
  %2703 = vrot.lane.b32.xlu0 %v2110, 48
  %v2704 = vpop.permute.xlu0 %2703
  %2705 = vrot.lane.b32.xlu0 %v2115, 48
  %v2706 = vpop.permute.xlu0 %2705
  %2707 = vrot.lane.b32.xlu0 %v2118, 48
  %v2708 = vpop.permute.xlu0 %2707
  %2709 = vrot.lane.b32.xlu0 %v2123, 48
  %v2710 = vpop.permute.xlu0 %2709
  %2711 = vrot.lane.b32.xlu0 %v2126, 48
  %v2712 = vpop.permute.xlu0 %2711
  %2729 = vrot.lane.b32.xlu0 %v2380, 56
  %v2730 = vpop.permute.xlu0 %2729
  %2731 = vrot.lane.b32.xlu0 %v2383, 56
  %v2732 = vpop.permute.xlu0 %2731
  %2733 = vrot.lane.b32.xlu0 %v2388, 56
  %v2734 = vpop.permute.xlu0 %2733
  %2735 = vrot.lane.b32.xlu0 %v2391, 56
  %v2736 = vpop.permute.xlu0 %2735
  %2737 = vrot.lane.b32.xlu0 %v2396, 56
  %v2738 = vpop.permute.xlu0 %2737
  %2739 = vrot.lane.b32.xlu0 %v2399, 56
  %v2740 = vpop.permute.xlu0 %2739
  %2741 = vrot.lane.b32.xlu0 %v2404, 56
  %v2742 = vpop.permute.xlu0 %2741
  %2743 = vrot.lane.b32.xlu0 %v2407, 56
  %v2744 = vpop.permute.xlu0 %2743
  %vm2753 = vcmask 64512
  %v2754 = vsel %vm2753, %v413, %v2538
  %v2755 = vsel %vm2753, %v416, %v2540
  %v2756 = vsel %vm2753, %v421, %v2542
  %v2757 = vsel %vm2753, %v424, %v2544
  %v2758 = vsel %vm2753, %v429, %v2546
  %v2759 = vsel %vm2753, %v432, %v2548
  %v2760 = vsel %vm2753, %v437, %v2550
  %v2761 = vsel %vm2753, %v440, %v2552
  %vm2762 = vcmask 130048
  %v2763 = vsel %vm2762, %v2754, %v2570
  %v2764 = vsel %vm2762, %v2755, %v2572
  %v2765 = vsel %vm2762, %v2756, %v2574
  %v2766 = vsel %vm2762, %v2757, %v2576
  %v2767 = vsel %vm2762, %v2758, %v2578
  %v2768 = vsel %vm2762, %v2759, %v2580
  %v2769 = vsel %vm2762, %v2760, %v2582
  %v2770 = vsel %vm2762, %v2761, %v2584
  %vm2771 = vcmask 195584
  %v2772 = vsel %vm2771, %v2763, %v2602
  %v2773 = vsel %vm2771, %v2764, %v2604
  %v2774 = vsel %vm2771, %v2765, %v2606
  %v2775 = vsel %vm2771, %v2766, %v2608
  %v2776 = vsel %vm2771, %v2767, %v2610
  %v2777 = vsel %vm2771, %v2768, %v2612
  %v2778 = vsel %vm2771, %v2769, %v2614
  %v2779 = vsel %vm2771, %v2770, %v2616
  %vm2780 = vcmask 261120
  %v2781 = vsel %vm2780, %v2772, %v2634
  %v2782 = vsel %vm2780, %v2773, %v2636
  %v2783 = vsel %vm2780, %v2774, %v2638
  %v2784 = vsel %vm2780, %v2775, %v2640
  %v2785 = vsel %vm2780, %v2776, %v2642
  %v2786 = vsel %vm2780, %v2777, %v2644
  %v2787 = vsel %vm2780, %v2778, %v2646
  %v2788 = vsel %vm2780, %v2779, %v2648
  %vm2789 = vcmask 326656
  %v2790 = vsel %vm2789, %v2781, %v2666
  %v2791 = vsel %vm2789, %v2782, %v2668
  %v2792 = vsel %vm2789, %v2783, %v2670
  %v2793 = vsel %vm2789, %v2784, %v2672
  %v2794 = vsel %vm2789, %v2785, %v2674
  %v2795 = vsel %vm2789, %v2786, %v2676
  %v2796 = vsel %vm2789, %v2787, %v2678
  %v2797 = vsel %vm2789, %v2788, %v2680
  %vm2798 = vcmask 392192
  %v2799 = vsel %vm2798, %v2790, %v2698
  %v2800 = vsel %vm2798, %v2791, %v2700
  %v2801 = vsel %vm2798, %v2792, %v2702
  %v2802 = vsel %vm2798, %v2793, %v2704
  %v2803 = vsel %vm2798, %v2794, %v2706
  %v2804 = vsel %vm2798, %v2795, %v2708
  %v2805 = vsel %vm2798, %v2796, %v2710
  %v2806 = vsel %vm2798, %v2797, %v2712
  %vm2807 = vcmask 457728
  %v2808 = vsel %vm2807, %v2799, %v2730
  %v2809 = vsel %vm2807, %v2800, %v2732
  %v2810 = vsel %vm2807, %v2801, %v2734
  %v2811 = vsel %vm2807, %v2802, %v2736
  %v2812 = vsel %vm2807, %v2803, %v2738
  %v2813 = vsel %vm2807, %v2804, %v2740
  %v2814 = vsel %vm2807, %v2805, %v2742
  %v2815 = vsel %vm2807, %v2806, %v2744
  %v2816 = vsub.f32 %v133, %v2465
  %v2817 = vsub.f32 %v134, %v2466
  %v2818 = vsub.f32 %v135, %v2467
  %v2819 = vsub.f32 %v136, %v2468
  %v2820 = vsub.f32 %v137, %v2469
  %v2821 = vsub.f32 %v138, %v2470
  %v2822 = vsub.f32 %v139, %v2471
  %v2823 = vsub.f32 %v140, %v2472
  %v2824 = vmul.f32 %v2816, 1.442695
  %v2825 = vpow.pop %v2824
  %v2826 = vmul.f32 %v2817, 1.442695
  %v2827 = vpow.pop %v2826
  %v2828 = vmul.f32 %v2818, 1.442695
  %v2829 = vpow.pop %v2828
  %v2830 = vmul.f32 %v2819, 1.442695
  %v2831 = vpow.pop %v2830
  %v2832 = vmul.f32 %v2820, 1.442695
  %v2833 = vpow.pop %v2832
  %v2834 = vmul.f32 %v2821, 1.442695
  %v2835 = vpow.pop %v2834
  %v2836 = vmul.f32 %v2822, 1.442695
  %v2837 = vpow.pop %v2836
  %v2838 = vmul.f32 %v2823, 1.442695
  %v2839 = vpow.pop %v2838
  %v2840 = vld [vmem:[%s4] sm:$0xff]
  %v2842 = vsel %vm2753, %v2825, 0
  %v2845 = vsel %vm2753, %v2827, 0
  %v2848 = vsel %vm2753, %v2829, 0
  %v2851 = vsel %vm2753, %v2831, 0
  %v2854 = vsel %vm2753, %v2833, 0
  %v2857 = vsel %vm2753, %v2835, 0
  %v2860 = vsel %vm2753, %v2837, 0
  %v2863 = vsel %vm2753, %v2839, 0
  %2865 = vmatprep.subr.mxu0 0.0
  %2866 = vmatpush1.msra.mxu0 %v2840
  %2867 = vmatprep.subr.mxu0 0.0
  %2868 = vmatpush1.msra.mxu0 0.0
  %2869 = vmatprep.subr.mxu0 0.0
  %2870 = vmatpush1.msra.mxu0 0.0
  %2871 = vmatprep.subr.mxu0 0.0
  %2872 = vmatpush1.msra.mxu0 0.0
  %2873 = vmatprep.subr.mxu0 0.0
  %2874 = vmatpush1.msra.mxu0 0.0
  %2875 = vmatprep.subr.mxu0 0.0
  %2876 = vmatpush1.msra.mxu0 0.0
  %2877 = vmatprep.subr.mxu0 0.0
  %2878 = vmatpush1.msra.mxu0 0.0
  %2879 = vmatprep.subr.mxu0 0.0
  %2880 = vmatpush1.msra.mxu0 0.0
  %2881 = vmatprep.subr.mxu0 0.0
  %2882 = vmatpush1.msra.mxu0 0.0
  %2883 = vmatprep.subr.mxu0 0.0
  %2884 = vmatpush1.msra.mxu0 0.0
  %2885 = vmatprep.subr.mxu0 0.0
  %2886 = vmatpush1.msra.mxu0 0.0
  %2887 = vmatprep.subr.mxu0 0.0
  %2888 = vmatpush1.msra.mxu0 0.0
  %2889 = vmatprep.subr.mxu0 0.0
  %2890 = vmatpush1.msra.mxu0 0.0
  %2891 = vmatprep.subr.mxu0 0.0
  %2892 = vmatpush1.msra.mxu0 0.0
  %2893 = vmatprep.subr.mxu0 0.0
  %2894 = vmatpush1.msra.mxu0 0.0
  %2895 = vmatprep.subr.mxu0 0.0
  %2896 = vmatpush1.msra.mxu0 0.0
  %2897 = vmatprep.subr.mxu0 0.0
  %2898 = vmatpush1.msra.mxu0 0.0
  %2899 = vmatprep.subr.mxu0 0.0
  %2900 = vmatpush1.msra.mxu0 0.0
  %2901 = vmatprep.subr.mxu0 0.0
  %2902 = vmatpush1.msra.mxu0 0.0
  %2903 = vmatprep.subr.mxu0 0.0
  %2904 = vmatpush1.msra.mxu0 0.0
  %2905 = vmatprep.subr.mxu0 0.0
  %2906 = vmatpush1.msra.mxu0 0.0
  %2907 = vmatprep.subr.mxu0 0.0
  %2908 = vmatpush1.msra.mxu0 0.0
  %2909 = vmatprep.subr.mxu0 0.0
  %2910 = vmatpush1.msra.mxu0 0.0
  %2911 = vmatprep.subr.mxu0 0.0
  %2912 = vmatpush1.msra.mxu0 0.0
  %2913 = vmatprep.subr.mxu0 0.0
  %2914 = vmatpush1.msra.mxu0 0.0
  %2915 = vmatprep.subr.mxu0 0.0
  %2916 = vmatpush1.msra.mxu0 0.0
  %2917 = vmatprep.subr.mxu0 0.0
  %2918 = vmatpush1.msra.mxu0 0.0
  %2919 = vmatprep.subr.mxu0 0.0
  %2920 = vmatpush1.msra.mxu0 0.0
  %2921 = vmatprep.subr.mxu0 0.0
  %2922 = vmatpush1.msra.mxu0 0.0
  %2923 = vmatprep.subr.mxu0 0.0
  %2924 = vmatpush1.msra.mxu0 0.0
  %2925 = vmatprep.subr.mxu0 0.0
  %2926 = vmatpush1.msra.mxu0 0.0
  %2927 = vmatprep.subr.mxu0 0.0
  %2928 = vmatpush1.msra.mxu0 0.0
  %2929 = vmatprep.mubr.f32.mxu0 0.0
  %2930 = vmatmul.mubr.f32.gmra.mrb[0].mxu0 %v2842
  %v2931 = vpop.f32.mrb[0].mxu0
  %v2932 = vadd.f32 0.0, %v2931
  %v2933 = vpop.f32.mrb[0].mxu0
  %2934 = vmatprep.mubr.f32.mxu0 0.0
  %2935 = vmatmul.mubr.f32.gmra.mrb[0].mxu0 %v2845
  %v2936 = vpop.f32.mrb[0].mxu0
  %v2937 = vadd.f32 0.0, %v2936
  %v2938 = vpop.f32.mrb[0].mxu0
  %2939 = vmatprep.mubr.f32.mxu0 0.0
  %2940 = vmatmul.mubr.f32.gmra.mrb[0].mxu0 %v2848
  %v2941 = vpop.f32.mrb[0].mxu0
  %v2942 = vadd.f32 0.0, %v2941
  %v2943 = vpop.f32.mrb[0].mxu0
  %2944 = vmatprep.mubr.f32.mxu0 0.0
  %2945 = vmatmul.mubr.f32.gmra.mrb[0].mxu0 %v2851
  %v2946 = vpop.f32.mrb[0].mxu0
  %v2947 = vadd.f32 0.0, %v2946
  %v2948 = vpop.f32.mrb[0].mxu0
  %2949 = vmatprep.mubr.f32.mxu0 0.0
  %2950 = vmatmul.mubr.f32.gmra.mrb[0].mxu0 %v2854
  %v2951 = vpop.f32.mrb[0].mxu0
  %v2952 = vadd.f32 0.0, %v2951
  %v2953 = vpop.f32.mrb[0].mxu0
  %2954 = vmatprep.mubr.f32.mxu0 0.0
  %2955 = vmatmul.mubr.f32.gmra.mrb[0].mxu0 %v2857
  %v2956 = vpop.f32.mrb[0].mxu0
  %v2957 = vadd.f32 0.0, %v2956
  %v2958 = vpop.f32.mrb[0].mxu0
  %2959 = vmatprep.mubr.f32.mxu0 0.0
  %2960 = vmatmul.mubr.f32.gmra.mrb[0].mxu0 %v2860
  %v2961 = vpop.f32.mrb[0].mxu0
  %v2962 = vadd.f32 0.0, %v2961
  %v2963 = vpop.f32.mrb[0].mxu0
  %2964 = vmatprep.mubr.f32.mxu0 0.0
  %2965 = vmatmul.mubr.f32.gmra.mrb[0].mxu0 %v2863
  %v2966 = vpop.f32.mrb[0].mxu0
  %v2967 = vadd.f32 0.0, %v2966
  %v2968 = vpop.f32.mrb[0].mxu0
  %2969 = vdwg.mxu0
  %v2970 = vld [vmem:[#allocation3] sm:$0xff]
  %v2971 = vld [vmem:[#allocation3 + $0x8] sm:$0xff]
  %v2972 = vld [vmem:[#allocation3 + $0x10] sm:$0xff]
  %v2973 = vld [vmem:[#allocation3 + $0x18] sm:$0xff]
  %v2974 = vld [vmem:[#allocation3 + $0x20] sm:$0xff]
  %v2975 = vld [vmem:[#allocation3 + $0x28] sm:$0xff]
  %v2976 = vld [vmem:[#allocation3 + $0x30] sm:$0xff]
  %v2977 = vld [vmem:[#allocation3 + $0x38] sm:$0xff]
  %v2978 = vmul.f32 %v2825, %v2970
  %v2979 = vmul.f32 %v2827, %v2971
  %v2980 = vmul.f32 %v2829, %v2972
  %v2981 = vmul.f32 %v2831, %v2973
  %v2982 = vmul.f32 %v2833, %v2974
  %v2983 = vmul.f32 %v2835, %v2975
  %v2984 = vmul.f32 %v2837, %v2976
  %v2985 = vmul.f32 %v2839, %v2977
  %v2986 = vadd.f32 %v2978, %v2521
  %v2987 = vadd.f32 %v2979, %v2522
  %v2988 = vadd.f32 %v2980, %v2523
  %v2989 = vadd.f32 %v2981, %v2524
  %v2990 = vadd.f32 %v2982, %v2525
  %v2991 = vadd.f32 %v2983, %v2526
  %v2992 = vadd.f32 %v2984, %v2527
  %v2993 = vadd.f32 %v2985, %v2528
  %2994 = vst.msk [vmem:[#allocation3] sm:$0xff] %vm2753, %v2986
  %2995 = vst.msk [vmem:[#allocation3 + $0x8] sm:$0xff] %vm2753, %v2987
  %2996 = vst.msk [vmem:[#allocation3 + $0x10] sm:$0xff] %vm2753, %v2988
  %2997 = vst.msk [vmem:[#allocation3 + $0x18] sm:$0xff] %vm2753, %v2989
  %2998 = vst.msk [vmem:[#allocation3 + $0x20] sm:$0xff] %vm2753, %v2990
  %2999 = vst.msk [vmem:[#allocation3 + $0x28] sm:$0xff] %vm2753, %v2991
  %3000 = vst.msk [vmem:[#allocation3 + $0x30] sm:$0xff] %vm2753, %v2992
  %3001 = vst.msk [vmem:[#allocation3 + $0x38] sm:$0xff] %vm2753, %v2993
  %v3002 = vld [vmem:[#allocation4] sm:$0xff]
  %v3003 = vld [vmem:[#allocation4 + $0x8] sm:$0xff]
  %v3004 = vld [vmem:[#allocation4 + $0x10] sm:$0xff]
  %v3005 = vld [vmem:[#allocation4 + $0x18] sm:$0xff]
  %v3006 = vld [vmem:[#allocation4 + $0x20] sm:$0xff]
  %v3007 = vld [vmem:[#allocation4 + $0x28] sm:$0xff]
  %v3008 = vld [vmem:[#allocation4 + $0x30] sm:$0xff]
  %v3009 = vld [vmem:[#allocation4 + $0x38] sm:$0xff]
  %v3010 = vmul.f32 %v2932, %v3002
  %v3011 = vmul.f32 %v2937, %v3003
  %v3012 = vmul.f32 %v2942, %v3004
  %v3013 = vmul.f32 %v2947, %v3005
  %v3014 = vmul.f32 %v2952, %v3006
  %v3015 = vmul.f32 %v2957, %v3007
  %v3016 = vmul.f32 %v2962, %v3008
  %v3017 = vmul.f32 %v2967, %v3009
  %v3018 = vadd.f32 %v3010, %v2808
  %v3019 = vadd.f32 %v3011, %v2809
  %v3020 = vadd.f32 %v3012, %v2810
  %v3021 = vadd.f32 %v3013, %v2811
  %v3022 = vadd.f32 %v3014, %v2812
  %v3023 = vadd.f32 %v3015, %v2813
  %v3024 = vadd.f32 %v3016, %v2814
  %v3025 = vadd.f32 %v3017, %v2815
  %3026 = vst.msk [vmem:[#allocation4] sm:$0xff] %vm217, %v3018
  %3027 = vst.msk [vmem:[#allocation4 + $0x8] sm:$0xff] %vm217, %v3019
  %3028 = vst.msk [vmem:[#allocation4 + $0x10] sm:$0xff] %vm217, %v3020
  %3029 = vst.msk [vmem:[#allocation4 + $0x18] sm:$0xff] %vm217, %v3021
  %3030 = vst.msk [vmem:[#allocation4 + $0x20] sm:$0xff] %vm217, %v3022
  %3031 = vst.msk [vmem:[#allocation4 + $0x28] sm:$0xff] %vm217, %v3023
  %3032 = vst.msk [vmem:[#allocation4 + $0x30] sm:$0xff] %vm217, %v3024
  %3033 = vst.msk [vmem:[#allocation4 + $0x38] sm:$0xff] %vm217, %v3025
  %3034 = vst.msk [vmem:[#allocation2] sm:$0xff] %vm2753, %v2465
  %3035 = vst.msk [vmem:[#allocation2 + $0x8] sm:$0xff] %vm2753, %v2466
  %3036 = vst.msk [vmem:[#allocation2 + $0x10] sm:$0xff] %vm2753, %v2467
  %3037 = vst.msk [vmem:[#allocation2 + $0x18] sm:$0xff] %vm2753, %v2468
  %3038 = vst.msk [vmem:[#allocation2 + $0x20] sm:$0xff] %vm2753, %v2469
  %3039 = vst.msk [vmem:[#allocation2 + $0x28] sm:$0xff] %vm2753, %v2470
  %3040 = vst.msk [vmem:[#allocation2 + $0x30] sm:$0xff] %vm2753, %v2471
  %3041 = vst.msk [vmem:[#allocation2 + $0x38] sm:$0xff] %vm2753, %v2472
  // Predicated region
  $region26: #{_lambda_.5} parent=0 // pred_check
    %p3042 = pneg %p21
  $region27: #{_lambda_.5} parent=0 // pred_check_branch
    %3044 = sbr.rel (%p3042) target = $region29
  $region28: #{_lambda_.5} parent=0 // pred_region
    %v3045 = vld [vmem:[#allocation3] sm:$0xff]
    %v3046 = vld [vmem:[#allocation3 + $0x8] sm:$0xff]
    %v3047 = vld [vmem:[#allocation3 + $0x10] sm:$0xff]
    %v3048 = vld [vmem:[#allocation3 + $0x18] sm:$0xff]
    %v3049 = vld [vmem:[#allocation3 + $0x20] sm:$0xff]
    %v3050 = vld [vmem:[#allocation3 + $0x28] sm:$0xff]
    %v3051 = vld [vmem:[#allocation3 + $0x30] sm:$0xff]
    %v3052 = vld [vmem:[#allocation3 + $0x38] sm:$0xff]
    %v3053 = vrcp.pop %v3045
    %v3054 = vrcp.pop %v3046
    %v3055 = vrcp.pop %v3047
    %v3056 = vrcp.pop %v3048
    %v3057 = vrcp.pop %v3049
    %v3058 = vrcp.pop %v3050
    %v3059 = vrcp.pop %v3051
    %v3060 = vrcp.pop %v3052
    %v3061 = vld [vmem:[%s4] sm:$0xff]
    %v3063 = vsel %vm2753, %v3053, 0
    %v3066 = vsel %vm2753, %v3054, 0
    %v3069 = vsel %vm2753, %v3055, 0
    %v3072 = vsel %vm2753, %v3056, 0
    %v3075 = vsel %vm2753, %v3057, 0
    %v3078 = vsel %vm2753, %v3058, 0
    %v3081 = vsel %vm2753, %v3059, 0
    %v3084 = vsel %vm2753, %v3060, 0
    %3086 = vmatprep.subr.mxu0 0.0
    %3087 = vmatpush1.msra.mxu0 %v3061
    %3088 = vmatprep.subr.mxu0 0.0
    %3089 = vmatpush1.msra.mxu0 0.0
    %3090 = vmatprep.subr.mxu0 0.0
    %3091 = vmatpush1.msra.mxu0 0.0
    %3092 = vmatprep.subr.mxu0 0.0
    %3093 = vmatpush1.msra.mxu0 0.0
    %3094 = vmatprep.subr.mxu0 0.0
    %3095 = vmatpush1.msra.mxu0 0.0
    %3096 = vmatprep.subr.mxu0 0.0
    %3097 = vmatpush1.msra.mxu0 0.0
    %3098 = vmatprep.subr.mxu0 0.0
    %3099 = vmatpush1.msra.mxu0 0.0
    %3100 = vmatprep.subr.mxu0 0.0
    %3101 = vmatpush1.msra.mxu0 0.0
    %3102 = vmatprep.subr.mxu0 0.0
    %3103 = vmatpush1.msra.mxu0 0.0
    %3104 = vmatprep.subr.mxu0 0.0
    %3105 = vmatpush1.msra.mxu0 0.0
    %3106 = vmatprep.subr.mxu0 0.0
    %3107 = vmatpush1.msra.mxu0 0.0
    %3108 = vmatprep.subr.mxu0 0.0
    %3109 = vmatpush1.msra.mxu0 0.0
    %3110 = vmatprep.subr.mxu0 0.0
    %3111 = vmatpush1.msra.mxu0 0.0
    %3112 = vmatprep.subr.mxu0 0.0
    %3113 = vmatpush1.msra.mxu0 0.0
    %3114 = vmatprep.subr.mxu0 0.0
    %3115 = vmatpush1.msra.mxu0 0.0
    %3116 = vmatprep.subr.mxu0 0.0
    %3117 = vmatpush1.msra.mxu0 0.0
    %3118 = vmatprep.subr.mxu0 0.0
    %3119 = vmatpush1.msra.mxu0 0.0
    %3120 = vmatprep.subr.mxu0 0.0
    %3121 = vmatpush1.msra.mxu0 0.0
    %3122 = vmatprep.subr.mxu0 0.0
    %3123 = vmatpush1.msra.mxu0 0.0
    %3124 = vmatprep.subr.mxu0 0.0
    %3125 = vmatpush1.msra.mxu0 0.0
    %3126 = vmatprep.subr.mxu0 0.0
    %3127 = vmatpush1.msra.mxu0 0.0
    %3128 = vmatprep.subr.mxu0 0.0
    %3129 = vmatpush1.msra.mxu0 0.0
    %3130 = vmatprep.subr.mxu0 0.0
    %3131 = vmatpush1.msra.mxu0 0.0
    %3132 = vmatprep.subr.mxu0 0.0
    %3133 = vmatpush1.msra.mxu0 0.0
    %3134 = vmatprep.subr.mxu0 0.0
    %3135 = vmatpush1.msra.mxu0 0.0
    %3136 = vmatprep.subr.mxu0 0.0
    %3137 = vmatpush1.msra.mxu0 0.0
    %3138 = vmatprep.subr.mxu0 0.0
    %3139 = vmatpush1.msra.mxu0 0.0
    %3140 = vmatprep.subr.mxu0 0.0
    %3141 = vmatpush1.msra.mxu0 0.0
    %3142 = vmatprep.subr.mxu0 0.0
    %3143 = vmatpush1.msra.mxu0 0.0
    %3144 = vmatprep.subr.mxu0 0.0
    %3145 = vmatpush1.msra.mxu0 0.0
    %3146 = vmatprep.subr.mxu0 0.0
    %3147 = vmatpush1.msra.mxu0 0.0
    %3148 = vmatprep.subr.mxu0 0.0
    %3149 = vmatpush1.msra.mxu0 0.0
    %3150 = vmatprep.mubr.f32.mxu0 0.0
    %3151 = vmatmul.mubr.f32.gmra.mrb[0].mxu0 %v3063
    %v3152 = vpop.f32.mrb[0].mxu0
    %v3153 = vadd.f32 0.0, %v3152
    %v3154 = vpop.f32.mrb[0].mxu0
    %3155 = vmatprep.mubr.f32.mxu0 0.0
    %3156 = vmatmul.mubr.f32.gmra.mrb[0].mxu0 %v3066
    %v3157 = vpop.f32.mrb[0].mxu0
    %v3158 = vadd.f32 0.0, %v3157
    %v3159 = vpop.f32.mrb[0].mxu0
    %3160 = vmatprep.mubr.f32.mxu0 0.0
    %3161 = vmatmul.mubr.f32.gmra.mrb[0].mxu0 %v3069
    %v3162 = vpop.f32.mrb[0].mxu0
    %v3163 = vadd.f32 0.0, %v3162
    %v3164 = vpop.f32.mrb[0].mxu0
    %3165 = vmatprep.mubr.f32.mxu0 0.0
    %3166 = vmatmul.mubr.f32.gmra.mrb[0].mxu0 %v3072
    %v3167 = vpop.f32.mrb[0].mxu0
    %v3168 = vadd.f32 0.0, %v3167
    %v3169 = vpop.f32.mrb[0].mxu0
    %3170 = vmatprep.mubr.f32.mxu0 0.0
    %3171 = vmatmul.mubr.f32.gmra.mrb[0].mxu0 %v3075
    %v3172 = vpop.f32.mrb[0].mxu0
    %v3173 = vadd.f32 0.0, %v3172
    %v3174 = vpop.f32.mrb[0].mxu0
    %3175 = vmatprep.mubr.f32.mxu0 0.0
    %3176 = vmatmul.mubr.f32.gmra.mrb[0].mxu0 %v3078
    %v3177 = vpop.f32.mrb[0].mxu0
    %v3178 = vadd.f32 0.0, %v3177
    %v3179 = vpop.f32.mrb[0].mxu0
    %3180 = vmatprep.mubr.f32.mxu0 0.0
    %3181 = vmatmul.mubr.f32.gmra.mrb[0].mxu0 %v3081
    %v3182 = vpop.f32.mrb[0].mxu0
    %v3183 = vadd.f32 0.0, %v3182
    %v3184 = vpop.f32.mrb[0].mxu0
    %3185 = vmatprep.mubr.f32.mxu0 0.0
    %3186 = vmatmul.mubr.f32.gmra.mrb[0].mxu0 %v3084
    %v3187 = vpop.f32.mrb[0].mxu0
    %v3188 = vadd.f32 0.0, %v3187
    %v3189 = vpop.f32.mrb[0].mxu0
    %3190 = vdwg.mxu0
    %v3191 = vld [vmem:[#allocation4] sm:$0xff]
    %v3192 = vld [vmem:[#allocation4 + $0x8] sm:$0xff]
    %v3193 = vld [vmem:[#allocation4 + $0x10] sm:$0xff]
    %v3194 = vld [vmem:[#allocation4 + $0x18] sm:$0xff]
    %v3195 = vld [vmem:[#allocation4 + $0x20] sm:$0xff]
    %v3196 = vld [vmem:[#allocation4 + $0x28] sm:$0xff]
    %v3197 = vld [vmem:[#allocation4 + $0x30] sm:$0xff]
    %v3198 = vld [vmem:[#allocation4 + $0x38] sm:$0xff]
    %v3199 = vmul.f32 %v3191, %v3153
    %v3200 = vmul.f32 %v3192, %v3158
    %v3201 = vmul.f32 %v3193, %v3163
    %v3202 = vmul.f32 %v3194, %v3168
    %v3203 = vmul.f32 %v3195, %v3173
    %v3204 = vmul.f32 %v3196, %v3178
    %v3205 = vmul.f32 %v3197, %v3183
    %v3206 = vmul.f32 %v3198, %v3188
    %vm3207 = vcmp.gt.f32.partialorder %v3199, 0.0
    %vm3208 = vcmp.gt.f32.partialorder %v3200, 0.0
    %vm3209 = vcmp.gt.f32.partialorder %v3201, 0.0
    %vm3210 = vcmp.gt.f32.partialorder %v3202, 0.0
    %vm3211 = vcmp.gt.f32.partialorder %v3203, 0.0
    %vm3212 = vcmp.gt.f32.partialorder %v3204, 0.0
    %vm3213 = vcmp.gt.f32.partialorder %v3205, 0.0
    %vm3214 = vcmp.gt.f32.partialorder %v3206, 0.0
    %v3215 = vmin.f32 %v3199, 0.0
    %v3216 = vmin.f32 %v3200, 0.0
    %v3217 = vmin.f32 %v3201, 0.0
    %v3218 = vmin.f32 %v3202, 0.0
    %v3219 = vmin.f32 %v3203, 0.0
    %v3220 = vmin.f32 %v3204, 0.0
    %v3221 = vmin.f32 %v3205, 0.0
    %v3222 = vmin.f32 %v3206, 0.0
    %v3223 = vmul.f32 %v3215, 1.442695
    %v3224 = vpow.pop %v3223
    %v3225 = vmul.f32 %v3216, 1.442695
    %v3226 = vpow.pop %v3225
    %v3227 = vmul.f32 %v3217, 1.442695
    %v3228 = vpow.pop %v3227
    %v3229 = vmul.f32 %v3218, 1.442695
    %v3230 = vpow.pop %v3229
    %v3231 = vmul.f32 %v3219, 1.442695
    %v3232 = vpow.pop %v3231
    %v3233 = vmul.f32 %v3220, 1.442695
    %v3234 = vpow.pop %v3233
    %v3235 = vmul.f32 %v3221, 1.442695
    %v3236 = vpow.pop %v3235
    %v3237 = vmul.f32 %v3222, 1.442695
    %v3238 = vpow.pop %v3237
    %v3239 = vsub.f32 %v3224, 1.0
    %v3240 = vsub.f32 %v3226, 1.0
    %v3241 = vsub.f32 %v3228, 1.0
    %v3242 = vsub.f32 %v3230, 1.0
    %v3243 = vsub.f32 %v3232, 1.0
    %v3244 = vsub.f32 %v3234, 1.0
    %v3245 = vsub.f32 %v3236, 1.0
    %v3246 = vsub.f32 %v3238, 1.0
    %v3247 = vsel %vm3207, %v3199, %v3239
    %v3248 = vsel %vm3208, %v3200, %v3240
    %v3249 = vsel %vm3209, %v3201, %v3241
    %v3250 = vsel %vm3210, %v3202, %v3242
    %v3251 = vsel %vm3211, %v3203, %v3243
    %v3252 = vsel %vm3212, %v3204, %v3244
    %v3253 = vsel %vm3213, %v3205, %v3245
    %v3254 = vsel %vm3214, %v3206, %v3246
    %v3255 = vsel %vm217, %v3247, 0.0
    %v3256 = vsel %vm217, %v3248, 0.0
    %v3257 = vsel %vm217, %v3249, 0.0
    %v3258 = vsel %vm217, %v3250, 0.0
    %v3259 = vsel %vm217, %v3251, 0.0
    %v3260 = vsel %vm217, %v3252, 0.0
    %v3261 = vsel %vm217, %v3253, 0.0
    %v3262 = vsel %vm217, %v3254, 0.0
    %v3263 = vpack.c.bf16 %v3256, %v3255
    %v3264 = vpack.c.bf16 %v3258, %v3257
    %v3265 = vpack.c.bf16 %v3260, %v3259
    %v3266 = vpack.c.bf16 %v3262, %v3261
    %v3271 = vunpack.c.l.b16 %v3263
    %v3272 = vunpack.c.h.b16 %v3263
    %v3273 = vunpack.c.l.b16 %v3264
    %v3274 = vunpack.c.h.b16 %v3264
    %v3275 = vunpack.c.l.b16 %v3265
    %v3276 = vunpack.c.h.b16 %v3265
    %v3277 = vunpack.c.l.b16 %v3266
    %v3278 = vunpack.c.h.b16 %v3266
    %v3279 = vpack.c.b16 %v3271, %v3271
    %v3280 = vpack.c.b16 %v3272, %v3272
    %v3281 = vpack.c.b16 %v3273, %v3273
    %v3282 = vpack.c.b16 %v3274, %v3274
    %v3283 = vpack.c.b16 %v3275, %v3275
    %v3284 = vpack.c.b16 %v3276, %v3276
    %v3285 = vpack.c.b16 %v3277, %v3277
    %v3286 = vpack.c.b16 %v3278, %v3278
    %3295 = vst [vmem:[%s5] sm:$0xf] %v3279
    %3296 = vst [vmem:[%s5 + $0x4] sm:$0xf] %v3280
    %3297 = vst [vmem:[%s5 + $0x8] sm:$0xf] %v3281
    %3298 = vst [vmem:[%s5 + $0xc] sm:$0xf] %v3282
    %3299 = vst [vmem:[%s5 + $0x10] sm:$0xf] %v3283
    %3300 = vst [vmem:[%s5 + $0x14] sm:$0xf] %v3284
    %3301 = vst [vmem:[%s5 + $0x18] sm:$0xf] %v3285
    %3302 = vst [vmem:[%s5 + $0x1c] sm:$0xf] %v3286
  $region29: #{_lambda_.5} parent=0 // pred_fallthru
    _
  // Predicated region
  $region30: #{_lambda_.5} parent=0 // pred_check
    _
  $region31: #{_lambda_.5} parent=0 // pred_check_branch
    %3304 = sbr.rel (0) target = $region33
  $region32: #{_lambda_.5} parent=0 // pred_region
    _
  $region33: #{_lambda_.5} parent=0 // pred_fallthru
    _
  // Predicated region
  $region34: #{_lambda_.5} parent=0 // pred_check
    _
  $region35: #{_lambda_.5} parent=0 // pred_check_branch
    %3306 = sbr.rel (0) target = $region37
  $region36: #{_lambda_.5} parent=0 // pred_region
    _
  $region37: #{_lambda_.5} parent=0 // pred_fallthru
    _

</llo_original>
